<compile_context>
chip_gen: v7x
topology: tpu7x:2x2x1
jax: 0.10.0
libtpu: 0.0.40
codegen_flags: <defaults>
</compile_context>

<pallas_src>
import jax
import jax.numpy as jnp
from jax.experimental import pallas as pl
from jax.experimental.pallas import tpu as pltpu


# ---------------------------------------------------------------------------
# Fused kernel.  grid = (H // tn,); j is the down-proj reduction axis (output
# block index is constant across it -> accumulator stays resident in VMEM).
# ---------------------------------------------------------------------------
def _fused_mlp_kernel(x_ref, w1_ref, w3_ref, w2_ref, o_ref, acc_ref):
    j = pl.program_id(0)

    @pl.when(j == 0)
    def _():
        acc_ref[...] = jnp.zeros_like(acc_ref)

    x = x_ref[...]                                                     # (Bp, D) resident
    g = jnp.dot(x, w1_ref[...], preferred_element_type=jnp.float32)   # gate
    u = jnp.dot(x, w3_ref[...], preferred_element_type=jnp.float32)   # up
    # silu(g) * u, cast back to the streaming weight dtype for the MXU.
    h = ((g * jax.nn.sigmoid(g)) * u).astype(w2_ref.dtype)
    acc_ref[...] += jnp.dot(h, w2_ref[...],
                            preferred_element_type=jnp.float32)       # down-proj chunk

    @pl.when(j == pl.num_programs(0) - 1)
    def _():
        o_ref[...] = acc_ref[...].astype(o_ref.dtype)


def _choose_hidden_tile(H, D, target_tn, weight_vmem_budget):
    """Largest hidden tile <= target that divides H, is a multiple of 256/128,
    and keeps the double-buffered bf16 weight tiles (w1+w3+w2) within budget."""
    # double-buffered bf16 weight bytes per step = 2 * (2*D*tn + tn*D) * 2 = 12*D*tn
    cap = max(128, weight_vmem_budget // (12 * D))
    target = min(target_tn, H, cap)
    for step in (256, 128):        # prefer multiples of 256 (v6e/v7x MXU width)
        t = (target // step) * step
        while t >= step:
            if H % t == 0:
                return t
            t -= step
    return H  # fallback: single block spanning all of H (block == full dim)


def mistral_mlp(x, w1, w2, w3, *, target_tn=1024):
    """x: [B, dim]; w1,w3: [dim, hidden]; w2: [hidden, dim]. Returns [B, dim] bf16."""
    B, D = x.shape
    H = w1.shape[1]
    assert w1.shape == (D, H) and w3.shape == (D, H) and w2.shape == (H, D), (
        "weight shapes must be w1/w3:[dim,hidden], w2:[hidden,dim]")

    # Pad batch to a multiple of 16 (bf16 sublane packing -> unmasked stores).
    B_pad = max(16, ((B + 15) // 16) * 16)
    if B_pad != B:
        x = jnp.pad(x, ((0, B_pad - B), (0, 0)))

    # Generation-aware VMEM budget (v7x: 64 MiB, v5e/v6e: 128 MiB).
    try:
        vmem_cap = int(pltpu.get_tpu_info().vmem_capacity_bytes)
    except Exception:
        vmem_cap = 64 * 1024 * 1024  # conservative fallback
    weight_budget = int(vmem_cap * 0.6)

    tn = _choose_hidden_tile(H, D, target_tn, weight_budget)
    assert H % tn == 0, f"hidden_dim {H} not divisible by chosen tile {tn}"

    # Explicit scoped-VMEM limit: double-buffered weight tiles + activations.
    weight_bytes = 2 * (3 * D * tn * 2)                       # w1+w3+w2, 2 bufs, bf16
    act_bytes = (2 * B_pad * D * 2        # x (double-buffered bf16)
                 + B_pad * D * 4          # f32 accumulator scratch
                 + 2 * B_pad * D * 2)     # output (double-buffered bf16)
    vmem_limit = int(min(vmem_cap, weight_bytes + act_bytes + (16 << 20)))

    cost = pl.CostEstimate(
        flops=6 * B_pad * D * H,                 # gate + up + down matmuls
        transcendentals=B_pad * H,               # sigmoid in silu
        bytes_accessed=2 * (3 * D * H + 2 * B_pad * D),   # weights dominate
    )

    out = pl.pallas_call(
        _fused_mlp_kernel,
        out_shape=jax.ShapeDtypeStruct((B_pad, D), jnp.bfloat16),
        grid_spec=pltpu.PrefetchScalarGridSpec(
            num_scalar_prefetch=0,
            grid=(H // tn,),
            in_specs=[
                pl.BlockSpec((B_pad, D), lambda j: (0, 0)),   # x: resident, DMA'd once
                pl.BlockSpec((D, tn), lambda j: (0, j)),      # w1 chunk (gate)
                pl.BlockSpec((D, tn), lambda j: (0, j)),      # w3 chunk (up)
                pl.BlockSpec((tn, D), lambda j: (j, 0)),      # w2 chunk (down)
            ],
            out_specs=pl.BlockSpec((B_pad, D), lambda j: (0, 0)),  # resident accumulator out
            scratch_shapes=[pltpu.VMEM((B_pad, D), jnp.float32)],
        ),
        compiler_params=pltpu.CompilerParams(
            dimension_semantics=("arbitrary",),   # j is the down-proj reduction axis
            vmem_limit_bytes=vmem_limit,
        ),
        cost_estimate=cost,
    )(x, w1, w3, w2)

    return out[:B]


def reference_mlp(x, w1, w2, w3):
    xf = x.astype(jnp.float32)
    g = xf @ w1.astype(jnp.float32)
    u = xf @ w3.astype(jnp.float32)
    h = ((g * jax.nn.sigmoid(g)) * u).astype(jnp.bfloat16).astype(jnp.float32)
    return (h @ w2.astype(jnp.float32)).astype(jnp.bfloat16)


if __name__ == "__main__":
    # Small shapes consistent with the module's forward:
    #   x: [1, 1, max_batch_size, dim] -> flattened to [batch, dim]
    batch, dim, hidden_dim = 8, 512, 2048

    key = jax.random.PRNGKey(0)
    kx, k1, k2, k3 = jax.random.split(key, 4)

    x = (jax.random.normal(kx, (1, 1, batch, dim), jnp.float32) * 0.5
         ).astype(jnp.bfloat16)
    # Deterministic synthetic weights, stored pre-transposed as in the module.
    w1 = (jax.random.normal(k1, (dim, hidden_dim), jnp.float32) * 0.02
          ).astype(jnp.bfloat16)   # gate_proj (ttnn.bfloat4_b in original)
    w3 = (jax.random.normal(k3, (dim, hidden_dim), jnp.float32) * 0.02
          ).astype(jnp.bfloat16)   # up_proj   (ttnn.bfloat4_b in original)
    w2 = (jax.random.normal(k2, (hidden_dim, dim), jnp.float32) * 0.02
          ).astype(jnp.bfloat16)   # down_proj (ttnn.bfloat8_b in original)

    x2d = x.reshape(batch, dim)
    out = mistral_mlp(x2d, w1, w2, w3)
    out = out.reshape(1, 1, batch, dim)   # restore TTNN-style [1,1,B,dim]
    jax.block_until_ready(out)

    ref = reference_mlp(x2d, w1, w2, w3).reshape(1, 1, batch, dim)
    diff = jnp.max(jnp.abs(out.astype(jnp.float32) - ref.astype(jnp.float32)))
    scale = jnp.max(jnp.abs(ref.astype(jnp.float32))) + 1e-6
    rel = float(diff / scale)
    assert jnp.isfinite(diff) and rel < 3e-2, f"max abs err {diff}, rel {rel}"

    print("KERNEL_OK")
</pallas_src>

<mosaic_0001>
module attributes {stable_mosaic.version = 11 : i64} {
  func.func @_fused_mlp_kernel(%arg0: i32, %arg1: memref<16x512xbf16, #tpu.memory_space<vmem>>, %arg2: memref<512x1024xbf16, #tpu.memory_space<vmem>>, %arg3: memref<512x1024xbf16, #tpu.memory_space<vmem>>, %arg4: memref<1024x512xbf16, #tpu.memory_space<vmem>>, %arg5: memref<16x512xbf16, #tpu.memory_space<vmem>>, %arg6: memref<16x512xf32, #tpu.memory_space<vmem>>) attributes {dimension_semantics = [#tpu.dimension_semantics<arbitrary>], iteration_bounds = array<i64: 2>, scalar_prefetch = 0 : i64, scratch_operands = 1 : i64, tpu.core_type = #tpu.core_type<tc>, window_params = [{pipeline_mode = #tpu.pipeline_mode<synchronous>, transform_indices = @transform_0, window_bounds = array<i64: 16, 512>}, {transform_indices = @transform_1, window_bounds = array<i64: 512, 1024>}, {transform_indices = @transform_2, window_bounds = array<i64: 512, 1024>}, {transform_indices = @transform_3, window_bounds = array<i64: 1024, 512>}, {pipeline_mode = #tpu.pipeline_mode<synchronous>, transform_indices = @transform_4, window_bounds = array<i64: 16, 512>}]} {
    %c0_i32 = arith.constant 0 : i32
    %0 = arith.cmpi eq, %arg0, %c0_i32 : i32
    %1 = arith.extui %0 : i1 to i32
    %c0_i32_0 = arith.constant 0 : i32
    %2 = arith.cmpi ne, %1, %c0_i32_0 : i32
    scf.if %2 {
      %cst_16 = arith.constant 0.000000e+00 : f32
      %24 = vector.broadcast %cst_16 : f32 to vector<16x512xf32>
      %c0_17 = arith.constant 0 : index
      %c0_18 = arith.constant 0 : index
      %25 = vector.load %arg6[%c0_17, %c0_18] : memref<16x512xf32, #tpu.memory_space<vmem>>, vector<16x512xf32>
      tpu.vector_store %arg6[%c0_17, %c0_18], %24 {strides = array<i32>} : memref<16x512xf32, #tpu.memory_space<vmem>>, vector<16x512xf32>,
    } else {
    }
    %c0 = arith.constant 0 : index
    %c0_1 = arith.constant 0 : index
    %3 = vector.load %arg1[%c0, %c0_1] : memref<16x512xbf16, #tpu.memory_space<vmem>>, vector<16x512xbf16>
    %c0_2 = arith.constant 0 : index
    %c0_3 = arith.constant 0 : index
    %4 = vector.load %arg2[%c0_2, %c0_3] : memref<512x1024xbf16, #tpu.memory_space<vmem>>, vector<512x1024xbf16>
    %cst = arith.constant dense<0.000000e+00> : vector<16x1024xf32>
    %5 = tpu.matmul %3, %4, %cst {dimension_numbers = #tpu.dot_dimension_numbers<[1], [0], [0], [1], [0, 0, 1, 1], [], []>} : vector<16x512xbf16>, vector<512x1024xbf16>, vector<16x1024xf32> -> vector<16x1024xf32>
    %c0_4 = arith.constant 0 : index
    %c0_5 = arith.constant 0 : index
    %6 = vector.load %arg3[%c0_4, %c0_5] : memref<512x1024xbf16, #tpu.memory_space<vmem>>, vector<512x1024xbf16>
    %cst_6 = arith.constant dense<0.000000e+00> : vector<16x1024xf32>
    %7 = tpu.matmul %3, %6, %cst_6 {dimension_numbers = #tpu.dot_dimension_numbers<[1], [0], [0], [1], [0, 0, 1, 1], [], []>} : vector<16x512xbf16>, vector<512x1024xbf16>, vector<16x1024xf32> -> vector<16x1024xf32>
    %8 = arith.negf %5 : vector<16x1024xf32>
    %9 = math.exp %8 : vector<16x1024xf32>
    %cst_7 = arith.constant 1.000000e+00 : f32
    %10 = vector.broadcast %cst_7 : f32 to vector<16x1024xf32>
    %11 = arith.addf %10, %9 : vector<16x1024xf32>
    %12 = arith.divf %10, %11 : vector<16x1024xf32>
    %13 = arith.mulf %5, %12 : vector<16x1024xf32>
    %14 = arith.mulf %13, %7 : vector<16x1024xf32>
    %15 = arith.truncf %14 : vector<16x1024xf32> to vector<16x1024xbf16>
    %c0_8 = arith.constant 0 : index
    %c0_9 = arith.constant 0 : index
    %16 = vector.load %arg6[%c0_8, %c0_9] : memref<16x512xf32, #tpu.memory_space<vmem>>, vector<16x512xf32>
    %c0_10 = arith.constant 0 : index
    %c0_11 = arith.constant 0 : index
    %17 = vector.load %arg4[%c0_10, %c0_11] : memref<1024x512xbf16, #tpu.memory_space<vmem>>, vector<1024x512xbf16>
    %cst_12 = arith.constant dense<0.000000e+00> : vector<16x512xf32>
    %18 = tpu.matmul %15, %17, %cst_12 {dimension_numbers = #tpu.dot_dimension_numbers<[1], [0], [0], [1], [0, 0, 1, 1], [], []>} : vector<16x1024xbf16>, vector<1024x512xbf16>, vector<16x512xf32> -> vector<16x512xf32>
    %19 = arith.addf %16, %18 : vector<16x512xf32>
    %c0_13 = arith.constant 0 : index
    %c0_14 = arith.constant 0 : index
    %20 = vector.load %arg6[%c0_13, %c0_14] : memref<16x512xf32, #tpu.memory_space<vmem>>, vector<16x512xf32>
    tpu.vector_store %arg6[%c0_13, %c0_14], %19 {strides = array<i32>} : memref<16x512xf32, #tpu.memory_space<vmem>>, vector<16x512xf32>,
    %c1_i32 = arith.constant 1 : i32
    %21 = arith.cmpi eq, %arg0, %c1_i32 : i32
    %22 = arith.extui %21 : i1 to i32
    %c0_i32_15 = arith.constant 0 : i32
    %23 = arith.cmpi ne, %22, %c0_i32_15 : i32
    scf.if %23 {
      %c0_16 = arith.constant 0 : index
      %c0_17 = arith.constant 0 : index
      %24 = vector.load %arg6[%c0_16, %c0_17] : memref<16x512xf32, #tpu.memory_space<vmem>>, vector<16x512xf32>
      %25 = arith.truncf %24 : vector<16x512xf32> to vector<16x512xbf16>
      %c0_18 = arith.constant 0 : index
      %c0_19 = arith.constant 0 : index
      %26 = vector.load %arg5[%c0_18, %c0_19] : memref<16x512xbf16, #tpu.memory_space<vmem>>, vector<16x512xbf16>
      tpu.vector_store %arg5[%c0_18, %c0_19], %25 {strides = array<i32>} : memref<16x512xbf16, #tpu.memory_space<vmem>>, vector<16x512xbf16>,
    } else {
    }
    return
  }
  func.func @transform_0(%arg0: i32) -> (i32, i32) {
    %c0_i32 = arith.constant 0 : i32
    %c0_i32_0 = arith.constant 0 : i32
    %c0_i32_1 = arith.constant 0 : i32
    return %c0_i32, %c0_i32_0 : i32, i32
  }
  func.func @transform_1(%arg0: i32) -> (i32, i32) {
    %c0_i32 = arith.constant 0 : i32
    %c0_i32_0 = arith.constant 0 : i32
    return %c0_i32, %arg0 : i32, i32
  }
  func.func @transform_2(%arg0: i32) -> (i32, i32) {
    %c0_i32 = arith.constant 0 : i32
    %c0_i32_0 = arith.constant 0 : i32
    return %c0_i32, %arg0 : i32, i32
  }
  func.func @transform_3(%arg0: i32) -> (i32, i32) {
    %c0_i32 = arith.constant 0 : i32
    %c0_i32_0 = arith.constant 0 : i32
    return %arg0, %c0_i32 : i32, i32
  }
  func.func @transform_4(%arg0: i32) -> (i32, i32) {
    %c0_i32 = arith.constant 0 : i32
    %c0_i32_0 = arith.constant 0 : i32
    %c0_i32_1 = arith.constant 0 : i32
    return %c0_i32, %c0_i32_0 : i32, i32
  }
}

</mosaic_0001>

<llo_original>
// kernel: tpu_custom_call.1
$region0: #{tpu_custom_call.1}
  #allocation0 [shape = 'u32[]', space=smem, size = 0x4, offset = 0x4, fixed_abs, tag = 'smem constant byte address 0x4 - core index']
  #allocation1 [shape = 'u32[144,128]{1,0:T(1,128)}', space=vmem, size = 0x12000, scoped, tag = 'internal scratch']
  #allocation2 [shape = 'f32[16,512]{1,0:T(8,128)}', space=vmem, size = 0x8000, scoped, tag = 'scratch operand']
  %s0 = inlined_call_operand.hbm [shape: bf16[16,512], index: 0, kind: input, shape index: {}]
  %s1 = inlined_call_operand.hbm [shape: bf16[512,2048], index: 1, kind: input, shape index: {}]
  %s2 = inlined_call_operand.hbm [shape: bf16[512,2048], index: 2, kind: input, shape index: {}]
  %s3 = inlined_call_operand.hbm [shape: bf16[2048,512], index: 3, kind: input, shape index: {}]
  %s4 = inlined_call_operand.hbm [shape: bf16[16,512], index: 4, kind: output, shape index: {}]
  %s5 = sld [smem:[#allocation0]]
  $region73: #{tpu_custom_call.1} parent=0
    _
  %s7 = ssub.s32 1, %s5
  %s8 = scalar_select 0, %s7, %s5
  $region1: #{tpu_custom_call.1} parent=0
    #allocation3 [shape = 'u8[16384]{0}', space=vmem, size = 0x4000, scoped, tag = 'input window, operand 0, single buffered']
    #allocation4 [shape = 's32[2]{0}', space=sflag, size = 0x8, scoped, tag = 'scoped memory for tpu_custom_call.1']
    #allocation5 [shape = 's32[2]{0}', space=sflag, size = 0x8, scoped, tag = 'scoped memory for tpu_custom_call.1']
    #allocation6 [shape = 'u8[2097152]{0}', space=vmem, size = 0x200000, scoped, tag = 'input window, operand 1']
    #allocation7 [shape = 's32[2]{0}', space=sflag, size = 0x8, scoped, tag = 'scoped memory for tpu_custom_call.1']
    #allocation8 [shape = 'u8[2097152]{0}', space=vmem, size = 0x200000, scoped, tag = 'input window, operand 2']
    #allocation9 [shape = 'u8[2097152]{0}', space=vmem, size = 0x200000, scoped, tag = 'input window, operand 3']
    #allocation10 [shape = 's32[2]{0}', space=sflag, size = 0x8, scoped, tag = 'scoped memory for tpu_custom_call.1']
    #allocation11 [shape = 'u8[16384]{0}', space=vmem, size = 0x4000, scoped, tag = 'output window, operand 0, single buffered']
    %9 = vsyncpa [#allocation4], 0
    %10 = vsyncpa [#allocation7], 0
    %s11 = scalar_lea.sflag [#allocation7], 1
    %12 = vsyncpa %s11, 0
    %13 = vsyncpa [#allocation10], 0
    %s14 = scalar_lea.sflag [#allocation10], 1
    %15 = vsyncpa %s14, 0
    %16 = vsyncpa [#allocation5], 0
    loop: start=0, step=1, limit=4
    $region2: #{tpu_custom_call.1} parent=1 // loop_pre_header
      _
    $region3: #{tpu_custom_call.1} parent=1 // loop_header
      %s18 = sphi 0, %s22
      %p19 = scmp.ge.s32.totalorder %s18, 4
      %s26 = sphi 0, %s26
      %s28 = sphi 0, %s26
      %s29 = sphi 0, %s28
      %s43 = sphi 0, %s29
      %s49 = sphi 0, %s51
      %s52 = sphi 0, %s49
      %s53 = sphi 0, %s52
      %s69 = sphi 0, %s53
      %s75 = sphi 0, %s77
      %s78 = sphi 0, %s75
      %s79 = sphi 0, %s78
      %s95 = sphi 0, %s79
      %s101 = sphi 0, %s103
      %s104 = sphi 0, %s101
      %s105 = sphi 0, %s104
      %s121 = sphi 0, %s105
      %s125 = sphi 0, %s125
      %s127 = sphi 0, %s125
      %s128 = sphi 0, %s127
      %s142 = sphi 0, %s128
    $region4: #{tpu_custom_call.1} parent=1 // loop_header_branch
      %21 = sbr.rel (%p19) target = $region8
    $region5: #{tpu_custom_call.1} parent=1 // loop_body
      %s23 = ssub.s32 %s18, 1
      %s24 = ssub.s32 %s18, 2
      %s25 = sadd.s32 %s18, 1
      %s27 = sadd.s32 %s26, 1
      %p30 = scmp.eq.s32.totalorder %s18, 1
      %p31 = scmp.ne.s32.totalorder %s26, %s28
      %p32 = scmp.eq.s32.totalorder %s18, 0
      %p33 = por %p31, %p32
      %p34 = scmp.ne.s32.totalorder %s26, %s28
      %p35 = scmp.eq.s32.totalorder %s23, 1
      %p36 = por %p34, %p35
      %p37 = scmp.ne.s32.totalorder %s28, %s29
      %p38 = scmp.eq.s32.totalorder %s23, 0
      %p39 = por %p37, %p38
      %p40 = scmp.ne.s32.totalorder %s28, %s29
      %p41 = scmp.eq.s32.totalorder %s24, 1
      %p42 = por %p40, %p41
      %p44 = scmp.ne.s32.totalorder %s29, %s43
      %p45 = scmp.eq.s32.totalorder %s24, 0
      %p46 = por %p44, %p45
      %s47 = ssub.s32 %s18, %s25
      %p48 = scmp.eq.s32.totalorder %s47, 0
      %s50 = sadd.s32 %s49, 1
      %s51 = scalar_select %p48, %s49, %s50
      %p54 = pneg %p48
      %p55 = scmp.eq.s32.totalorder %s18, 1
      %p56 = por %p54, %p55
      %p57 = scmp.ne.s32.totalorder %s49, %s52
      %p58 = scmp.eq.s32.totalorder %s18, 0
      %p59 = por %p57, %p58
      %p60 = scmp.ne.s32.totalorder %s49, %s52
      %p61 = scmp.eq.s32.totalorder %s23, 1
      %p62 = por %p60, %p61
      %p63 = scmp.ne.s32.totalorder %s52, %s53
      %p64 = scmp.eq.s32.totalorder %s23, 0
      %p65 = por %p63, %p64
      %p66 = scmp.ne.s32.totalorder %s52, %s53
      %p67 = scmp.eq.s32.totalorder %s24, 1
      %p68 = por %p66, %p67
      %p70 = scmp.ne.s32.totalorder %s53, %s69
      %p71 = scmp.eq.s32.totalorder %s24, 0
      %p72 = por %p70, %p71
      %s73 = ssub.s32 %s18, %s25
      %p74 = scmp.eq.s32.totalorder %s73, 0
      %s76 = sadd.s32 %s75, 1
      %s77 = scalar_select %p74, %s75, %s76
      %p80 = pneg %p74
      %p81 = scmp.eq.s32.totalorder %s18, 1
      %p82 = por %p80, %p81
      %p83 = scmp.ne.s32.totalorder %s75, %s78
      %p84 = scmp.eq.s32.totalorder %s18, 0
      %p85 = por %p83, %p84
      %p86 = scmp.ne.s32.totalorder %s75, %s78
      %p87 = scmp.eq.s32.totalorder %s23, 1
      %p88 = por %p86, %p87
      %p89 = scmp.ne.s32.totalorder %s78, %s79
      %p90 = scmp.eq.s32.totalorder %s23, 0
      %p91 = por %p89, %p90
      %p92 = scmp.ne.s32.totalorder %s78, %s79
      %p93 = scmp.eq.s32.totalorder %s24, 1
      %p94 = por %p92, %p93
      %p96 = scmp.ne.s32.totalorder %s79, %s95
      %p97 = scmp.eq.s32.totalorder %s24, 0
      %p98 = por %p96, %p97
      %s99 = ssub.s32 %s18, %s25
      %p100 = scmp.eq.s32.totalorder %s99, 0
      %s102 = sadd.s32 %s101, 1
      %s103 = scalar_select %p100, %s101, %s102
      %p106 = pneg %p100
      %p107 = scmp.eq.s32.totalorder %s18, 1
      %p108 = por %p106, %p107
      %p109 = scmp.ne.s32.totalorder %s101, %s104
      %p110 = scmp.eq.s32.totalorder %s18, 0
      %p111 = por %p109, %p110
      %p112 = scmp.ne.s32.totalorder %s101, %s104
      %p113 = scmp.eq.s32.totalorder %s23, 1
      %p114 = por %p112, %p113
      %p115 = scmp.ne.s32.totalorder %s104, %s105
      %p116 = scmp.eq.s32.totalorder %s23, 0
      %p117 = por %p115, %p116
      %p118 = scmp.ne.s32.totalorder %s104, %s105
      %p119 = scmp.eq.s32.totalorder %s24, 1
      %p120 = por %p118, %p119
      %p122 = scmp.ne.s32.totalorder %s105, %s121
      %p123 = scmp.eq.s32.totalorder %s24, 0
      %p124 = por %p122, %p123
      %s126 = sadd.s32 %s125, 1
      %p129 = scmp.eq.s32.totalorder %s18, 1
      %p130 = scmp.ne.s32.totalorder %s125, %s127
      %p131 = scmp.eq.s32.totalorder %s18, 0
      %p132 = por %p130, %p131
      %p133 = scmp.ne.s32.totalorder %s125, %s127
      %p134 = scmp.eq.s32.totalorder %s23, 1
      %p135 = por %p133, %p134
      %p136 = scmp.ne.s32.totalorder %s127, %s128
      %p137 = scmp.eq.s32.totalorder %s23, 0
      %p138 = por %p136, %p137
      %p139 = scmp.ne.s32.totalorder %s127, %s128
      %p140 = scmp.eq.s32.totalorder %s24, 1
      %p141 = por %p139, %p140
      %p143 = scmp.ne.s32.totalorder %s128, %s142
      %p144 = scmp.eq.s32.totalorder %s24, 0
      %p145 = por %p143, %p144
      %p146 = scmp.le.s32.totalorder 1, %s18
      %p147 = scmp.lt.s32.totalorder %s18, 3
      %p148 = pnand %p146, %p147
      %p149 = pneg %p148
      // Predicated region
      $region9: #{tpu_custom_call.1} parent=5 // pred_check
        _
      $region10: #{tpu_custom_call.1} parent=5 // pred_check_branch
        %151 = sbr.rel (%p148) target = $region12
      $region11: #{tpu_custom_call.1} parent=5 // pred_region
        %s152 = ssub.s32 %s18, 1
        // Predicated region
        $region13: #{tpu_custom_call.1} parent=11 // pred_check
          %p153 = pneg %p39
        $region14: #{tpu_custom_call.1} parent=11 // pred_check_branch
          %155 = sbr.rel (%p153) target = $region16
        $region15: #{tpu_custom_call.1} parent=11 // pred_region
          %s157 = ssub.s32 512, 512
          %158 = vsyncadd [#allocation4], %s157
          %s159 = sshll.u32 [#allocation3], 4
          %s160 = int_to_ptr.vmem [resolvable:$true] %s159
          %165 = dma.hbm_to_vmem [thread:$0]  %s0, 512, %s160, [#allocation4], 256, 256, 16
        $region16: #{tpu_custom_call.1} parent=11 // pred_fallthru
          _
      $region12: #{tpu_custom_call.1} parent=5 // pred_fallthru
        _
      %p166 = scmp.lt.s32.totalorder %s18, 2
      // Predicated region
      $region17: #{tpu_custom_call.1} parent=5 // pred_check
        %p167 = pneg %p166
      $region18: #{tpu_custom_call.1} parent=5 // pred_check_branch
        %169 = sbr.rel (%p167) target = $region20
      $region19: #{tpu_custom_call.1} parent=5 // pred_region
        // Predicated region
        $region21: #{tpu_custom_call.1} parent=19 // pred_check
          %p170 = pneg %p59
        $region22: #{tpu_custom_call.1} parent=19 // pred_check_branch
          %172 = sbr.rel (%p170) target = $region24
        $region23: #{tpu_custom_call.1} parent=19 // pred_region
          %s173 = sand.u32 %s18, 1
          %s174 = scalar_lea.sflag [#allocation7], %s173
          %s175 = sand.u32 %s49, 1
          %s176 = smul.addr %s175, 2048
          %s177 = scalar_lea.vmem [#allocation6], %s176
          %s178 = smul.u32 8, %s18
          %s180 = ssub.s32 32768, 32768
          %181 = vsyncadd %s174, %s180
          %s182 = smul.addr %s178, 64
          %s183 = scalar_lea.hbm %s1, %s182
          %s184 = sshll.u32 %s177, 4
          %s185 = int_to_ptr.vmem [resolvable:$true] %s184
          %190 = dma.hbm_to_vmem [thread:$0]  %s183, 32768, %s185, %s174, 1024, 512, 32
        $region24: #{tpu_custom_call.1} parent=19 // pred_fallthru
          _
        // Predicated region
        $region25: #{tpu_custom_call.1} parent=19 // pred_check
          %p191 = pneg %p85
        $region26: #{tpu_custom_call.1} parent=19 // pred_check_branch
          %193 = sbr.rel (%p191) target = $region28
        $region27: #{tpu_custom_call.1} parent=19 // pred_region
          %s194 = sand.u32 %s18, 1
          %s195 = scalar_lea.sflag [#allocation7], %s194
          %s196 = sand.u32 %s75, 1
          %s197 = smul.addr %s196, 2048
          %s198 = scalar_lea.vmem [#allocation8], %s197
          %s199 = smul.u32 8, %s18
          %s201 = ssub.s32 32768, 32768
          %202 = vsyncadd %s195, %s201
          %s203 = smul.addr %s199, 64
          %s204 = scalar_lea.hbm %s2, %s203
          %s205 = sshll.u32 %s198, 4
          %s206 = int_to_ptr.vmem [resolvable:$true] %s205
          %211 = dma.hbm_to_vmem [thread:$0]  %s204, 32768, %s206, %s195, 1024, 512, 32
        $region28: #{tpu_custom_call.1} parent=19 // pred_fallthru
          _
        // Predicated region
        $region29: #{tpu_custom_call.1} parent=19 // pred_check
          %p212 = pneg %p111
        $region30: #{tpu_custom_call.1} parent=19 // pred_check_branch
          %214 = sbr.rel (%p212) target = $region32
        $region31: #{tpu_custom_call.1} parent=19 // pred_region
          %s215 = sand.u32 %s101, 1
          %s216 = scalar_lea.sflag [#allocation10], %s215
          %s217 = sand.u32 %s101, 1
          %s218 = smul.addr %s217, 2048
          %s219 = scalar_lea.vmem [#allocation9], %s218
          %s220 = smul.u32 128, %s18
          %s222 = ssub.s32 32768, 32768
          %223 = vsyncadd %s216, %s222
          %s224 = smul.addr %s220, 4
          %s225 = smul.addr %s224, 64
          %s226 = scalar_lea.hbm %s3, %s225
          %s227 = sshll.u32 %s219, 4
          %s228 = int_to_ptr.vmem [resolvable:$true] %s227
          %233 = dma.hbm_to_vmem [thread:$0]  %s226, 32768, %s228, %s216, 256, 256, 16
        $region32: #{tpu_custom_call.1} parent=19 // pred_fallthru
          _
      $region20: #{tpu_custom_call.1} parent=5 // pred_fallthru
        _
      %p234 = scmp.le.s32.totalorder 1, %s18
      %p235 = scmp.lt.s32.totalorder %s18, 3
      %p236 = pnand %p234, %p235
      %p237 = pneg %p236
      // Predicated region
      $region33: #{tpu_custom_call.1} parent=5 // pred_check
        _
      $region34: #{tpu_custom_call.1} parent=5 // pred_check_branch
        %239 = sbr.rel (%p236) target = $region36
      $region35: #{tpu_custom_call.1} parent=5 // pred_region
        %s240 = ssub.s32 %s18, 1
        // Predicated region
        $region37: #{tpu_custom_call.1} parent=35 // pred_check
          %p241 = pneg %p39
        $region38: #{tpu_custom_call.1} parent=35 // pred_check_branch
          %243 = sbr.rel (%p241) target = $region40
        $region39: #{tpu_custom_call.1} parent=35 // pred_region
          %244 = dma.done [#allocation4], 512
        $region40: #{tpu_custom_call.1} parent=35 // pred_fallthru
          _
        %s245 = sand.u32 %s23, 1
        %s246 = scalar_lea.sflag [#allocation7], %s245
        %s247 = sand.u32 %s52, 1
        %s248 = smul.addr %s247, 2048
        %s249 = scalar_lea.vmem [#allocation6], %s248
        // Predicated region
        $region41: #{tpu_custom_call.1} parent=35 // pred_check
          %p250 = pneg %p65
        $region42: #{tpu_custom_call.1} parent=35 // pred_check_branch
          %252 = sbr.rel (%p250) target = $region44
        $region43: #{tpu_custom_call.1} parent=35 // pred_region
          %253 = dma.done %s246, 32768
        $region44: #{tpu_custom_call.1} parent=35 // pred_fallthru
          _
        %s254 = sand.u32 %s23, 1
        %s255 = scalar_lea.sflag [#allocation7], %s254
        %s256 = sand.u32 %s78, 1
        %s257 = smul.addr %s256, 2048
        %s258 = scalar_lea.vmem [#allocation8], %s257
        // Predicated region
        $region45: #{tpu_custom_call.1} parent=35 // pred_check
          %p259 = pneg %p91
        $region46: #{tpu_custom_call.1} parent=35 // pred_check_branch
          %261 = sbr.rel (%p259) target = $region48
        $region47: #{tpu_custom_call.1} parent=35 // pred_region
          %262 = dma.done %s255, 32768
        $region48: #{tpu_custom_call.1} parent=35 // pred_fallthru
          _
        %s263 = sand.u32 %s104, 1
        %s264 = scalar_lea.sflag [#allocation10], %s263
        %s265 = sand.u32 %s104, 1
        %s266 = smul.addr %s265, 2048
        %s267 = scalar_lea.vmem [#allocation9], %s266
        // Predicated region
        $region49: #{tpu_custom_call.1} parent=35 // pred_check
          %p268 = pneg %p117
        $region50: #{tpu_custom_call.1} parent=35 // pred_check_branch
          %270 = sbr.rel (%p268) target = $region52
        $region51: #{tpu_custom_call.1} parent=35 // pred_region
          %271 = dma.done %s264, 32768
        $region52: #{tpu_custom_call.1} parent=35 // pred_fallthru
          _
        %p272 = pneg %p39
        %p273 = pneg %p36
        %s274 = sand.u32 %s23, 1
        %s275 = scalar_lea.sflag [#allocation7], %s274
        %s276 = sand.u32 %s52, 1
        %s277 = smul.addr %s276, 2048
        %s278 = scalar_lea.vmem [#allocation6], %s277
        %p279 = pneg %p65
        %p280 = pneg %p62
        %s281 = sand.u32 %s23, 1
        %s282 = scalar_lea.sflag [#allocation7], %s281
        %s283 = sand.u32 %s78, 1
        %s284 = smul.addr %s283, 2048
        %s285 = scalar_lea.vmem [#allocation8], %s284
        %p286 = pneg %p91
        %p287 = pneg %p88
        %s288 = sand.u32 %s104, 1
        %s289 = scalar_lea.sflag [#allocation10], %s288
        %s290 = sand.u32 %s104, 1
        %s291 = smul.addr %s290, 2048
        %s292 = scalar_lea.vmem [#allocation9], %s291
        %p293 = pneg %p117
        %p294 = pneg %p114
        %p295 = pneg %p138
        %p296 = pneg %p135
        %s297 = smul.u32 8, %s23
        %s298 = smul.u32 8, %s23
        %s299 = smul.u32 128, %s23
        %p300 = scmp.eq.s32.totalorder %s23, 0
        // Predicated region
        $region53: #{tpu_custom_call.1} parent=35 // pred_check
          %p301 = pneg %p300
        $region54: #{tpu_custom_call.1} parent=35 // pred_check_branch
          %303 = sbr.rel (%p301) target = $region56
        $region55: #{tpu_custom_call.1} parent=35 // pred_region
          %304 = vst [vmem:[#allocation2] sm:$0xff] 0.0
          %305 = vst [vmem:[#allocation2 + $0x8] sm:$0xff] 0.0
          %306 = vst [vmem:[#allocation2 + $0x10] sm:$0xff] 0.0
          %307 = vst [vmem:[#allocation2 + $0x18] sm:$0xff] 0.0
          %308 = vst [vmem:[#allocation2 + $0x20] sm:$0xff] 0.0
          %309 = vst [vmem:[#allocation2 + $0x28] sm:$0xff] 0.0
          %310 = vst [vmem:[#allocation2 + $0x30] sm:$0xff] 0.0
          %311 = vst [vmem:[#allocation2 + $0x38] sm:$0xff] 0.0
        $region56: #{tpu_custom_call.1} parent=35 // pred_fallthru
          _
        %v312 = vld [vmem:[#allocation3] sm:$0xff]
        %v313 = vld [vmem:[#allocation3 + $0x8] sm:$0xff]
        %v314 = vld [vmem:[#allocation3 + $0x10] sm:$0xff]
        %v315 = vld [vmem:[#allocation3 + $0x18] sm:$0xff]
        %v316 = vld [vmem:[%s249] sm:$0xff]
        %v317 = vld [vmem:[%s249 + $0x8] sm:$0xff]
        %v318 = vld [vmem:[%s249 + $0x10] sm:$0xff]
        %v319 = vld [vmem:[%s249 + $0x18] sm:$0xff]
        %v320 = vld [vmem:[%s249 + $0x20] sm:$0xff]
        %v321 = vld [vmem:[%s249 + $0x28] sm:$0xff]
        %v322 = vld [vmem:[%s249 + $0x30] sm:$0xff]
        %v323 = vld [vmem:[%s249 + $0x38] sm:$0xff]
        %v324 = vld [vmem:[%s249 + $0x40] sm:$0xff]
        %v325 = vld [vmem:[%s249 + $0x48] sm:$0xff]
        %v326 = vld [vmem:[%s249 + $0x50] sm:$0xff]
        %v327 = vld [vmem:[%s249 + $0x58] sm:$0xff]
        %v328 = vld [vmem:[%s249 + $0x60] sm:$0xff]
        %v329 = vld [vmem:[%s249 + $0x68] sm:$0xff]
        %v330 = vld [vmem:[%s249 + $0x70] sm:$0xff]
        %v331 = vld [vmem:[%s249 + $0x78] sm:$0xff]
        %v332 = vld [vmem:[%s249 + $0x80] sm:$0xff]
        %v333 = vld [vmem:[%s249 + $0x88] sm:$0xff]
        %v334 = vld [vmem:[%s249 + $0x90] sm:$0xff]
        %v335 = vld [vmem:[%s249 + $0x98] sm:$0xff]
        %v336 = vld [vmem:[%s249 + $0xa0] sm:$0xff]
        %v337 = vld [vmem:[%s249 + $0xa8] sm:$0xff]
        %v338 = vld [vmem:[%s249 + $0xb0] sm:$0xff]
        %v339 = vld [vmem:[%s249 + $0xb8] sm:$0xff]
        %v340 = vld [vmem:[%s249 + $0xc0] sm:$0xff]
        %v341 = vld [vmem:[%s249 + $0xc8] sm:$0xff]
        %v342 = vld [vmem:[%s249 + $0xd0] sm:$0xff]
        %v343 = vld [vmem:[%s249 + $0xd8] sm:$0xff]
        %v344 = vld [vmem:[%s249 + $0xe0] sm:$0xff]
        %v345 = vld [vmem:[%s249 + $0xe8] sm:$0xff]
        %v346 = vld [vmem:[%s249 + $0xf0] sm:$0xff]
        %v347 = vld [vmem:[%s249 + $0xf8] sm:$0xff]
        %v348 = vld [vmem:[%s249 + $0x100] sm:$0xff]
        %v349 = vld [vmem:[%s249 + $0x108] sm:$0xff]
        %v350 = vld [vmem:[%s249 + $0x110] sm:$0xff]
        %v351 = vld [vmem:[%s249 + $0x118] sm:$0xff]
        %v352 = vld [vmem:[%s249 + $0x120] sm:$0xff]
        %v353 = vld [vmem:[%s249 + $0x128] sm:$0xff]
        %v354 = vld [vmem:[%s249 + $0x130] sm:$0xff]
        %v355 = vld [vmem:[%s249 + $0x138] sm:$0xff]
        %v356 = vld [vmem:[%s249 + $0x140] sm:$0xff]
        %v357 = vld [vmem:[%s249 + $0x148] sm:$0xff]
        %v358 = vld [vmem:[%s249 + $0x150] sm:$0xff]
        %v359 = vld [vmem:[%s249 + $0x158] sm:$0xff]
        %v360 = vld [vmem:[%s249 + $0x160] sm:$0xff]
        %v361 = vld [vmem:[%s249 + $0x168] sm:$0xff]
        %v362 = vld [vmem:[%s249 + $0x170] sm:$0xff]
        %v363 = vld [vmem:[%s249 + $0x178] sm:$0xff]
        %v364 = vld [vmem:[%s249 + $0x180] sm:$0xff]
        %v365 = vld [vmem:[%s249 + $0x188] sm:$0xff]
        %v366 = vld [vmem:[%s249 + $0x190] sm:$0xff]
        %v367 = vld [vmem:[%s249 + $0x198] sm:$0xff]
        %v368 = vld [vmem:[%s249 + $0x1a0] sm:$0xff]
        %v369 = vld [vmem:[%s249 + $0x1a8] sm:$0xff]
        %v370 = vld [vmem:[%s249 + $0x1b0] sm:$0xff]
        %v371 = vld [vmem:[%s249 + $0x1b8] sm:$0xff]
        %v372 = vld [vmem:[%s249 + $0x1c0] sm:$0xff]
        %v373 = vld [vmem:[%s249 + $0x1c8] sm:$0xff]
        %v374 = vld [vmem:[%s249 + $0x1d0] sm:$0xff]
        %v375 = vld [vmem:[%s249 + $0x1d8] sm:$0xff]
        %v376 = vld [vmem:[%s249 + $0x1e0] sm:$0xff]
        %v377 = vld [vmem:[%s249 + $0x1e8] sm:$0xff]
        %v378 = vld [vmem:[%s249 + $0x1f0] sm:$0xff]
        %v379 = vld [vmem:[%s249 + $0x1f8] sm:$0xff]
        %v380 = vld [vmem:[%s249 + $0x200] sm:$0xff]
        %v381 = vld [vmem:[%s249 + $0x208] sm:$0xff]
        %v382 = vld [vmem:[%s249 + $0x210] sm:$0xff]
        %v383 = vld [vmem:[%s249 + $0x218] sm:$0xff]
        %v384 = vld [vmem:[%s249 + $0x220] sm:$0xff]
        %v385 = vld [vmem:[%s249 + $0x228] sm:$0xff]
        %v386 = vld [vmem:[%s249 + $0x230] sm:$0xff]
        %v387 = vld [vmem:[%s249 + $0x238] sm:$0xff]
        %v388 = vld [vmem:[%s249 + $0x240] sm:$0xff]
        %v389 = vld [vmem:[%s249 + $0x248] sm:$0xff]
        %v390 = vld [vmem:[%s249 + $0x250] sm:$0xff]
        %v391 = vld [vmem:[%s249 + $0x258] sm:$0xff]
        %v392 = vld [vmem:[%s249 + $0x260] sm:$0xff]
        %v393 = vld [vmem:[%s249 + $0x268] sm:$0xff]
        %v394 = vld [vmem:[%s249 + $0x270] sm:$0xff]
        %v395 = vld [vmem:[%s249 + $0x278] sm:$0xff]
        %v396 = vld [vmem:[%s249 + $0x280] sm:$0xff]
        %v397 = vld [vmem:[%s249 + $0x288] sm:$0xff]
        %v398 = vld [vmem:[%s249 + $0x290] sm:$0xff]
        %v399 = vld [vmem:[%s249 + $0x298] sm:$0xff]
        %v400 = vld [vmem:[%s249 + $0x2a0] sm:$0xff]
        %v401 = vld [vmem:[%s249 + $0x2a8] sm:$0xff]
        %v402 = vld [vmem:[%s249 + $0x2b0] sm:$0xff]
        %v403 = vld [vmem:[%s249 + $0x2b8] sm:$0xff]
        %v404 = vld [vmem:[%s249 + $0x2c0] sm:$0xff]
        %v405 = vld [vmem:[%s249 + $0x2c8] sm:$0xff]
        %v406 = vld [vmem:[%s249 + $0x2d0] sm:$0xff]
        %v407 = vld [vmem:[%s249 + $0x2d8] sm:$0xff]
        %v408 = vld [vmem:[%s249 + $0x2e0] sm:$0xff]
        %v409 = vld [vmem:[%s249 + $0x2e8] sm:$0xff]
        %v410 = vld [vmem:[%s249 + $0x2f0] sm:$0xff]
        %v411 = vld [vmem:[%s249 + $0x2f8] sm:$0xff]
        %v412 = vld [vmem:[%s249 + $0x300] sm:$0xff]
        %v413 = vld [vmem:[%s249 + $0x308] sm:$0xff]
        %v414 = vld [vmem:[%s249 + $0x310] sm:$0xff]
        %v415 = vld [vmem:[%s249 + $0x318] sm:$0xff]
        %v416 = vld [vmem:[%s249 + $0x320] sm:$0xff]
        %v417 = vld [vmem:[%s249 + $0x328] sm:$0xff]
        %v418 = vld [vmem:[%s249 + $0x330] sm:$0xff]
        %v419 = vld [vmem:[%s249 + $0x338] sm:$0xff]
        %v420 = vld [vmem:[%s249 + $0x340] sm:$0xff]
        %v421 = vld [vmem:[%s249 + $0x348] sm:$0xff]
        %v422 = vld [vmem:[%s249 + $0x350] sm:$0xff]
        %v423 = vld [vmem:[%s249 + $0x358] sm:$0xff]
        %v424 = vld [vmem:[%s249 + $0x360] sm:$0xff]
        %v425 = vld [vmem:[%s249 + $0x368] sm:$0xff]
        %v426 = vld [vmem:[%s249 + $0x370] sm:$0xff]
        %v427 = vld [vmem:[%s249 + $0x378] sm:$0xff]
        %v428 = vld [vmem:[%s249 + $0x380] sm:$0xff]
        %v429 = vld [vmem:[%s249 + $0x388] sm:$0xff]
        %v430 = vld [vmem:[%s249 + $0x390] sm:$0xff]
        %v431 = vld [vmem:[%s249 + $0x398] sm:$0xff]
        %v432 = vld [vmem:[%s249 + $0x3a0] sm:$0xff]
        %v433 = vld [vmem:[%s249 + $0x3a8] sm:$0xff]
        %v434 = vld [vmem:[%s249 + $0x3b0] sm:$0xff]
        %v435 = vld [vmem:[%s249 + $0x3b8] sm:$0xff]
        %v436 = vld [vmem:[%s249 + $0x3c0] sm:$0xff]
        %v437 = vld [vmem:[%s249 + $0x3c8] sm:$0xff]
        %v438 = vld [vmem:[%s249 + $0x3d0] sm:$0xff]
        %v439 = vld [vmem:[%s249 + $0x3d8] sm:$0xff]
        %v440 = vld [vmem:[%s249 + $0x3e0] sm:$0xff]
        %v441 = vld [vmem:[%s249 + $0x3e8] sm:$0xff]
        %v442 = vld [vmem:[%s249 + $0x3f0] sm:$0xff]
        %v443 = vld [vmem:[%s249 + $0x3f8] sm:$0xff]
        %v444 = vld [vmem:[%s249 + $0x400] sm:$0xff]
        %v445 = vld [vmem:[%s249 + $0x408] sm:$0xff]
        %v446 = vld [vmem:[%s249 + $0x410] sm:$0xff]
        %v447 = vld [vmem:[%s249 + $0x418] sm:$0xff]
        %v448 = vld [vmem:[%s249 + $0x420] sm:$0xff]
        %v449 = vld [vmem:[%s249 + $0x428] sm:$0xff]
        %v450 = vld [vmem:[%s249 + $0x430] sm:$0xff]
        %v451 = vld [vmem:[%s249 + $0x438] sm:$0xff]
        %v452 = vld [vmem:[%s249 + $0x440] sm:$0xff]
        %v453 = vld [vmem:[%s249 + $0x448] sm:$0xff]
        %v454 = vld [vmem:[%s249 + $0x450] sm:$0xff]
        %v455 = vld [vmem:[%s249 + $0x458] sm:$0xff]
        %v456 = vld [vmem:[%s249 + $0x460] sm:$0xff]
        %v457 = vld [vmem:[%s249 + $0x468] sm:$0xff]
        %v458 = vld [vmem:[%s249 + $0x470] sm:$0xff]
        %v459 = vld [vmem:[%s249 + $0x478] sm:$0xff]
        %v460 = vld [vmem:[%s249 + $0x480] sm:$0xff]
        %v461 = vld [vmem:[%s249 + $0x488] sm:$0xff]
        %v462 = vld [vmem:[%s249 + $0x490] sm:$0xff]
        %v463 = vld [vmem:[%s249 + $0x498] sm:$0xff]
        %v464 = vld [vmem:[%s249 + $0x4a0] sm:$0xff]
        %v465 = vld [vmem:[%s249 + $0x4a8] sm:$0xff]
        %v466 = vld [vmem:[%s249 + $0x4b0] sm:$0xff]
        %v467 = vld [vmem:[%s249 + $0x4b8] sm:$0xff]
        %v468 = vld [vmem:[%s249 + $0x4c0] sm:$0xff]
        %v469 = vld [vmem:[%s249 + $0x4c8] sm:$0xff]
        %v470 = vld [vmem:[%s249 + $0x4d0] sm:$0xff]
        %v471 = vld [vmem:[%s249 + $0x4d8] sm:$0xff]
        %v472 = vld [vmem:[%s249 + $0x4e0] sm:$0xff]
        %v473 = vld [vmem:[%s249 + $0x4e8] sm:$0xff]
        %v474 = vld [vmem:[%s249 + $0x4f0] sm:$0xff]
        %v475 = vld [vmem:[%s249 + $0x4f8] sm:$0xff]
        %v476 = vld [vmem:[%s249 + $0x500] sm:$0xff]
        %v477 = vld [vmem:[%s249 + $0x508] sm:$0xff]
        %v478 = vld [vmem:[%s249 + $0x510] sm:$0xff]
        %v479 = vld [vmem:[%s249 + $0x518] sm:$0xff]
        %v480 = vld [vmem:[%s249 + $0x520] sm:$0xff]
        %v481 = vld [vmem:[%s249 + $0x528] sm:$0xff]
        %v482 = vld [vmem:[%s249 + $0x530] sm:$0xff]
        %v483 = vld [vmem:[%s249 + $0x538] sm:$0xff]
        %v484 = vld [vmem:[%s249 + $0x540] sm:$0xff]
        %v485 = vld [vmem:[%s249 + $0x548] sm:$0xff]
        %v486 = vld [vmem:[%s249 + $0x550] sm:$0xff]
        %v487 = vld [vmem:[%s249 + $0x558] sm:$0xff]
        %v488 = vld [vmem:[%s249 + $0x560] sm:$0xff]
        %v489 = vld [vmem:[%s249 + $0x568] sm:$0xff]
        %v490 = vld [vmem:[%s249 + $0x570] sm:$0xff]
        %v491 = vld [vmem:[%s249 + $0x578] sm:$0xff]
        %v492 = vld [vmem:[%s249 + $0x580] sm:$0xff]
        %v493 = vld [vmem:[%s249 + $0x588] sm:$0xff]
        %v494 = vld [vmem:[%s249 + $0x590] sm:$0xff]
        %v495 = vld [vmem:[%s249 + $0x598] sm:$0xff]
        %v496 = vld [vmem:[%s249 + $0x5a0] sm:$0xff]
        %v497 = vld [vmem:[%s249 + $0x5a8] sm:$0xff]
        %v498 = vld [vmem:[%s249 + $0x5b0] sm:$0xff]
        %v499 = vld [vmem:[%s249 + $0x5b8] sm:$0xff]
        %v500 = vld [vmem:[%s249 + $0x5c0] sm:$0xff]
        %v501 = vld [vmem:[%s249 + $0x5c8] sm:$0xff]
        %v502 = vld [vmem:[%s249 + $0x5d0] sm:$0xff]
        %v503 = vld [vmem:[%s249 + $0x5d8] sm:$0xff]
        %v504 = vld [vmem:[%s249 + $0x5e0] sm:$0xff]
        %v505 = vld [vmem:[%s249 + $0x5e8] sm:$0xff]
        %v506 = vld [vmem:[%s249 + $0x5f0] sm:$0xff]
        %v507 = vld [vmem:[%s249 + $0x5f8] sm:$0xff]
        %v508 = vld [vmem:[%s249 + $0x600] sm:$0xff]
        %v509 = vld [vmem:[%s249 + $0x608] sm:$0xff]
        %v510 = vld [vmem:[%s249 + $0x610] sm:$0xff]
        %v511 = vld [vmem:[%s249 + $0x618] sm:$0xff]
        %v512 = vld [vmem:[%s249 + $0x620] sm:$0xff]
        %v513 = vld [vmem:[%s249 + $0x628] sm:$0xff]
        %v514 = vld [vmem:[%s249 + $0x630] sm:$0xff]
        %v515 = vld [vmem:[%s249 + $0x638] sm:$0xff]
        %v516 = vld [vmem:[%s249 + $0x640] sm:$0xff]
        %v517 = vld [vmem:[%s249 + $0x648] sm:$0xff]
        %v518 = vld [vmem:[%s249 + $0x650] sm:$0xff]
        %v519 = vld [vmem:[%s249 + $0x658] sm:$0xff]
        %v520 = vld [vmem:[%s249 + $0x660] sm:$0xff]
        %v521 = vld [vmem:[%s249 + $0x668] sm:$0xff]
        %v522 = vld [vmem:[%s249 + $0x670] sm:$0xff]
        %v523 = vld [vmem:[%s249 + $0x678] sm:$0xff]
        %v524 = vld [vmem:[%s249 + $0x680] sm:$0xff]
        %v525 = vld [vmem:[%s249 + $0x688] sm:$0xff]
        %v526 = vld [vmem:[%s249 + $0x690] sm:$0xff]
        %v527 = vld [vmem:[%s249 + $0x698] sm:$0xff]
        %v528 = vld [vmem:[%s249 + $0x6a0] sm:$0xff]
        %v529 = vld [vmem:[%s249 + $0x6a8] sm:$0xff]
        %v530 = vld [vmem:[%s249 + $0x6b0] sm:$0xff]
        %v531 = vld [vmem:[%s249 + $0x6b8] sm:$0xff]
        %v532 = vld [vmem:[%s249 + $0x6c0] sm:$0xff]
        %v533 = vld [vmem:[%s249 + $0x6c8] sm:$0xff]
        %v534 = vld [vmem:[%s249 + $0x6d0] sm:$0xff]
        %v535 = vld [vmem:[%s249 + $0x6d8] sm:$0xff]
        %v536 = vld [vmem:[%s249 + $0x6e0] sm:$0xff]
        %v537 = vld [vmem:[%s249 + $0x6e8] sm:$0xff]
        %v538 = vld [vmem:[%s249 + $0x6f0] sm:$0xff]
        %v539 = vld [vmem:[%s249 + $0x6f8] sm:$0xff]
        %v540 = vld [vmem:[%s249 + $0x700] sm:$0xff]
        %v541 = vld [vmem:[%s249 + $0x708] sm:$0xff]
        %v542 = vld [vmem:[%s249 + $0x710] sm:$0xff]
        %v543 = vld [vmem:[%s249 + $0x718] sm:$0xff]
        %v544 = vld [vmem:[%s249 + $0x720] sm:$0xff]
        %v545 = vld [vmem:[%s249 + $0x728] sm:$0xff]
        %v546 = vld [vmem:[%s249 + $0x730] sm:$0xff]
        %v547 = vld [vmem:[%s249 + $0x738] sm:$0xff]
        %v548 = vld [vmem:[%s249 + $0x740] sm:$0xff]
        %v549 = vld [vmem:[%s249 + $0x748] sm:$0xff]
        %v550 = vld [vmem:[%s249 + $0x750] sm:$0xff]
        %v551 = vld [vmem:[%s249 + $0x758] sm:$0xff]
        %v552 = vld [vmem:[%s249 + $0x760] sm:$0xff]
        %v553 = vld [vmem:[%s249 + $0x768] sm:$0xff]
        %v554 = vld [vmem:[%s249 + $0x770] sm:$0xff]
        %v555 = vld [vmem:[%s249 + $0x778] sm:$0xff]
        %v556 = vld [vmem:[%s249 + $0x780] sm:$0xff]
        %v557 = vld [vmem:[%s249 + $0x788] sm:$0xff]
        %v558 = vld [vmem:[%s249 + $0x790] sm:$0xff]
        %v559 = vld [vmem:[%s249 + $0x798] sm:$0xff]
        %v560 = vld [vmem:[%s249 + $0x7a0] sm:$0xff]
        %v561 = vld [vmem:[%s249 + $0x7a8] sm:$0xff]
        %v562 = vld [vmem:[%s249 + $0x7b0] sm:$0xff]
        %v563 = vld [vmem:[%s249 + $0x7b8] sm:$0xff]
        %v564 = vld [vmem:[%s249 + $0x7c0] sm:$0xff]
        %v565 = vld [vmem:[%s249 + $0x7c8] sm:$0xff]
        %v566 = vld [vmem:[%s249 + $0x7d0] sm:$0xff]
        %v567 = vld [vmem:[%s249 + $0x7d8] sm:$0xff]
        %v568 = vld [vmem:[%s249 + $0x7e0] sm:$0xff]
        %v569 = vld [vmem:[%s249 + $0x7e8] sm:$0xff]
        %v570 = vld [vmem:[%s249 + $0x7f0] sm:$0xff]
        %v571 = vld [vmem:[%s249 + $0x7f8] sm:$0xff]
        %v576 = vunpack.c.l.b16 %v312
        %v577 = vunpack.c.h.b16 %v312
        %v578 = vunpack.c.l.b16 %v313
        %v579 = vunpack.c.h.b16 %v313
        %v580 = vunpack.c.l.b16 %v314
        %v581 = vunpack.c.h.b16 %v314
        %v582 = vunpack.c.l.b16 %v315
        %v583 = vunpack.c.h.b16 %v315
        %v584 = vpack.c.b16 %v580, %v576
        %v585 = vpack.c.b16 %v581, %v577
        %v586 = vpack.c.b16 %v582, %v578
        %v587 = vpack.c.b16 %v583, %v579
        %v848 = vunpack.c.l.b16 %v316
        %v849 = vunpack.c.h.b16 %v316
        %v850 = vunpack.c.l.b16 %v317
        %v851 = vunpack.c.h.b16 %v317
        %v852 = vunpack.c.l.b16 %v318
        %v853 = vunpack.c.h.b16 %v318
        %v854 = vunpack.c.l.b16 %v319
        %v855 = vunpack.c.h.b16 %v319
        %v856 = vunpack.c.l.b16 %v320
        %v857 = vunpack.c.h.b16 %v320
        %v858 = vunpack.c.l.b16 %v321
        %v859 = vunpack.c.h.b16 %v321
        %v860 = vunpack.c.l.b16 %v322
        %v861 = vunpack.c.h.b16 %v322
        %v862 = vunpack.c.l.b16 %v323
        %v863 = vunpack.c.h.b16 %v323
        %v864 = vunpack.c.l.b16 %v324
        %v865 = vunpack.c.h.b16 %v324
        %v866 = vunpack.c.l.b16 %v325
        %v867 = vunpack.c.h.b16 %v325
        %v868 = vunpack.c.l.b16 %v326
        %v869 = vunpack.c.h.b16 %v326
        %v870 = vunpack.c.l.b16 %v327
        %v871 = vunpack.c.h.b16 %v327
        %v872 = vunpack.c.l.b16 %v328
        %v873 = vunpack.c.h.b16 %v328
        %v874 = vunpack.c.l.b16 %v329
        %v875 = vunpack.c.h.b16 %v329
        %v876 = vunpack.c.l.b16 %v330
        %v877 = vunpack.c.h.b16 %v330
        %v878 = vunpack.c.l.b16 %v331
        %v879 = vunpack.c.h.b16 %v331
        %v880 = vunpack.c.l.b16 %v332
        %v881 = vunpack.c.h.b16 %v332
        %v882 = vunpack.c.l.b16 %v333
        %v883 = vunpack.c.h.b16 %v333
        %v884 = vunpack.c.l.b16 %v334
        %v885 = vunpack.c.h.b16 %v334
        %v886 = vunpack.c.l.b16 %v335
        %v887 = vunpack.c.h.b16 %v335
        %v888 = vunpack.c.l.b16 %v336
        %v889 = vunpack.c.h.b16 %v336
        %v890 = vunpack.c.l.b16 %v337
        %v891 = vunpack.c.h.b16 %v337
        %v892 = vunpack.c.l.b16 %v338
        %v893 = vunpack.c.h.b16 %v338
        %v894 = vunpack.c.l.b16 %v339
        %v895 = vunpack.c.h.b16 %v339
        %v896 = vunpack.c.l.b16 %v340
        %v897 = vunpack.c.h.b16 %v340
        %v898 = vunpack.c.l.b16 %v341
        %v899 = vunpack.c.h.b16 %v341
        %v900 = vunpack.c.l.b16 %v342
        %v901 = vunpack.c.h.b16 %v342
        %v902 = vunpack.c.l.b16 %v343
        %v903 = vunpack.c.h.b16 %v343
        %v904 = vunpack.c.l.b16 %v344
        %v905 = vunpack.c.h.b16 %v344
        %v906 = vunpack.c.l.b16 %v345
        %v907 = vunpack.c.h.b16 %v345
        %v908 = vunpack.c.l.b16 %v346
        %v909 = vunpack.c.h.b16 %v346
        %v910 = vunpack.c.l.b16 %v347
        %v911 = vunpack.c.h.b16 %v347
        %v912 = vunpack.c.l.b16 %v348
        %v913 = vunpack.c.h.b16 %v348
        %v914 = vunpack.c.l.b16 %v349
        %v915 = vunpack.c.h.b16 %v349
        %v916 = vunpack.c.l.b16 %v350
        %v917 = vunpack.c.h.b16 %v350
        %v918 = vunpack.c.l.b16 %v351
        %v919 = vunpack.c.h.b16 %v351
        %v920 = vunpack.c.l.b16 %v352
        %v921 = vunpack.c.h.b16 %v352
        %v922 = vunpack.c.l.b16 %v353
        %v923 = vunpack.c.h.b16 %v353
        %v924 = vunpack.c.l.b16 %v354
        %v925 = vunpack.c.h.b16 %v354
        %v926 = vunpack.c.l.b16 %v355
        %v927 = vunpack.c.h.b16 %v355
        %v928 = vunpack.c.l.b16 %v356
        %v929 = vunpack.c.h.b16 %v356
        %v930 = vunpack.c.l.b16 %v357
        %v931 = vunpack.c.h.b16 %v357
        %v932 = vunpack.c.l.b16 %v358
        %v933 = vunpack.c.h.b16 %v358
        %v934 = vunpack.c.l.b16 %v359
        %v935 = vunpack.c.h.b16 %v359
        %v936 = vunpack.c.l.b16 %v360
        %v937 = vunpack.c.h.b16 %v360
        %v938 = vunpack.c.l.b16 %v361
        %v939 = vunpack.c.h.b16 %v361
        %v940 = vunpack.c.l.b16 %v362
        %v941 = vunpack.c.h.b16 %v362
        %v942 = vunpack.c.l.b16 %v363
        %v943 = vunpack.c.h.b16 %v363
        %v944 = vunpack.c.l.b16 %v364
        %v945 = vunpack.c.h.b16 %v364
        %v946 = vunpack.c.l.b16 %v365
        %v947 = vunpack.c.h.b16 %v365
        %v948 = vunpack.c.l.b16 %v366
        %v949 = vunpack.c.h.b16 %v366
        %v950 = vunpack.c.l.b16 %v367
        %v951 = vunpack.c.h.b16 %v367
        %v952 = vunpack.c.l.b16 %v368
        %v953 = vunpack.c.h.b16 %v368
        %v954 = vunpack.c.l.b16 %v369
        %v955 = vunpack.c.h.b16 %v369
        %v956 = vunpack.c.l.b16 %v370
        %v957 = vunpack.c.h.b16 %v370
        %v958 = vunpack.c.l.b16 %v371
        %v959 = vunpack.c.h.b16 %v371
        %v960 = vunpack.c.l.b16 %v372
        %v961 = vunpack.c.h.b16 %v372
        %v962 = vunpack.c.l.b16 %v373
        %v963 = vunpack.c.h.b16 %v373
        %v964 = vunpack.c.l.b16 %v374
        %v965 = vunpack.c.h.b16 %v374
        %v966 = vunpack.c.l.b16 %v375
        %v967 = vunpack.c.h.b16 %v375
        %v968 = vunpack.c.l.b16 %v376
        %v969 = vunpack.c.h.b16 %v376
        %v970 = vunpack.c.l.b16 %v377
        %v971 = vunpack.c.h.b16 %v377
        %v972 = vunpack.c.l.b16 %v378
        %v973 = vunpack.c.h.b16 %v378
        %v974 = vunpack.c.l.b16 %v379
        %v975 = vunpack.c.h.b16 %v379
        %v976 = vunpack.c.l.b16 %v380
        %v977 = vunpack.c.h.b16 %v380
        %v978 = vunpack.c.l.b16 %v381
        %v979 = vunpack.c.h.b16 %v381
        %v980 = vunpack.c.l.b16 %v382
        %v981 = vunpack.c.h.b16 %v382
        %v982 = vunpack.c.l.b16 %v383
        %v983 = vunpack.c.h.b16 %v383
        %v984 = vunpack.c.l.b16 %v384
        %v985 = vunpack.c.h.b16 %v384
        %v986 = vunpack.c.l.b16 %v385
        %v987 = vunpack.c.h.b16 %v385
        %v988 = vunpack.c.l.b16 %v386
        %v989 = vunpack.c.h.b16 %v386
        %v990 = vunpack.c.l.b16 %v387
        %v991 = vunpack.c.h.b16 %v387
        %v992 = vunpack.c.l.b16 %v388
        %v993 = vunpack.c.h.b16 %v388
        %v994 = vunpack.c.l.b16 %v389
        %v995 = vunpack.c.h.b16 %v389
        %v996 = vunpack.c.l.b16 %v390
        %v997 = vunpack.c.h.b16 %v390
        %v998 = vunpack.c.l.b16 %v391
        %v999 = vunpack.c.h.b16 %v391
        %v1000 = vunpack.c.l.b16 %v392
        %v1001 = vunpack.c.h.b16 %v392
        %v1002 = vunpack.c.l.b16 %v393
        %v1003 = vunpack.c.h.b16 %v393
        %v1004 = vunpack.c.l.b16 %v394
        %v1005 = vunpack.c.h.b16 %v394
        %v1006 = vunpack.c.l.b16 %v395
        %v1007 = vunpack.c.h.b16 %v395
        %v1008 = vunpack.c.l.b16 %v396
        %v1009 = vunpack.c.h.b16 %v396
        %v1010 = vunpack.c.l.b16 %v397
        %v1011 = vunpack.c.h.b16 %v397
        %v1012 = vunpack.c.l.b16 %v398
        %v1013 = vunpack.c.h.b16 %v398
        %v1014 = vunpack.c.l.b16 %v399
        %v1015 = vunpack.c.h.b16 %v399
        %v1016 = vunpack.c.l.b16 %v400
        %v1017 = vunpack.c.h.b16 %v400
        %v1018 = vunpack.c.l.b16 %v401
        %v1019 = vunpack.c.h.b16 %v401
        %v1020 = vunpack.c.l.b16 %v402
        %v1021 = vunpack.c.h.b16 %v402
        %v1022 = vunpack.c.l.b16 %v403
        %v1023 = vunpack.c.h.b16 %v403
        %v1024 = vunpack.c.l.b16 %v404
        %v1025 = vunpack.c.h.b16 %v404
        %v1026 = vunpack.c.l.b16 %v405
        %v1027 = vunpack.c.h.b16 %v405
        %v1028 = vunpack.c.l.b16 %v406
        %v1029 = vunpack.c.h.b16 %v406
        %v1030 = vunpack.c.l.b16 %v407
        %v1031 = vunpack.c.h.b16 %v407
        %v1032 = vunpack.c.l.b16 %v408
        %v1033 = vunpack.c.h.b16 %v408
        %v1034 = vunpack.c.l.b16 %v409
        %v1035 = vunpack.c.h.b16 %v409
        %v1036 = vunpack.c.l.b16 %v410
        %v1037 = vunpack.c.h.b16 %v410
        %v1038 = vunpack.c.l.b16 %v411
        %v1039 = vunpack.c.h.b16 %v411
        %v1040 = vunpack.c.l.b16 %v412
        %v1041 = vunpack.c.h.b16 %v412
        %v1042 = vunpack.c.l.b16 %v413
        %v1043 = vunpack.c.h.b16 %v413
        %v1044 = vunpack.c.l.b16 %v414
        %v1045 = vunpack.c.h.b16 %v414
        %v1046 = vunpack.c.l.b16 %v415
        %v1047 = vunpack.c.h.b16 %v415
        %v1048 = vunpack.c.l.b16 %v416
        %v1049 = vunpack.c.h.b16 %v416
        %v1050 = vunpack.c.l.b16 %v417
        %v1051 = vunpack.c.h.b16 %v417
        %v1052 = vunpack.c.l.b16 %v418
        %v1053 = vunpack.c.h.b16 %v418
        %v1054 = vunpack.c.l.b16 %v419
        %v1055 = vunpack.c.h.b16 %v419
        %v1056 = vunpack.c.l.b16 %v420
        %v1057 = vunpack.c.h.b16 %v420
        %v1058 = vunpack.c.l.b16 %v421
        %v1059 = vunpack.c.h.b16 %v421
        %v1060 = vunpack.c.l.b16 %v422
        %v1061 = vunpack.c.h.b16 %v422
        %v1062 = vunpack.c.l.b16 %v423
        %v1063 = vunpack.c.h.b16 %v423
        %v1064 = vunpack.c.l.b16 %v424
        %v1065 = vunpack.c.h.b16 %v424
        %v1066 = vunpack.c.l.b16 %v425
        %v1067 = vunpack.c.h.b16 %v425
        %v1068 = vunpack.c.l.b16 %v426
        %v1069 = vunpack.c.h.b16 %v426
        %v1070 = vunpack.c.l.b16 %v427
        %v1071 = vunpack.c.h.b16 %v427
        %v1072 = vunpack.c.l.b16 %v428
        %v1073 = vunpack.c.h.b16 %v428
        %v1074 = vunpack.c.l.b16 %v429
        %v1075 = vunpack.c.h.b16 %v429
        %v1076 = vunpack.c.l.b16 %v430
        %v1077 = vunpack.c.h.b16 %v430
        %v1078 = vunpack.c.l.b16 %v431
        %v1079 = vunpack.c.h.b16 %v431
        %v1080 = vunpack.c.l.b16 %v432
        %v1081 = vunpack.c.h.b16 %v432
        %v1082 = vunpack.c.l.b16 %v433
        %v1083 = vunpack.c.h.b16 %v433
        %v1084 = vunpack.c.l.b16 %v434
        %v1085 = vunpack.c.h.b16 %v434
        %v1086 = vunpack.c.l.b16 %v435
        %v1087 = vunpack.c.h.b16 %v435
        %v1088 = vunpack.c.l.b16 %v436
        %v1089 = vunpack.c.h.b16 %v436
        %v1090 = vunpack.c.l.b16 %v437
        %v1091 = vunpack.c.h.b16 %v437
        %v1092 = vunpack.c.l.b16 %v438
        %v1093 = vunpack.c.h.b16 %v438
        %v1094 = vunpack.c.l.b16 %v439
        %v1095 = vunpack.c.h.b16 %v439
        %v1096 = vunpack.c.l.b16 %v440
        %v1097 = vunpack.c.h.b16 %v440
        %v1098 = vunpack.c.l.b16 %v441
        %v1099 = vunpack.c.h.b16 %v441
        %v1100 = vunpack.c.l.b16 %v442
        %v1101 = vunpack.c.h.b16 %v442
        %v1102 = vunpack.c.l.b16 %v443
        %v1103 = vunpack.c.h.b16 %v443
        %v1104 = vunpack.c.l.b16 %v444
        %v1105 = vunpack.c.h.b16 %v444
        %v1106 = vunpack.c.l.b16 %v445
        %v1107 = vunpack.c.h.b16 %v445
        %v1108 = vunpack.c.l.b16 %v446
        %v1109 = vunpack.c.h.b16 %v446
        %v1110 = vunpack.c.l.b16 %v447
        %v1111 = vunpack.c.h.b16 %v447
        %v1112 = vunpack.c.l.b16 %v448
        %v1113 = vunpack.c.h.b16 %v448
        %v1114 = vunpack.c.l.b16 %v449
        %v1115 = vunpack.c.h.b16 %v449
        %v1116 = vunpack.c.l.b16 %v450
        %v1117 = vunpack.c.h.b16 %v450
        %v1118 = vunpack.c.l.b16 %v451
        %v1119 = vunpack.c.h.b16 %v451
        %v1120 = vunpack.c.l.b16 %v452
        %v1121 = vunpack.c.h.b16 %v452
        %v1122 = vunpack.c.l.b16 %v453
        %v1123 = vunpack.c.h.b16 %v453
        %v1124 = vunpack.c.l.b16 %v454
        %v1125 = vunpack.c.h.b16 %v454
        %v1126 = vunpack.c.l.b16 %v455
        %v1127 = vunpack.c.h.b16 %v455
        %v1128 = vunpack.c.l.b16 %v456
        %v1129 = vunpack.c.h.b16 %v456
        %v1130 = vunpack.c.l.b16 %v457
        %v1131 = vunpack.c.h.b16 %v457
        %v1132 = vunpack.c.l.b16 %v458
        %v1133 = vunpack.c.h.b16 %v458
        %v1134 = vunpack.c.l.b16 %v459
        %v1135 = vunpack.c.h.b16 %v459
        %v1136 = vunpack.c.l.b16 %v460
        %v1137 = vunpack.c.h.b16 %v460
        %v1138 = vunpack.c.l.b16 %v461
        %v1139 = vunpack.c.h.b16 %v461
        %v1140 = vunpack.c.l.b16 %v462
        %v1141 = vunpack.c.h.b16 %v462
        %v1142 = vunpack.c.l.b16 %v463
        %v1143 = vunpack.c.h.b16 %v463
        %v1144 = vunpack.c.l.b16 %v464
        %v1145 = vunpack.c.h.b16 %v464
        %v1146 = vunpack.c.l.b16 %v465
        %v1147 = vunpack.c.h.b16 %v465
        %v1148 = vunpack.c.l.b16 %v466
        %v1149 = vunpack.c.h.b16 %v466
        %v1150 = vunpack.c.l.b16 %v467
        %v1151 = vunpack.c.h.b16 %v467
        %v1152 = vunpack.c.l.b16 %v468
        %v1153 = vunpack.c.h.b16 %v468
        %v1154 = vunpack.c.l.b16 %v469
        %v1155 = vunpack.c.h.b16 %v469
        %v1156 = vunpack.c.l.b16 %v470
        %v1157 = vunpack.c.h.b16 %v470
        %v1158 = vunpack.c.l.b16 %v471
        %v1159 = vunpack.c.h.b16 %v471
        %v1160 = vunpack.c.l.b16 %v472
        %v1161 = vunpack.c.h.b16 %v472
        %v1162 = vunpack.c.l.b16 %v473
        %v1163 = vunpack.c.h.b16 %v473
        %v1164 = vunpack.c.l.b16 %v474
        %v1165 = vunpack.c.h.b16 %v474
        %v1166 = vunpack.c.l.b16 %v475
        %v1167 = vunpack.c.h.b16 %v475
        %v1168 = vunpack.c.l.b16 %v476
        %v1169 = vunpack.c.h.b16 %v476
        %v1170 = vunpack.c.l.b16 %v477
        %v1171 = vunpack.c.h.b16 %v477
        %v1172 = vunpack.c.l.b16 %v478
        %v1173 = vunpack.c.h.b16 %v478
        %v1174 = vunpack.c.l.b16 %v479
        %v1175 = vunpack.c.h.b16 %v479
        %v1176 = vunpack.c.l.b16 %v480
        %v1177 = vunpack.c.h.b16 %v480
        %v1178 = vunpack.c.l.b16 %v481
        %v1179 = vunpack.c.h.b16 %v481
        %v1180 = vunpack.c.l.b16 %v482
        %v1181 = vunpack.c.h.b16 %v482
        %v1182 = vunpack.c.l.b16 %v483
        %v1183 = vunpack.c.h.b16 %v483
        %v1184 = vunpack.c.l.b16 %v484
        %v1185 = vunpack.c.h.b16 %v484
        %v1186 = vunpack.c.l.b16 %v485
        %v1187 = vunpack.c.h.b16 %v485
        %v1188 = vunpack.c.l.b16 %v486
        %v1189 = vunpack.c.h.b16 %v486
        %v1190 = vunpack.c.l.b16 %v487
        %v1191 = vunpack.c.h.b16 %v487
        %v1192 = vunpack.c.l.b16 %v488
        %v1193 = vunpack.c.h.b16 %v488
        %v1194 = vunpack.c.l.b16 %v489
        %v1195 = vunpack.c.h.b16 %v489
        %v1196 = vunpack.c.l.b16 %v490
        %v1197 = vunpack.c.h.b16 %v490
        %v1198 = vunpack.c.l.b16 %v491
        %v1199 = vunpack.c.h.b16 %v491
        %v1200 = vunpack.c.l.b16 %v492
        %v1201 = vunpack.c.h.b16 %v492
        %v1202 = vunpack.c.l.b16 %v493
        %v1203 = vunpack.c.h.b16 %v493
        %v1204 = vunpack.c.l.b16 %v494
        %v1205 = vunpack.c.h.b16 %v494
        %v1206 = vunpack.c.l.b16 %v495
        %v1207 = vunpack.c.h.b16 %v495
        %v1208 = vunpack.c.l.b16 %v496
        %v1209 = vunpack.c.h.b16 %v496
        %v1210 = vunpack.c.l.b16 %v497
        %v1211 = vunpack.c.h.b16 %v497
        %v1212 = vunpack.c.l.b16 %v498
        %v1213 = vunpack.c.h.b16 %v498
        %v1214 = vunpack.c.l.b16 %v499
        %v1215 = vunpack.c.h.b16 %v499
        %v1216 = vunpack.c.l.b16 %v500
        %v1217 = vunpack.c.h.b16 %v500
        %v1218 = vunpack.c.l.b16 %v501
        %v1219 = vunpack.c.h.b16 %v501
        %v1220 = vunpack.c.l.b16 %v502
        %v1221 = vunpack.c.h.b16 %v502
        %v1222 = vunpack.c.l.b16 %v503
        %v1223 = vunpack.c.h.b16 %v503
        %v1224 = vunpack.c.l.b16 %v504
        %v1225 = vunpack.c.h.b16 %v504
        %v1226 = vunpack.c.l.b16 %v505
        %v1227 = vunpack.c.h.b16 %v505
        %v1228 = vunpack.c.l.b16 %v506
        %v1229 = vunpack.c.h.b16 %v506
        %v1230 = vunpack.c.l.b16 %v507
        %v1231 = vunpack.c.h.b16 %v507
        %v1232 = vunpack.c.l.b16 %v508
        %v1233 = vunpack.c.h.b16 %v508
        %v1234 = vunpack.c.l.b16 %v509
        %v1235 = vunpack.c.h.b16 %v509
        %v1236 = vunpack.c.l.b16 %v510
        %v1237 = vunpack.c.h.b16 %v510
        %v1238 = vunpack.c.l.b16 %v511
        %v1239 = vunpack.c.h.b16 %v511
        %v1240 = vunpack.c.l.b16 %v512
        %v1241 = vunpack.c.h.b16 %v512
        %v1242 = vunpack.c.l.b16 %v513
        %v1243 = vunpack.c.h.b16 %v513
        %v1244 = vunpack.c.l.b16 %v514
        %v1245 = vunpack.c.h.b16 %v514
        %v1246 = vunpack.c.l.b16 %v515
        %v1247 = vunpack.c.h.b16 %v515
        %v1248 = vunpack.c.l.b16 %v516
        %v1249 = vunpack.c.h.b16 %v516
        %v1250 = vunpack.c.l.b16 %v517
        %v1251 = vunpack.c.h.b16 %v517
        %v1252 = vunpack.c.l.b16 %v518
        %v1253 = vunpack.c.h.b16 %v518
        %v1254 = vunpack.c.l.b16 %v519
        %v1255 = vunpack.c.h.b16 %v519
        %v1256 = vunpack.c.l.b16 %v520
        %v1257 = vunpack.c.h.b16 %v520
        %v1258 = vunpack.c.l.b16 %v521
        %v1259 = vunpack.c.h.b16 %v521
        %v1260 = vunpack.c.l.b16 %v522
        %v1261 = vunpack.c.h.b16 %v522
        %v1262 = vunpack.c.l.b16 %v523
        %v1263 = vunpack.c.h.b16 %v523
        %v1264 = vunpack.c.l.b16 %v524
        %v1265 = vunpack.c.h.b16 %v524
        %v1266 = vunpack.c.l.b16 %v525
        %v1267 = vunpack.c.h.b16 %v525
        %v1268 = vunpack.c.l.b16 %v526
        %v1269 = vunpack.c.h.b16 %v526
        %v1270 = vunpack.c.l.b16 %v527
        %v1271 = vunpack.c.h.b16 %v527
        %v1272 = vunpack.c.l.b16 %v528
        %v1273 = vunpack.c.h.b16 %v528
        %v1274 = vunpack.c.l.b16 %v529
        %v1275 = vunpack.c.h.b16 %v529
        %v1276 = vunpack.c.l.b16 %v530
        %v1277 = vunpack.c.h.b16 %v530
        %v1278 = vunpack.c.l.b16 %v531
        %v1279 = vunpack.c.h.b16 %v531
        %v1280 = vunpack.c.l.b16 %v532
        %v1281 = vunpack.c.h.b16 %v532
        %v1282 = vunpack.c.l.b16 %v533
        %v1283 = vunpack.c.h.b16 %v533
        %v1284 = vunpack.c.l.b16 %v534
        %v1285 = vunpack.c.h.b16 %v534
        %v1286 = vunpack.c.l.b16 %v535
        %v1287 = vunpack.c.h.b16 %v535
        %v1288 = vunpack.c.l.b16 %v536
        %v1289 = vunpack.c.h.b16 %v536
        %v1290 = vunpack.c.l.b16 %v537
        %v1291 = vunpack.c.h.b16 %v537
        %v1292 = vunpack.c.l.b16 %v538
        %v1293 = vunpack.c.h.b16 %v538
        %v1294 = vunpack.c.l.b16 %v539
        %v1295 = vunpack.c.h.b16 %v539
        %v1296 = vunpack.c.l.b16 %v540
        %v1297 = vunpack.c.h.b16 %v540
        %v1298 = vunpack.c.l.b16 %v541
        %v1299 = vunpack.c.h.b16 %v541
        %v1300 = vunpack.c.l.b16 %v542
        %v1301 = vunpack.c.h.b16 %v542
        %v1302 = vunpack.c.l.b16 %v543
        %v1303 = vunpack.c.h.b16 %v543
        %v1304 = vunpack.c.l.b16 %v544
        %v1305 = vunpack.c.h.b16 %v544
        %v1306 = vunpack.c.l.b16 %v545
        %v1307 = vunpack.c.h.b16 %v545
        %v1308 = vunpack.c.l.b16 %v546
        %v1309 = vunpack.c.h.b16 %v546
        %v1310 = vunpack.c.l.b16 %v547
        %v1311 = vunpack.c.h.b16 %v547
        %v1312 = vunpack.c.l.b16 %v548
        %v1313 = vunpack.c.h.b16 %v548
        %v1314 = vunpack.c.l.b16 %v549
        %v1315 = vunpack.c.h.b16 %v549
        %v1316 = vunpack.c.l.b16 %v550
        %v1317 = vunpack.c.h.b16 %v550
        %v1318 = vunpack.c.l.b16 %v551
        %v1319 = vunpack.c.h.b16 %v551
        %v1320 = vunpack.c.l.b16 %v552
        %v1321 = vunpack.c.h.b16 %v552
        %v1322 = vunpack.c.l.b16 %v553
        %v1323 = vunpack.c.h.b16 %v553
        %v1324 = vunpack.c.l.b16 %v554
        %v1325 = vunpack.c.h.b16 %v554
        %v1326 = vunpack.c.l.b16 %v555
        %v1327 = vunpack.c.h.b16 %v555
        %v1328 = vunpack.c.l.b16 %v556
        %v1329 = vunpack.c.h.b16 %v556
        %v1330 = vunpack.c.l.b16 %v557
        %v1331 = vunpack.c.h.b16 %v557
        %v1332 = vunpack.c.l.b16 %v558
        %v1333 = vunpack.c.h.b16 %v558
        %v1334 = vunpack.c.l.b16 %v559
        %v1335 = vunpack.c.h.b16 %v559
        %v1336 = vunpack.c.l.b16 %v560
        %v1337 = vunpack.c.h.b16 %v560
        %v1338 = vunpack.c.l.b16 %v561
        %v1339 = vunpack.c.h.b16 %v561
        %v1340 = vunpack.c.l.b16 %v562
        %v1341 = vunpack.c.h.b16 %v562
        %v1342 = vunpack.c.l.b16 %v563
        %v1343 = vunpack.c.h.b16 %v563
        %v1344 = vunpack.c.l.b16 %v564
        %v1345 = vunpack.c.h.b16 %v564
        %v1346 = vunpack.c.l.b16 %v565
        %v1347 = vunpack.c.h.b16 %v565
        %v1348 = vunpack.c.l.b16 %v566
        %v1349 = vunpack.c.h.b16 %v566
        %v1350 = vunpack.c.l.b16 %v567
        %v1351 = vunpack.c.h.b16 %v567
        %v1352 = vunpack.c.l.b16 %v568
        %v1353 = vunpack.c.h.b16 %v568
        %v1354 = vunpack.c.l.b16 %v569
        %v1355 = vunpack.c.h.b16 %v569
        %v1356 = vunpack.c.l.b16 %v570
        %v1357 = vunpack.c.h.b16 %v570
        %v1358 = vunpack.c.l.b16 %v571
        %v1359 = vunpack.c.h.b16 %v571
        %v1360 = vpack.c.b16 %v856, %v848
        %v1361 = vpack.c.b16 %v857, %v849
        %v1362 = vpack.c.b16 %v858, %v850
        %v1363 = vpack.c.b16 %v859, %v851
        %v1364 = vpack.c.b16 %v860, %v852
        %v1365 = vpack.c.b16 %v861, %v853
        %v1366 = vpack.c.b16 %v862, %v854
        %v1367 = vpack.c.b16 %v863, %v855
        %v1368 = vpack.c.b16 %v872, %v864
        %v1369 = vpack.c.b16 %v873, %v865
        %v1370 = vpack.c.b16 %v874, %v866
        %v1371 = vpack.c.b16 %v875, %v867
        %v1372 = vpack.c.b16 %v876, %v868
        %v1373 = vpack.c.b16 %v877, %v869
        %v1374 = vpack.c.b16 %v878, %v870
        %v1375 = vpack.c.b16 %v879, %v871
        %v1376 = vpack.c.b16 %v888, %v880
        %v1377 = vpack.c.b16 %v889, %v881
        %v1378 = vpack.c.b16 %v890, %v882
        %v1379 = vpack.c.b16 %v891, %v883
        %v1380 = vpack.c.b16 %v892, %v884
        %v1381 = vpack.c.b16 %v893, %v885
        %v1382 = vpack.c.b16 %v894, %v886
        %v1383 = vpack.c.b16 %v895, %v887
        %v1384 = vpack.c.b16 %v904, %v896
        %v1385 = vpack.c.b16 %v905, %v897
        %v1386 = vpack.c.b16 %v906, %v898
        %v1387 = vpack.c.b16 %v907, %v899
        %v1388 = vpack.c.b16 %v908, %v900
        %v1389 = vpack.c.b16 %v909, %v901
        %v1390 = vpack.c.b16 %v910, %v902
        %v1391 = vpack.c.b16 %v911, %v903
        %v1392 = vpack.c.b16 %v920, %v912
        %v1393 = vpack.c.b16 %v921, %v913
        %v1394 = vpack.c.b16 %v922, %v914
        %v1395 = vpack.c.b16 %v923, %v915
        %v1396 = vpack.c.b16 %v924, %v916
        %v1397 = vpack.c.b16 %v925, %v917
        %v1398 = vpack.c.b16 %v926, %v918
        %v1399 = vpack.c.b16 %v927, %v919
        %v1400 = vpack.c.b16 %v936, %v928
        %v1401 = vpack.c.b16 %v937, %v929
        %v1402 = vpack.c.b16 %v938, %v930
        %v1403 = vpack.c.b16 %v939, %v931
        %v1404 = vpack.c.b16 %v940, %v932
        %v1405 = vpack.c.b16 %v941, %v933
        %v1406 = vpack.c.b16 %v942, %v934
        %v1407 = vpack.c.b16 %v943, %v935
        %v1408 = vpack.c.b16 %v952, %v944
        %v1409 = vpack.c.b16 %v953, %v945
        %v1410 = vpack.c.b16 %v954, %v946
        %v1411 = vpack.c.b16 %v955, %v947
        %v1412 = vpack.c.b16 %v956, %v948
        %v1413 = vpack.c.b16 %v957, %v949
        %v1414 = vpack.c.b16 %v958, %v950
        %v1415 = vpack.c.b16 %v959, %v951
        %v1416 = vpack.c.b16 %v968, %v960
        %v1417 = vpack.c.b16 %v969, %v961
        %v1418 = vpack.c.b16 %v970, %v962
        %v1419 = vpack.c.b16 %v971, %v963
        %v1420 = vpack.c.b16 %v972, %v964
        %v1421 = vpack.c.b16 %v973, %v965
        %v1422 = vpack.c.b16 %v974, %v966
        %v1423 = vpack.c.b16 %v975, %v967
        %v1424 = vpack.c.b16 %v984, %v976
        %v1425 = vpack.c.b16 %v985, %v977
        %v1426 = vpack.c.b16 %v986, %v978
        %v1427 = vpack.c.b16 %v987, %v979
        %v1428 = vpack.c.b16 %v988, %v980
        %v1429 = vpack.c.b16 %v989, %v981
        %v1430 = vpack.c.b16 %v990, %v982
        %v1431 = vpack.c.b16 %v991, %v983
        %v1432 = vpack.c.b16 %v1000, %v992
        %v1433 = vpack.c.b16 %v1001, %v993
        %v1434 = vpack.c.b16 %v1002, %v994
        %v1435 = vpack.c.b16 %v1003, %v995
        %v1436 = vpack.c.b16 %v1004, %v996
        %v1437 = vpack.c.b16 %v1005, %v997
        %v1438 = vpack.c.b16 %v1006, %v998
        %v1439 = vpack.c.b16 %v1007, %v999
        %v1440 = vpack.c.b16 %v1016, %v1008
        %v1441 = vpack.c.b16 %v1017, %v1009
        %v1442 = vpack.c.b16 %v1018, %v1010
        %v1443 = vpack.c.b16 %v1019, %v1011
        %v1444 = vpack.c.b16 %v1020, %v1012
        %v1445 = vpack.c.b16 %v1021, %v1013
        %v1446 = vpack.c.b16 %v1022, %v1014
        %v1447 = vpack.c.b16 %v1023, %v1015
        %v1448 = vpack.c.b16 %v1032, %v1024
        %v1449 = vpack.c.b16 %v1033, %v1025
        %v1450 = vpack.c.b16 %v1034, %v1026
        %v1451 = vpack.c.b16 %v1035, %v1027
        %v1452 = vpack.c.b16 %v1036, %v1028
        %v1453 = vpack.c.b16 %v1037, %v1029
        %v1454 = vpack.c.b16 %v1038, %v1030
        %v1455 = vpack.c.b16 %v1039, %v1031
        %v1456 = vpack.c.b16 %v1048, %v1040
        %v1457 = vpack.c.b16 %v1049, %v1041
        %v1458 = vpack.c.b16 %v1050, %v1042
        %v1459 = vpack.c.b16 %v1051, %v1043
        %v1460 = vpack.c.b16 %v1052, %v1044
        %v1461 = vpack.c.b16 %v1053, %v1045
        %v1462 = vpack.c.b16 %v1054, %v1046
        %v1463 = vpack.c.b16 %v1055, %v1047
        %v1464 = vpack.c.b16 %v1064, %v1056
        %v1465 = vpack.c.b16 %v1065, %v1057
        %v1466 = vpack.c.b16 %v1066, %v1058
        %v1467 = vpack.c.b16 %v1067, %v1059
        %v1468 = vpack.c.b16 %v1068, %v1060
        %v1469 = vpack.c.b16 %v1069, %v1061
        %v1470 = vpack.c.b16 %v1070, %v1062
        %v1471 = vpack.c.b16 %v1071, %v1063
        %v1472 = vpack.c.b16 %v1080, %v1072
        %v1473 = vpack.c.b16 %v1081, %v1073
        %v1474 = vpack.c.b16 %v1082, %v1074
        %v1475 = vpack.c.b16 %v1083, %v1075
        %v1476 = vpack.c.b16 %v1084, %v1076
        %v1477 = vpack.c.b16 %v1085, %v1077
        %v1478 = vpack.c.b16 %v1086, %v1078
        %v1479 = vpack.c.b16 %v1087, %v1079
        %v1480 = vpack.c.b16 %v1096, %v1088
        %v1481 = vpack.c.b16 %v1097, %v1089
        %v1482 = vpack.c.b16 %v1098, %v1090
        %v1483 = vpack.c.b16 %v1099, %v1091
        %v1484 = vpack.c.b16 %v1100, %v1092
        %v1485 = vpack.c.b16 %v1101, %v1093
        %v1486 = vpack.c.b16 %v1102, %v1094
        %v1487 = vpack.c.b16 %v1103, %v1095
        %v1488 = vpack.c.b16 %v1112, %v1104
        %v1489 = vpack.c.b16 %v1113, %v1105
        %v1490 = vpack.c.b16 %v1114, %v1106
        %v1491 = vpack.c.b16 %v1115, %v1107
        %v1492 = vpack.c.b16 %v1116, %v1108
        %v1493 = vpack.c.b16 %v1117, %v1109
        %v1494 = vpack.c.b16 %v1118, %v1110
        %v1495 = vpack.c.b16 %v1119, %v1111
        %v1496 = vpack.c.b16 %v1128, %v1120
        %v1497 = vpack.c.b16 %v1129, %v1121
        %v1498 = vpack.c.b16 %v1130, %v1122
        %v1499 = vpack.c.b16 %v1131, %v1123
        %v1500 = vpack.c.b16 %v1132, %v1124
        %v1501 = vpack.c.b16 %v1133, %v1125
        %v1502 = vpack.c.b16 %v1134, %v1126
        %v1503 = vpack.c.b16 %v1135, %v1127
        %v1504 = vpack.c.b16 %v1144, %v1136
        %v1505 = vpack.c.b16 %v1145, %v1137
        %v1506 = vpack.c.b16 %v1146, %v1138
        %v1507 = vpack.c.b16 %v1147, %v1139
        %v1508 = vpack.c.b16 %v1148, %v1140
        %v1509 = vpack.c.b16 %v1149, %v1141
        %v1510 = vpack.c.b16 %v1150, %v1142
        %v1511 = vpack.c.b16 %v1151, %v1143
        %v1512 = vpack.c.b16 %v1160, %v1152
        %v1513 = vpack.c.b16 %v1161, %v1153
        %v1514 = vpack.c.b16 %v1162, %v1154
        %v1515 = vpack.c.b16 %v1163, %v1155
        %v1516 = vpack.c.b16 %v1164, %v1156
        %v1517 = vpack.c.b16 %v1165, %v1157
        %v1518 = vpack.c.b16 %v1166, %v1158
        %v1519 = vpack.c.b16 %v1167, %v1159
        %v1520 = vpack.c.b16 %v1176, %v1168
        %v1521 = vpack.c.b16 %v1177, %v1169
        %v1522 = vpack.c.b16 %v1178, %v1170
        %v1523 = vpack.c.b16 %v1179, %v1171
        %v1524 = vpack.c.b16 %v1180, %v1172
        %v1525 = vpack.c.b16 %v1181, %v1173
        %v1526 = vpack.c.b16 %v1182, %v1174
        %v1527 = vpack.c.b16 %v1183, %v1175
        %v1528 = vpack.c.b16 %v1192, %v1184
        %v1529 = vpack.c.b16 %v1193, %v1185
        %v1530 = vpack.c.b16 %v1194, %v1186
        %v1531 = vpack.c.b16 %v1195, %v1187
        %v1532 = vpack.c.b16 %v1196, %v1188
        %v1533 = vpack.c.b16 %v1197, %v1189
        %v1534 = vpack.c.b16 %v1198, %v1190
        %v1535 = vpack.c.b16 %v1199, %v1191
        %v1536 = vpack.c.b16 %v1208, %v1200
        %v1537 = vpack.c.b16 %v1209, %v1201
        %v1538 = vpack.c.b16 %v1210, %v1202
        %v1539 = vpack.c.b16 %v1211, %v1203
        %v1540 = vpack.c.b16 %v1212, %v1204
        %v1541 = vpack.c.b16 %v1213, %v1205
        %v1542 = vpack.c.b16 %v1214, %v1206
        %v1543 = vpack.c.b16 %v1215, %v1207
        %v1544 = vpack.c.b16 %v1224, %v1216
        %v1545 = vpack.c.b16 %v1225, %v1217
        %v1546 = vpack.c.b16 %v1226, %v1218
        %v1547 = vpack.c.b16 %v1227, %v1219
        %v1548 = vpack.c.b16 %v1228, %v1220
        %v1549 = vpack.c.b16 %v1229, %v1221
        %v1550 = vpack.c.b16 %v1230, %v1222
        %v1551 = vpack.c.b16 %v1231, %v1223
        %v1552 = vpack.c.b16 %v1240, %v1232
        %v1553 = vpack.c.b16 %v1241, %v1233
        %v1554 = vpack.c.b16 %v1242, %v1234
        %v1555 = vpack.c.b16 %v1243, %v1235
        %v1556 = vpack.c.b16 %v1244, %v1236
        %v1557 = vpack.c.b16 %v1245, %v1237
        %v1558 = vpack.c.b16 %v1246, %v1238
        %v1559 = vpack.c.b16 %v1247, %v1239
        %v1560 = vpack.c.b16 %v1256, %v1248
        %v1561 = vpack.c.b16 %v1257, %v1249
        %v1562 = vpack.c.b16 %v1258, %v1250
        %v1563 = vpack.c.b16 %v1259, %v1251
        %v1564 = vpack.c.b16 %v1260, %v1252
        %v1565 = vpack.c.b16 %v1261, %v1253
        %v1566 = vpack.c.b16 %v1262, %v1254
        %v1567 = vpack.c.b16 %v1263, %v1255
        %v1568 = vpack.c.b16 %v1272, %v1264
        %v1569 = vpack.c.b16 %v1273, %v1265
        %v1570 = vpack.c.b16 %v1274, %v1266
        %v1571 = vpack.c.b16 %v1275, %v1267
        %v1572 = vpack.c.b16 %v1276, %v1268
        %v1573 = vpack.c.b16 %v1277, %v1269
        %v1574 = vpack.c.b16 %v1278, %v1270
        %v1575 = vpack.c.b16 %v1279, %v1271
        %v1576 = vpack.c.b16 %v1288, %v1280
        %v1577 = vpack.c.b16 %v1289, %v1281
        %v1578 = vpack.c.b16 %v1290, %v1282
        %v1579 = vpack.c.b16 %v1291, %v1283
        %v1580 = vpack.c.b16 %v1292, %v1284
        %v1581 = vpack.c.b16 %v1293, %v1285
        %v1582 = vpack.c.b16 %v1294, %v1286
        %v1583 = vpack.c.b16 %v1295, %v1287
        %v1584 = vpack.c.b16 %v1304, %v1296
        %v1585 = vpack.c.b16 %v1305, %v1297
        %v1586 = vpack.c.b16 %v1306, %v1298
        %v1587 = vpack.c.b16 %v1307, %v1299
        %v1588 = vpack.c.b16 %v1308, %v1300
        %v1589 = vpack.c.b16 %v1309, %v1301
        %v1590 = vpack.c.b16 %v1310, %v1302
        %v1591 = vpack.c.b16 %v1311, %v1303
        %v1592 = vpack.c.b16 %v1320, %v1312
        %v1593 = vpack.c.b16 %v1321, %v1313
        %v1594 = vpack.c.b16 %v1322, %v1314
        %v1595 = vpack.c.b16 %v1323, %v1315
        %v1596 = vpack.c.b16 %v1324, %v1316
        %v1597 = vpack.c.b16 %v1325, %v1317
        %v1598 = vpack.c.b16 %v1326, %v1318
        %v1599 = vpack.c.b16 %v1327, %v1319
        %v1600 = vpack.c.b16 %v1336, %v1328
        %v1601 = vpack.c.b16 %v1337, %v1329
        %v1602 = vpack.c.b16 %v1338, %v1330
        %v1603 = vpack.c.b16 %v1339, %v1331
        %v1604 = vpack.c.b16 %v1340, %v1332
        %v1605 = vpack.c.b16 %v1341, %v1333
        %v1606 = vpack.c.b16 %v1342, %v1334
        %v1607 = vpack.c.b16 %v1343, %v1335
        %v1608 = vpack.c.b16 %v1352, %v1344
        %v1609 = vpack.c.b16 %v1353, %v1345
        %v1610 = vpack.c.b16 %v1354, %v1346
        %v1611 = vpack.c.b16 %v1355, %v1347
        %v1612 = vpack.c.b16 %v1356, %v1348
        %v1613 = vpack.c.b16 %v1357, %v1349
        %v1614 = vpack.c.b16 %v1358, %v1350
        %v1615 = vpack.c.b16 %v1359, %v1351
        %1872 = vmatprep.subr.bf16.mxu0 %v1361
        %1873 = vmatpush1.bf16.msra.mxu0 %v1360
        %1874 = vmatprep.subr.bf16.mxu0 %v1369
        %1875 = vmatpush1.bf16.msra.mxu0 %v1368
        %1876 = vmatprep.subr.bf16.mxu0 %v1377
        %1877 = vmatpush1.bf16.msra.mxu0 %v1376
        %1878 = vmatprep.subr.bf16.mxu0 %v1385
        %1879 = vmatpush1.bf16.msra.mxu0 %v1384
        %1880 = vmatprep.subr.bf16.mxu0 %v1393
        %1881 = vmatpush1.bf16.msra.mxu0 %v1392
        %1882 = vmatprep.subr.bf16.mxu0 %v1401
        %1883 = vmatpush1.bf16.msra.mxu0 %v1400
        %1884 = vmatprep.subr.bf16.mxu0 %v1409
        %1885 = vmatpush1.bf16.msra.mxu0 %v1408
        %1886 = vmatprep.subr.bf16.mxu0 %v1417
        %1887 = vmatpush1.bf16.msra.mxu0 %v1416
        %1888 = vmatprep.subr.bf16.mxu0 %v1425
        %1889 = vmatpush1.bf16.msra.mxu0 %v1424
        %1890 = vmatprep.subr.bf16.mxu0 %v1433
        %1891 = vmatpush1.bf16.msra.mxu0 %v1432
        %1892 = vmatprep.subr.bf16.mxu0 %v1441
        %1893 = vmatpush1.bf16.msra.mxu0 %v1440
        %1894 = vmatprep.subr.bf16.mxu0 %v1449
        %1895 = vmatpush1.bf16.msra.mxu0 %v1448
        %1896 = vmatprep.subr.bf16.mxu0 %v1457
        %1897 = vmatpush1.bf16.msra.mxu0 %v1456
        %1898 = vmatprep.subr.bf16.mxu0 %v1465
        %1899 = vmatpush1.bf16.msra.mxu0 %v1464
        %1900 = vmatprep.subr.bf16.mxu0 %v1473
        %1901 = vmatpush1.bf16.msra.mxu0 %v1472
        %1902 = vmatprep.subr.bf16.mxu0 %v1481
        %1903 = vmatpush1.bf16.msra.mxu0 %v1480
        %1904 = vmatprep.mubr.bf16.mxu0 %v585
        %1905 = vmatmul.mubr.bf16.gmra.mrb[0].mxu0 %v584
        %v1906 = vpop.f32.mrb[0].mxu0
        %v1907 = vadd.f32 0.0, %v1906
        %v1908 = vpop.f32.mrb[0].mxu0
        %v1909 = vadd.f32 0.0, %v1908
        %v1910 = vpop.f32.mrb[0].mxu0
        %v1911 = vadd.f32 0.0, %v1910
        %v1912 = vpop.f32.mrb[0].mxu0
        %v1913 = vadd.f32 0.0, %v1912
        %1914 = vdwg.mxu0
        %1915 = vmatprep.subr.bf16.mxu0 %v1489
        %1916 = vmatpush1.bf16.msra.mxu0 %v1488
        %1917 = vmatprep.subr.bf16.mxu0 %v1497
        %1918 = vmatpush1.bf16.msra.mxu0 %v1496
        %1919 = vmatprep.subr.bf16.mxu0 %v1505
        %1920 = vmatpush1.bf16.msra.mxu0 %v1504
        %1921 = vmatprep.subr.bf16.mxu0 %v1513
        %1922 = vmatpush1.bf16.msra.mxu0 %v1512
        %1923 = vmatprep.subr.bf16.mxu0 %v1521
        %1924 = vmatpush1.bf16.msra.mxu0 %v1520
        %1925 = vmatprep.subr.bf16.mxu0 %v1529
        %1926 = vmatpush1.bf16.msra.mxu0 %v1528
        %1927 = vmatprep.subr.bf16.mxu0 %v1537
        %1928 = vmatpush1.bf16.msra.mxu0 %v1536
        %1929 = vmatprep.subr.bf16.mxu0 %v1545
        %1930 = vmatpush1.bf16.msra.mxu0 %v1544
        %1931 = vmatprep.subr.bf16.mxu0 %v1553
        %1932 = vmatpush1.bf16.msra.mxu0 %v1552
        %1933 = vmatprep.subr.bf16.mxu0 %v1561
        %1934 = vmatpush1.bf16.msra.mxu0 %v1560
        %1935 = vmatprep.subr.bf16.mxu0 %v1569
        %1936 = vmatpush1.bf16.msra.mxu0 %v1568
        %1937 = vmatprep.subr.bf16.mxu0 %v1577
        %1938 = vmatpush1.bf16.msra.mxu0 %v1576
        %1939 = vmatprep.subr.bf16.mxu0 %v1585
        %1940 = vmatpush1.bf16.msra.mxu0 %v1584
        %1941 = vmatprep.subr.bf16.mxu0 %v1593
        %1942 = vmatpush1.bf16.msra.mxu0 %v1592
        %1943 = vmatprep.subr.bf16.mxu0 %v1601
        %1944 = vmatpush1.bf16.msra.mxu0 %v1600
        %1945 = vmatprep.subr.bf16.mxu0 %v1609
        %1946 = vmatpush1.bf16.msra.mxu0 %v1608
        %1947 = vmatprep.mubr.bf16.mxu0 %v587
        %1948 = vmatmul.mubr.bf16.gmra.mrb[0].mxu0 %v586
        %v1949 = vpop.f32.mrb[0].mxu0
        %v1950 = vadd.f32 %v1907, %v1949
        %v1951 = vpop.f32.mrb[0].mxu0
        %v1952 = vadd.f32 %v1909, %v1951
        %v1953 = vpop.f32.mrb[0].mxu0
        %v1954 = vadd.f32 %v1911, %v1953
        %v1955 = vpop.f32.mrb[0].mxu0
        %v1956 = vadd.f32 %v1913, %v1955
        %1957 = vdwg.mxu0
        %1958 = vmatprep.subr.bf16.mxu0 %v1363
        %1959 = vmatpush1.bf16.msra.mxu0 %v1362
        %1960 = vmatprep.subr.bf16.mxu0 %v1371
        %1961 = vmatpush1.bf16.msra.mxu0 %v1370
        %1962 = vmatprep.subr.bf16.mxu0 %v1379
        %1963 = vmatpush1.bf16.msra.mxu0 %v1378
        %1964 = vmatprep.subr.bf16.mxu0 %v1387
        %1965 = vmatpush1.bf16.msra.mxu0 %v1386
        %1966 = vmatprep.subr.bf16.mxu0 %v1395
        %1967 = vmatpush1.bf16.msra.mxu0 %v1394
        %1968 = vmatprep.subr.bf16.mxu0 %v1403
        %1969 = vmatpush1.bf16.msra.mxu0 %v1402
        %1970 = vmatprep.subr.bf16.mxu0 %v1411
        %1971 = vmatpush1.bf16.msra.mxu0 %v1410
        %1972 = vmatprep.subr.bf16.mxu0 %v1419
        %1973 = vmatpush1.bf16.msra.mxu0 %v1418
        %1974 = vmatprep.subr.bf16.mxu0 %v1427
        %1975 = vmatpush1.bf16.msra.mxu0 %v1426
        %1976 = vmatprep.subr.bf16.mxu0 %v1435
        %1977 = vmatpush1.bf16.msra.mxu0 %v1434
        %1978 = vmatprep.subr.bf16.mxu0 %v1443
        %1979 = vmatpush1.bf16.msra.mxu0 %v1442
        %1980 = vmatprep.subr.bf16.mxu0 %v1451
        %1981 = vmatpush1.bf16.msra.mxu0 %v1450
        %1982 = vmatprep.subr.bf16.mxu0 %v1459
        %1983 = vmatpush1.bf16.msra.mxu0 %v1458
        %1984 = vmatprep.subr.bf16.mxu0 %v1467
        %1985 = vmatpush1.bf16.msra.mxu0 %v1466
        %1986 = vmatprep.subr.bf16.mxu0 %v1475
        %1987 = vmatpush1.bf16.msra.mxu0 %v1474
        %1988 = vmatprep.subr.bf16.mxu0 %v1483
        %1989 = vmatpush1.bf16.msra.mxu0 %v1482
        %1990 = vmatprep.mubr.bf16.mxu0 %v585
        %1991 = vmatmul.mubr.bf16.gmra.mrb[0].mxu0 %v584
        %v1992 = vpop.f32.mrb[0].mxu0
        %v1993 = vadd.f32 0.0, %v1992
        %v1994 = vpop.f32.mrb[0].mxu0
        %v1995 = vadd.f32 0.0, %v1994
        %v1996 = vpop.f32.mrb[0].mxu0
        %v1997 = vadd.f32 0.0, %v1996
        %v1998 = vpop.f32.mrb[0].mxu0
        %v1999 = vadd.f32 0.0, %v1998
        %2000 = vdwg.mxu0
        %2001 = vmatprep.subr.bf16.mxu0 %v1491
        %2002 = vmatpush1.bf16.msra.mxu0 %v1490
        %2003 = vmatprep.subr.bf16.mxu0 %v1499
        %2004 = vmatpush1.bf16.msra.mxu0 %v1498
        %2005 = vmatprep.subr.bf16.mxu0 %v1507
        %2006 = vmatpush1.bf16.msra.mxu0 %v1506
        %2007 = vmatprep.subr.bf16.mxu0 %v1515
        %2008 = vmatpush1.bf16.msra.mxu0 %v1514
        %2009 = vmatprep.subr.bf16.mxu0 %v1523
        %2010 = vmatpush1.bf16.msra.mxu0 %v1522
        %2011 = vmatprep.subr.bf16.mxu0 %v1531
        %2012 = vmatpush1.bf16.msra.mxu0 %v1530
        %2013 = vmatprep.subr.bf16.mxu0 %v1539
        %2014 = vmatpush1.bf16.msra.mxu0 %v1538
        %2015 = vmatprep.subr.bf16.mxu0 %v1547
        %2016 = vmatpush1.bf16.msra.mxu0 %v1546
        %2017 = vmatprep.subr.bf16.mxu0 %v1555
        %2018 = vmatpush1.bf16.msra.mxu0 %v1554
        %2019 = vmatprep.subr.bf16.mxu0 %v1563
        %2020 = vmatpush1.bf16.msra.mxu0 %v1562
        %2021 = vmatprep.subr.bf16.mxu0 %v1571
        %2022 = vmatpush1.bf16.msra.mxu0 %v1570
        %2023 = vmatprep.subr.bf16.mxu0 %v1579
        %2024 = vmatpush1.bf16.msra.mxu0 %v1578
        %2025 = vmatprep.subr.bf16.mxu0 %v1587
        %2026 = vmatpush1.bf16.msra.mxu0 %v1586
        %2027 = vmatprep.subr.bf16.mxu0 %v1595
        %2028 = vmatpush1.bf16.msra.mxu0 %v1594
        %2029 = vmatprep.subr.bf16.mxu0 %v1603
        %2030 = vmatpush1.bf16.msra.mxu0 %v1602
        %2031 = vmatprep.subr.bf16.mxu0 %v1611
        %2032 = vmatpush1.bf16.msra.mxu0 %v1610
        %2033 = vmatprep.mubr.bf16.mxu0 %v587
        %2034 = vmatmul.mubr.bf16.gmra.mrb[0].mxu0 %v586
        %v2035 = vpop.f32.mrb[0].mxu0
        %v2036 = vadd.f32 %v1993, %v2035
        %v2037 = vpop.f32.mrb[0].mxu0
        %v2038 = vadd.f32 %v1995, %v2037
        %v2039 = vpop.f32.mrb[0].mxu0
        %v2040 = vadd.f32 %v1997, %v2039
        %v2041 = vpop.f32.mrb[0].mxu0
        %v2042 = vadd.f32 %v1999, %v2041
        %2043 = vdwg.mxu0
        %2044 = vmatprep.subr.bf16.mxu0 %v1365
        %2045 = vmatpush1.bf16.msra.mxu0 %v1364
        %2046 = vmatprep.subr.bf16.mxu0 %v1373
        %2047 = vmatpush1.bf16.msra.mxu0 %v1372
        %2048 = vmatprep.subr.bf16.mxu0 %v1381
        %2049 = vmatpush1.bf16.msra.mxu0 %v1380
        %2050 = vmatprep.subr.bf16.mxu0 %v1389
        %2051 = vmatpush1.bf16.msra.mxu0 %v1388
        %2052 = vmatprep.subr.bf16.mxu0 %v1397
        %2053 = vmatpush1.bf16.msra.mxu0 %v1396
        %2054 = vmatprep.subr.bf16.mxu0 %v1405
        %2055 = vmatpush1.bf16.msra.mxu0 %v1404
        %2056 = vmatprep.subr.bf16.mxu0 %v1413
        %2057 = vmatpush1.bf16.msra.mxu0 %v1412
        %2058 = vmatprep.subr.bf16.mxu0 %v1421
        %2059 = vmatpush1.bf16.msra.mxu0 %v1420
        %2060 = vmatprep.subr.bf16.mxu0 %v1429
        %2061 = vmatpush1.bf16.msra.mxu0 %v1428
        %2062 = vmatprep.subr.bf16.mxu0 %v1437
        %2063 = vmatpush1.bf16.msra.mxu0 %v1436
        %2064 = vmatprep.subr.bf16.mxu0 %v1445
        %2065 = vmatpush1.bf16.msra.mxu0 %v1444
        %2066 = vmatprep.subr.bf16.mxu0 %v1453
        %2067 = vmatpush1.bf16.msra.mxu0 %v1452
        %2068 = vmatprep.subr.bf16.mxu0 %v1461
        %2069 = vmatpush1.bf16.msra.mxu0 %v1460
        %2070 = vmatprep.subr.bf16.mxu0 %v1469
        %2071 = vmatpush1.bf16.msra.mxu0 %v1468
        %2072 = vmatprep.subr.bf16.mxu0 %v1477
        %2073 = vmatpush1.bf16.msra.mxu0 %v1476
        %2074 = vmatprep.subr.bf16.mxu0 %v1485
        %2075 = vmatpush1.bf16.msra.mxu0 %v1484
        %2076 = vmatprep.mubr.bf16.mxu0 %v585
        %2077 = vmatmul.mubr.bf16.gmra.mrb[0].mxu0 %v584
        %v2078 = vpop.f32.mrb[0].mxu0
        %v2079 = vadd.f32 0.0, %v2078
        %v2080 = vpop.f32.mrb[0].mxu0
        %v2081 = vadd.f32 0.0, %v2080
        %v2082 = vpop.f32.mrb[0].mxu0
        %v2083 = vadd.f32 0.0, %v2082
        %v2084 = vpop.f32.mrb[0].mxu0
        %v2085 = vadd.f32 0.0, %v2084
        %2086 = vdwg.mxu0
        %2087 = vmatprep.subr.bf16.mxu0 %v1493
        %2088 = vmatpush1.bf16.msra.mxu0 %v1492
        %2089 = vmatprep.subr.bf16.mxu0 %v1501
        %2090 = vmatpush1.bf16.msra.mxu0 %v1500
        %2091 = vmatprep.subr.bf16.mxu0 %v1509
        %2092 = vmatpush1.bf16.msra.mxu0 %v1508
        %2093 = vmatprep.subr.bf16.mxu0 %v1517
        %2094 = vmatpush1.bf16.msra.mxu0 %v1516
        %2095 = vmatprep.subr.bf16.mxu0 %v1525
        %2096 = vmatpush1.bf16.msra.mxu0 %v1524
        %2097 = vmatprep.subr.bf16.mxu0 %v1533
        %2098 = vmatpush1.bf16.msra.mxu0 %v1532
        %2099 = vmatprep.subr.bf16.mxu0 %v1541
        %2100 = vmatpush1.bf16.msra.mxu0 %v1540
        %2101 = vmatprep.subr.bf16.mxu0 %v1549
        %2102 = vmatpush1.bf16.msra.mxu0 %v1548
        %2103 = vmatprep.subr.bf16.mxu0 %v1557
        %2104 = vmatpush1.bf16.msra.mxu0 %v1556
        %2105 = vmatprep.subr.bf16.mxu0 %v1565
        %2106 = vmatpush1.bf16.msra.mxu0 %v1564
        %2107 = vmatprep.subr.bf16.mxu0 %v1573
        %2108 = vmatpush1.bf16.msra.mxu0 %v1572
        %2109 = vmatprep.subr.bf16.mxu0 %v1581
        %2110 = vmatpush1.bf16.msra.mxu0 %v1580
        %2111 = vmatprep.subr.bf16.mxu0 %v1589
        %2112 = vmatpush1.bf16.msra.mxu0 %v1588
        %2113 = vmatprep.subr.bf16.mxu0 %v1597
        %2114 = vmatpush1.bf16.msra.mxu0 %v1596
        %2115 = vmatprep.subr.bf16.mxu0 %v1605
        %2116 = vmatpush1.bf16.msra.mxu0 %v1604
        %2117 = vmatprep.subr.bf16.mxu0 %v1613
        %2118 = vmatpush1.bf16.msra.mxu0 %v1612
        %2119 = vmatprep.mubr.bf16.mxu0 %v587
        %2120 = vmatmul.mubr.bf16.gmra.mrb[0].mxu0 %v586
        %v2121 = vpop.f32.mrb[0].mxu0
        %v2122 = vadd.f32 %v2079, %v2121
        %v2123 = vpop.f32.mrb[0].mxu0
        %v2124 = vadd.f32 %v2081, %v2123
        %v2125 = vpop.f32.mrb[0].mxu0
        %v2126 = vadd.f32 %v2083, %v2125
        %v2127 = vpop.f32.mrb[0].mxu0
        %v2128 = vadd.f32 %v2085, %v2127
        %2129 = vdwg.mxu0
        %2130 = vmatprep.subr.bf16.mxu0 %v1367
        %2131 = vmatpush1.bf16.msra.mxu0 %v1366
        %2132 = vmatprep.subr.bf16.mxu0 %v1375
        %2133 = vmatpush1.bf16.msra.mxu0 %v1374
        %2134 = vmatprep.subr.bf16.mxu0 %v1383
        %2135 = vmatpush1.bf16.msra.mxu0 %v1382
        %2136 = vmatprep.subr.bf16.mxu0 %v1391
        %2137 = vmatpush1.bf16.msra.mxu0 %v1390
        %2138 = vmatprep.subr.bf16.mxu0 %v1399
        %2139 = vmatpush1.bf16.msra.mxu0 %v1398
        %2140 = vmatprep.subr.bf16.mxu0 %v1407
        %2141 = vmatpush1.bf16.msra.mxu0 %v1406
        %2142 = vmatprep.subr.bf16.mxu0 %v1415
        %2143 = vmatpush1.bf16.msra.mxu0 %v1414
        %2144 = vmatprep.subr.bf16.mxu0 %v1423
        %2145 = vmatpush1.bf16.msra.mxu0 %v1422
        %2146 = vmatprep.subr.bf16.mxu0 %v1431
        %2147 = vmatpush1.bf16.msra.mxu0 %v1430
        %2148 = vmatprep.subr.bf16.mxu0 %v1439
        %2149 = vmatpush1.bf16.msra.mxu0 %v1438
        %2150 = vmatprep.subr.bf16.mxu0 %v1447
        %2151 = vmatpush1.bf16.msra.mxu0 %v1446
        %2152 = vmatprep.subr.bf16.mxu0 %v1455
        %2153 = vmatpush1.bf16.msra.mxu0 %v1454
        %2154 = vmatprep.subr.bf16.mxu0 %v1463
        %2155 = vmatpush1.bf16.msra.mxu0 %v1462
        %2156 = vmatprep.subr.bf16.mxu0 %v1471
        %2157 = vmatpush1.bf16.msra.mxu0 %v1470
        %2158 = vmatprep.subr.bf16.mxu0 %v1479
        %2159 = vmatpush1.bf16.msra.mxu0 %v1478
        %2160 = vmatprep.subr.bf16.mxu0 %v1487
        %2161 = vmatpush1.bf16.msra.mxu0 %v1486
        %2162 = vmatprep.mubr.bf16.mxu0 %v585
        %2163 = vmatmul.mubr.bf16.gmra.mrb[0].mxu0 %v584
        %v2164 = vpop.f32.mrb[0].mxu0
        %v2165 = vadd.f32 0.0, %v2164
        %v2166 = vpop.f32.mrb[0].mxu0
        %v2167 = vadd.f32 0.0, %v2166
        %v2168 = vpop.f32.mrb[0].mxu0
        %v2169 = vadd.f32 0.0, %v2168
        %v2170 = vpop.f32.mrb[0].mxu0
        %v2171 = vadd.f32 0.0, %v2170
        %2172 = vdwg.mxu0
        %2173 = vmatprep.subr.bf16.mxu0 %v1495
        %2174 = vmatpush1.bf16.msra.mxu0 %v1494
        %2175 = vmatprep.subr.bf16.mxu0 %v1503
        %2176 = vmatpush1.bf16.msra.mxu0 %v1502
        %2177 = vmatprep.subr.bf16.mxu0 %v1511
        %2178 = vmatpush1.bf16.msra.mxu0 %v1510
        %2179 = vmatprep.subr.bf16.mxu0 %v1519
        %2180 = vmatpush1.bf16.msra.mxu0 %v1518
        %2181 = vmatprep.subr.bf16.mxu0 %v1527
        %2182 = vmatpush1.bf16.msra.mxu0 %v1526
        %2183 = vmatprep.subr.bf16.mxu0 %v1535
        %2184 = vmatpush1.bf16.msra.mxu0 %v1534
        %2185 = vmatprep.subr.bf16.mxu0 %v1543
        %2186 = vmatpush1.bf16.msra.mxu0 %v1542
        %2187 = vmatprep.subr.bf16.mxu0 %v1551
        %2188 = vmatpush1.bf16.msra.mxu0 %v1550
        %2189 = vmatprep.subr.bf16.mxu0 %v1559
        %2190 = vmatpush1.bf16.msra.mxu0 %v1558
        %2191 = vmatprep.subr.bf16.mxu0 %v1567
        %2192 = vmatpush1.bf16.msra.mxu0 %v1566
        %2193 = vmatprep.subr.bf16.mxu0 %v1575
        %2194 = vmatpush1.bf16.msra.mxu0 %v1574
        %2195 = vmatprep.subr.bf16.mxu0 %v1583
        %2196 = vmatpush1.bf16.msra.mxu0 %v1582
        %2197 = vmatprep.subr.bf16.mxu0 %v1591
        %2198 = vmatpush1.bf16.msra.mxu0 %v1590
        %2199 = vmatprep.subr.bf16.mxu0 %v1599
        %2200 = vmatpush1.bf16.msra.mxu0 %v1598
        %2201 = vmatprep.subr.bf16.mxu0 %v1607
        %2202 = vmatpush1.bf16.msra.mxu0 %v1606
        %2203 = vmatprep.subr.bf16.mxu0 %v1615
        %2204 = vmatpush1.bf16.msra.mxu0 %v1614
        %2205 = vmatprep.mubr.bf16.mxu0 %v587
        %2206 = vmatmul.mubr.bf16.gmra.mrb[0].mxu0 %v586
        %v2207 = vpop.f32.mrb[0].mxu0
        %v2208 = vadd.f32 %v2165, %v2207
        %v2209 = vpop.f32.mrb[0].mxu0
        %v2210 = vadd.f32 %v2167, %v2209
        %v2211 = vpop.f32.mrb[0].mxu0
        %v2212 = vadd.f32 %v2169, %v2211
        %v2213 = vpop.f32.mrb[0].mxu0
        %v2214 = vadd.f32 %v2171, %v2213
        %2215 = vdwg.mxu0
        %v2216 = vld [vmem:[%s258] sm:$0xff]
        %v2217 = vld [vmem:[%s258 + $0x8] sm:$0xff]
        %v2218 = vld [vmem:[%s258 + $0x10] sm:$0xff]
        %v2219 = vld [vmem:[%s258 + $0x18] sm:$0xff]
        %v2220 = vld [vmem:[%s258 + $0x20] sm:$0xff]
        %v2221 = vld [vmem:[%s258 + $0x28] sm:$0xff]
        %v2222 = vld [vmem:[%s258 + $0x30] sm:$0xff]
        %v2223 = vld [vmem:[%s258 + $0x38] sm:$0xff]
        %v2224 = vld [vmem:[%s258 + $0x40] sm:$0xff]
        %v2225 = vld [vmem:[%s258 + $0x48] sm:$0xff]
        %v2226 = vld [vmem:[%s258 + $0x50] sm:$0xff]
        %v2227 = vld [vmem:[%s258 + $0x58] sm:$0xff]
        %v2228 = vld [vmem:[%s258 + $0x60] sm:$0xff]
        %v2229 = vld [vmem:[%s258 + $0x68] sm:$0xff]
        %v2230 = vld [vmem:[%s258 + $0x70] sm:$0xff]
        %v2231 = vld [vmem:[%s258 + $0x78] sm:$0xff]
        %v2232 = vld [vmem:[%s258 + $0x80] sm:$0xff]
        %v2233 = vld [vmem:[%s258 + $0x88] sm:$0xff]
        %v2234 = vld [vmem:[%s258 + $0x90] sm:$0xff]
        %v2235 = vld [vmem:[%s258 + $0x98] sm:$0xff]
        %v2236 = vld [vmem:[%s258 + $0xa0] sm:$0xff]
        %v2237 = vld [vmem:[%s258 + $0xa8] sm:$0xff]
        %v2238 = vld [vmem:[%s258 + $0xb0] sm:$0xff]
        %v2239 = vld [vmem:[%s258 + $0xb8] sm:$0xff]
        %v2240 = vld [vmem:[%s258 + $0xc0] sm:$0xff]
        %v2241 = vld [vmem:[%s258 + $0xc8] sm:$0xff]
        %v2242 = vld [vmem:[%s258 + $0xd0] sm:$0xff]
        %v2243 = vld [vmem:[%s258 + $0xd8] sm:$0xff]
        %v2244 = vld [vmem:[%s258 + $0xe0] sm:$0xff]
        %v2245 = vld [vmem:[%s258 + $0xe8] sm:$0xff]
        %v2246 = vld [vmem:[%s258 + $0xf0] sm:$0xff]
        %v2247 = vld [vmem:[%s258 + $0xf8] sm:$0xff]
        %v2248 = vld [vmem:[%s258 + $0x100] sm:$0xff]
        %v2249 = vld [vmem:[%s258 + $0x108] sm:$0xff]
        %v2250 = vld [vmem:[%s258 + $0x110] sm:$0xff]
        %v2251 = vld [vmem:[%s258 + $0x118] sm:$0xff]
        %v2252 = vld [vmem:[%s258 + $0x120] sm:$0xff]
        %v2253 = vld [vmem:[%s258 + $0x128] sm:$0xff]
        %v2254 = vld [vmem:[%s258 + $0x130] sm:$0xff]
        %v2255 = vld [vmem:[%s258 + $0x138] sm:$0xff]
        %v2256 = vld [vmem:[%s258 + $0x140] sm:$0xff]
        %v2257 = vld [vmem:[%s258 + $0x148] sm:$0xff]
        %v2258 = vld [vmem:[%s258 + $0x150] sm:$0xff]
        %v2259 = vld [vmem:[%s258 + $0x158] sm:$0xff]
        %v2260 = vld [vmem:[%s258 + $0x160] sm:$0xff]
        %v2261 = vld [vmem:[%s258 + $0x168] sm:$0xff]
        %v2262 = vld [vmem:[%s258 + $0x170] sm:$0xff]
        %v2263 = vld [vmem:[%s258 + $0x178] sm:$0xff]
        %v2264 = vld [vmem:[%s258 + $0x180] sm:$0xff]
        %v2265 = vld [vmem:[%s258 + $0x188] sm:$0xff]
        %v2266 = vld [vmem:[%s258 + $0x190] sm:$0xff]
        %v2267 = vld [vmem:[%s258 + $0x198] sm:$0xff]
        %v2268 = vld [vmem:[%s258 + $0x1a0] sm:$0xff]
        %v2269 = vld [vmem:[%s258 + $0x1a8] sm:$0xff]
        %v2270 = vld [vmem:[%s258 + $0x1b0] sm:$0xff]
        %v2271 = vld [vmem:[%s258 + $0x1b8] sm:$0xff]
        %v2272 = vld [vmem:[%s258 + $0x1c0] sm:$0xff]
        %v2273 = vld [vmem:[%s258 + $0x1c8] sm:$0xff]
        %v2274 = vld [vmem:[%s258 + $0x1d0] sm:$0xff]
        %v2275 = vld [vmem:[%s258 + $0x1d8] sm:$0xff]
        %v2276 = vld [vmem:[%s258 + $0x1e0] sm:$0xff]
        %v2277 = vld [vmem:[%s258 + $0x1e8] sm:$0xff]
        %v2278 = vld [vmem:[%s258 + $0x1f0] sm:$0xff]
        %v2279 = vld [vmem:[%s258 + $0x1f8] sm:$0xff]
        %v2280 = vld [vmem:[%s258 + $0x200] sm:$0xff]
        %v2281 = vld [vmem:[%s258 + $0x208] sm:$0xff]
        %v2282 = vld [vmem:[%s258 + $0x210] sm:$0xff]
        %v2283 = vld [vmem:[%s258 + $0x218] sm:$0xff]
        %v2284 = vld [vmem:[%s258 + $0x220] sm:$0xff]
        %v2285 = vld [vmem:[%s258 + $0x228] sm:$0xff]
        %v2286 = vld [vmem:[%s258 + $0x230] sm:$0xff]
        %v2287 = vld [vmem:[%s258 + $0x238] sm:$0xff]
        %v2288 = vld [vmem:[%s258 + $0x240] sm:$0xff]
        %v2289 = vld [vmem:[%s258 + $0x248] sm:$0xff]
        %v2290 = vld [vmem:[%s258 + $0x250] sm:$0xff]
        %v2291 = vld [vmem:[%s258 + $0x258] sm:$0xff]
        %v2292 = vld [vmem:[%s258 + $0x260] sm:$0xff]
        %v2293 = vld [vmem:[%s258 + $0x268] sm:$0xff]
        %v2294 = vld [vmem:[%s258 + $0x270] sm:$0xff]
        %v2295 = vld [vmem:[%s258 + $0x278] sm:$0xff]
        %v2296 = vld [vmem:[%s258 + $0x280] sm:$0xff]
        %v2297 = vld [vmem:[%s258 + $0x288] sm:$0xff]
        %v2298 = vld [vmem:[%s258 + $0x290] sm:$0xff]
        %v2299 = vld [vmem:[%s258 + $0x298] sm:$0xff]
        %v2300 = vld [vmem:[%s258 + $0x2a0] sm:$0xff]
        %v2301 = vld [vmem:[%s258 + $0x2a8] sm:$0xff]
        %v2302 = vld [vmem:[%s258 + $0x2b0] sm:$0xff]
        %v2303 = vld [vmem:[%s258 + $0x2b8] sm:$0xff]
        %v2304 = vld [vmem:[%s258 + $0x2c0] sm:$0xff]
        %v2305 = vld [vmem:[%s258 + $0x2c8] sm:$0xff]
        %v2306 = vld [vmem:[%s258 + $0x2d0] sm:$0xff]
        %v2307 = vld [vmem:[%s258 + $0x2d8] sm:$0xff]
        %v2308 = vld [vmem:[%s258 + $0x2e0] sm:$0xff]
        %v2309 = vld [vmem:[%s258 + $0x2e8] sm:$0xff]
        %v2310 = vld [vmem:[%s258 + $0x2f0] sm:$0xff]
        %v2311 = vld [vmem:[%s258 + $0x2f8] sm:$0xff]
        %v2312 = vld [vmem:[%s258 + $0x300] sm:$0xff]
        %v2313 = vld [vmem:[%s258 + $0x308] sm:$0xff]
        %v2314 = vld [vmem:[%s258 + $0x310] sm:$0xff]
        %v2315 = vld [vmem:[%s258 + $0x318] sm:$0xff]
        %v2316 = vld [vmem:[%s258 + $0x320] sm:$0xff]
        %v2317 = vld [vmem:[%s258 + $0x328] sm:$0xff]
        %v2318 = vld [vmem:[%s258 + $0x330] sm:$0xff]
        %v2319 = vld [vmem:[%s258 + $0x338] sm:$0xff]
        %v2320 = vld [vmem:[%s258 + $0x340] sm:$0xff]
        %v2321 = vld [vmem:[%s258 + $0x348] sm:$0xff]
        %v2322 = vld [vmem:[%s258 + $0x350] sm:$0xff]
        %v2323 = vld [vmem:[%s258 + $0x358] sm:$0xff]
        %v2324 = vld [vmem:[%s258 + $0x360] sm:$0xff]
        %v2325 = vld [vmem:[%s258 + $0x368] sm:$0xff]
        %v2326 = vld [vmem:[%s258 + $0x370] sm:$0xff]
        %v2327 = vld [vmem:[%s258 + $0x378] sm:$0xff]
        %v2328 = vld [vmem:[%s258 + $0x380] sm:$0xff]
        %v2329 = vld [vmem:[%s258 + $0x388] sm:$0xff]
        %v2330 = vld [vmem:[%s258 + $0x390] sm:$0xff]
        %v2331 = vld [vmem:[%s258 + $0x398] sm:$0xff]
        %v2332 = vld [vmem:[%s258 + $0x3a0] sm:$0xff]
        %v2333 = vld [vmem:[%s258 + $0x3a8] sm:$0xff]
        %v2334 = vld [vmem:[%s258 + $0x3b0] sm:$0xff]
        %v2335 = vld [vmem:[%s258 + $0x3b8] sm:$0xff]
        %v2336 = vld [vmem:[%s258 + $0x3c0] sm:$0xff]
        %v2337 = vld [vmem:[%s258 + $0x3c8] sm:$0xff]
        %v2338 = vld [vmem:[%s258 + $0x3d0] sm:$0xff]
        %v2339 = vld [vmem:[%s258 + $0x3d8] sm:$0xff]
        %v2340 = vld [vmem:[%s258 + $0x3e0] sm:$0xff]
        %v2341 = vld [vmem:[%s258 + $0x3e8] sm:$0xff]
        %v2342 = vld [vmem:[%s258 + $0x3f0] sm:$0xff]
        %v2343 = vld [vmem:[%s258 + $0x3f8] sm:$0xff]
        %v2344 = vld [vmem:[%s258 + $0x400] sm:$0xff]
        %v2345 = vld [vmem:[%s258 + $0x408] sm:$0xff]
        %v2346 = vld [vmem:[%s258 + $0x410] sm:$0xff]
        %v2347 = vld [vmem:[%s258 + $0x418] sm:$0xff]
        %v2348 = vld [vmem:[%s258 + $0x420] sm:$0xff]
        %v2349 = vld [vmem:[%s258 + $0x428] sm:$0xff]
        %v2350 = vld [vmem:[%s258 + $0x430] sm:$0xff]
        %v2351 = vld [vmem:[%s258 + $0x438] sm:$0xff]
        %v2352 = vld [vmem:[%s258 + $0x440] sm:$0xff]
        %v2353 = vld [vmem:[%s258 + $0x448] sm:$0xff]
        %v2354 = vld [vmem:[%s258 + $0x450] sm:$0xff]
        %v2355 = vld [vmem:[%s258 + $0x458] sm:$0xff]
        %v2356 = vld [vmem:[%s258 + $0x460] sm:$0xff]
        %v2357 = vld [vmem:[%s258 + $0x468] sm:$0xff]
        %v2358 = vld [vmem:[%s258 + $0x470] sm:$0xff]
        %v2359 = vld [vmem:[%s258 + $0x478] sm:$0xff]
        %v2360 = vld [vmem:[%s258 + $0x480] sm:$0xff]
        %v2361 = vld [vmem:[%s258 + $0x488] sm:$0xff]
        %v2362 = vld [vmem:[%s258 + $0x490] sm:$0xff]
        %v2363 = vld [vmem:[%s258 + $0x498] sm:$0xff]
        %v2364 = vld [vmem:[%s258 + $0x4a0] sm:$0xff]
        %v2365 = vld [vmem:[%s258 + $0x4a8] sm:$0xff]
        %v2366 = vld [vmem:[%s258 + $0x4b0] sm:$0xff]
        %v2367 = vld [vmem:[%s258 + $0x4b8] sm:$0xff]
        %v2368 = vld [vmem:[%s258 + $0x4c0] sm:$0xff]
        %v2369 = vld [vmem:[%s258 + $0x4c8] sm:$0xff]
        %v2370 = vld [vmem:[%s258 + $0x4d0] sm:$0xff]
        %v2371 = vld [vmem:[%s258 + $0x4d8] sm:$0xff]
        %v2372 = vld [vmem:[%s258 + $0x4e0] sm:$0xff]
        %v2373 = vld [vmem:[%s258 + $0x4e8] sm:$0xff]
        %v2374 = vld [vmem:[%s258 + $0x4f0] sm:$0xff]
        %v2375 = vld [vmem:[%s258 + $0x4f8] sm:$0xff]
        %v2376 = vld [vmem:[%s258 + $0x500] sm:$0xff]
        %v2377 = vld [vmem:[%s258 + $0x508] sm:$0xff]
        %v2378 = vld [vmem:[%s258 + $0x510] sm:$0xff]
        %v2379 = vld [vmem:[%s258 + $0x518] sm:$0xff]
        %v2380 = vld [vmem:[%s258 + $0x520] sm:$0xff]
        %v2381 = vld [vmem:[%s258 + $0x528] sm:$0xff]
        %v2382 = vld [vmem:[%s258 + $0x530] sm:$0xff]
        %v2383 = vld [vmem:[%s258 + $0x538] sm:$0xff]
        %v2384 = vld [vmem:[%s258 + $0x540] sm:$0xff]
        %v2385 = vld [vmem:[%s258 + $0x548] sm:$0xff]
        %v2386 = vld [vmem:[%s258 + $0x550] sm:$0xff]
        %v2387 = vld [vmem:[%s258 + $0x558] sm:$0xff]
        %v2388 = vld [vmem:[%s258 + $0x560] sm:$0xff]
        %v2389 = vld [vmem:[%s258 + $0x568] sm:$0xff]
        %v2390 = vld [vmem:[%s258 + $0x570] sm:$0xff]
        %v2391 = vld [vmem:[%s258 + $0x578] sm:$0xff]
        %v2392 = vld [vmem:[%s258 + $0x580] sm:$0xff]
        %v2393 = vld [vmem:[%s258 + $0x588] sm:$0xff]
        %v2394 = vld [vmem:[%s258 + $0x590] sm:$0xff]
        %v2395 = vld [vmem:[%s258 + $0x598] sm:$0xff]
        %v2396 = vld [vmem:[%s258 + $0x5a0] sm:$0xff]
        %v2397 = vld [vmem:[%s258 + $0x5a8] sm:$0xff]
        %v2398 = vld [vmem:[%s258 + $0x5b0] sm:$0xff]
        %v2399 = vld [vmem:[%s258 + $0x5b8] sm:$0xff]
        %v2400 = vld [vmem:[%s258 + $0x5c0] sm:$0xff]
        %v2401 = vld [vmem:[%s258 + $0x5c8] sm:$0xff]
        %v2402 = vld [vmem:[%s258 + $0x5d0] sm:$0xff]
        %v2403 = vld [vmem:[%s258 + $0x5d8] sm:$0xff]
        %v2404 = vld [vmem:[%s258 + $0x5e0] sm:$0xff]
        %v2405 = vld [vmem:[%s258 + $0x5e8] sm:$0xff]
        %v2406 = vld [vmem:[%s258 + $0x5f0] sm:$0xff]
        %v2407 = vld [vmem:[%s258 + $0x5f8] sm:$0xff]
        %v2408 = vld [vmem:[%s258 + $0x600] sm:$0xff]
        %v2409 = vld [vmem:[%s258 + $0x608] sm:$0xff]
        %v2410 = vld [vmem:[%s258 + $0x610] sm:$0xff]
        %v2411 = vld [vmem:[%s258 + $0x618] sm:$0xff]
        %v2412 = vld [vmem:[%s258 + $0x620] sm:$0xff]
        %v2413 = vld [vmem:[%s258 + $0x628] sm:$0xff]
        %v2414 = vld [vmem:[%s258 + $0x630] sm:$0xff]
        %v2415 = vld [vmem:[%s258 + $0x638] sm:$0xff]
        %v2416 = vld [vmem:[%s258 + $0x640] sm:$0xff]
        %v2417 = vld [vmem:[%s258 + $0x648] sm:$0xff]
        %v2418 = vld [vmem:[%s258 + $0x650] sm:$0xff]
        %v2419 = vld [vmem:[%s258 + $0x658] sm:$0xff]
        %v2420 = vld [vmem:[%s258 + $0x660] sm:$0xff]
        %v2421 = vld [vmem:[%s258 + $0x668] sm:$0xff]
        %v2422 = vld [vmem:[%s258 + $0x670] sm:$0xff]
        %v2423 = vld [vmem:[%s258 + $0x678] sm:$0xff]
        %v2424 = vld [vmem:[%s258 + $0x680] sm:$0xff]
        %v2425 = vld [vmem:[%s258 + $0x688] sm:$0xff]
        %v2426 = vld [vmem:[%s258 + $0x690] sm:$0xff]
        %v2427 = vld [vmem:[%s258 + $0x698] sm:$0xff]
        %v2428 = vld [vmem:[%s258 + $0x6a0] sm:$0xff]
        %v2429 = vld [vmem:[%s258 + $0x6a8] sm:$0xff]
        %v2430 = vld [vmem:[%s258 + $0x6b0] sm:$0xff]
        %v2431 = vld [vmem:[%s258 + $0x6b8] sm:$0xff]
        %v2432 = vld [vmem:[%s258 + $0x6c0] sm:$0xff]
        %v2433 = vld [vmem:[%s258 + $0x6c8] sm:$0xff]
        %v2434 = vld [vmem:[%s258 + $0x6d0] sm:$0xff]
        %v2435 = vld [vmem:[%s258 + $0x6d8] sm:$0xff]
        %v2436 = vld [vmem:[%s258 + $0x6e0] sm:$0xff]
        %v2437 = vld [vmem:[%s258 + $0x6e8] sm:$0xff]
        %v2438 = vld [vmem:[%s258 + $0x6f0] sm:$0xff]
        %v2439 = vld [vmem:[%s258 + $0x6f8] sm:$0xff]
        %v2440 = vld [vmem:[%s258 + $0x700] sm:$0xff]
        %v2441 = vld [vmem:[%s258 + $0x708] sm:$0xff]
        %v2442 = vld [vmem:[%s258 + $0x710] sm:$0xff]
        %v2443 = vld [vmem:[%s258 + $0x718] sm:$0xff]
        %v2444 = vld [vmem:[%s258 + $0x720] sm:$0xff]
        %v2445 = vld [vmem:[%s258 + $0x728] sm:$0xff]
        %v2446 = vld [vmem:[%s258 + $0x730] sm:$0xff]
        %v2447 = vld [vmem:[%s258 + $0x738] sm:$0xff]
        %v2448 = vld [vmem:[%s258 + $0x740] sm:$0xff]
        %v2449 = vld [vmem:[%s258 + $0x748] sm:$0xff]
        %v2450 = vld [vmem:[%s258 + $0x750] sm:$0xff]
        %v2451 = vld [vmem:[%s258 + $0x758] sm:$0xff]
        %v2452 = vld [vmem:[%s258 + $0x760] sm:$0xff]
        %v2453 = vld [vmem:[%s258 + $0x768] sm:$0xff]
        %v2454 = vld [vmem:[%s258 + $0x770] sm:$0xff]
        %v2455 = vld [vmem:[%s258 + $0x778] sm:$0xff]
        %v2456 = vld [vmem:[%s258 + $0x780] sm:$0xff]
        %v2457 = vld [vmem:[%s258 + $0x788] sm:$0xff]
        %v2458 = vld [vmem:[%s258 + $0x790] sm:$0xff]
        %v2459 = vld [vmem:[%s258 + $0x798] sm:$0xff]
        %v2460 = vld [vmem:[%s258 + $0x7a0] sm:$0xff]
        %v2461 = vld [vmem:[%s258 + $0x7a8] sm:$0xff]
        %v2462 = vld [vmem:[%s258 + $0x7b0] sm:$0xff]
        %v2463 = vld [vmem:[%s258 + $0x7b8] sm:$0xff]
        %v2464 = vld [vmem:[%s258 + $0x7c0] sm:$0xff]
        %v2465 = vld [vmem:[%s258 + $0x7c8] sm:$0xff]
        %v2466 = vld [vmem:[%s258 + $0x7d0] sm:$0xff]
        %v2467 = vld [vmem:[%s258 + $0x7d8] sm:$0xff]
        %v2468 = vld [vmem:[%s258 + $0x7e0] sm:$0xff]
        %v2469 = vld [vmem:[%s258 + $0x7e8] sm:$0xff]
        %v2470 = vld [vmem:[%s258 + $0x7f0] sm:$0xff]
        %v2471 = vld [vmem:[%s258 + $0x7f8] sm:$0xff]
        %v2728 = vunpack.c.l.b16 %v2216
        %v2729 = vunpack.c.h.b16 %v2216
        %v2730 = vunpack.c.l.b16 %v2217
        %v2731 = vunpack.c.h.b16 %v2217
        %v2732 = vunpack.c.l.b16 %v2218
        %v2733 = vunpack.c.h.b16 %v2218
        %v2734 = vunpack.c.l.b16 %v2219
        %v2735 = vunpack.c.h.b16 %v2219
        %v2736 = vunpack.c.l.b16 %v2220
        %v2737 = vunpack.c.h.b16 %v2220
        %v2738 = vunpack.c.l.b16 %v2221
        %v2739 = vunpack.c.h.b16 %v2221
        %v2740 = vunpack.c.l.b16 %v2222
        %v2741 = vunpack.c.h.b16 %v2222
        %v2742 = vunpack.c.l.b16 %v2223
        %v2743 = vunpack.c.h.b16 %v2223
        %v2744 = vunpack.c.l.b16 %v2224
        %v2745 = vunpack.c.h.b16 %v2224
        %v2746 = vunpack.c.l.b16 %v2225
        %v2747 = vunpack.c.h.b16 %v2225
        %v2748 = vunpack.c.l.b16 %v2226
        %v2749 = vunpack.c.h.b16 %v2226
        %v2750 = vunpack.c.l.b16 %v2227
        %v2751 = vunpack.c.h.b16 %v2227
        %v2752 = vunpack.c.l.b16 %v2228
        %v2753 = vunpack.c.h.b16 %v2228
        %v2754 = vunpack.c.l.b16 %v2229
        %v2755 = vunpack.c.h.b16 %v2229
        %v2756 = vunpack.c.l.b16 %v2230
        %v2757 = vunpack.c.h.b16 %v2230
        %v2758 = vunpack.c.l.b16 %v2231
        %v2759 = vunpack.c.h.b16 %v2231
        %v2760 = vunpack.c.l.b16 %v2232
        %v2761 = vunpack.c.h.b16 %v2232
        %v2762 = vunpack.c.l.b16 %v2233
        %v2763 = vunpack.c.h.b16 %v2233
        %v2764 = vunpack.c.l.b16 %v2234
        %v2765 = vunpack.c.h.b16 %v2234
        %v2766 = vunpack.c.l.b16 %v2235
        %v2767 = vunpack.c.h.b16 %v2235
        %v2768 = vunpack.c.l.b16 %v2236
        %v2769 = vunpack.c.h.b16 %v2236
        %v2770 = vunpack.c.l.b16 %v2237
        %v2771 = vunpack.c.h.b16 %v2237
        %v2772 = vunpack.c.l.b16 %v2238
        %v2773 = vunpack.c.h.b16 %v2238
        %v2774 = vunpack.c.l.b16 %v2239
        %v2775 = vunpack.c.h.b16 %v2239
        %v2776 = vunpack.c.l.b16 %v2240
        %v2777 = vunpack.c.h.b16 %v2240
        %v2778 = vunpack.c.l.b16 %v2241
        %v2779 = vunpack.c.h.b16 %v2241
        %v2780 = vunpack.c.l.b16 %v2242
        %v2781 = vunpack.c.h.b16 %v2242
        %v2782 = vunpack.c.l.b16 %v2243
        %v2783 = vunpack.c.h.b16 %v2243
        %v2784 = vunpack.c.l.b16 %v2244
        %v2785 = vunpack.c.h.b16 %v2244
        %v2786 = vunpack.c.l.b16 %v2245
        %v2787 = vunpack.c.h.b16 %v2245
        %v2788 = vunpack.c.l.b16 %v2246
        %v2789 = vunpack.c.h.b16 %v2246
        %v2790 = vunpack.c.l.b16 %v2247
        %v2791 = vunpack.c.h.b16 %v2247
        %v2792 = vunpack.c.l.b16 %v2248
        %v2793 = vunpack.c.h.b16 %v2248
        %v2794 = vunpack.c.l.b16 %v2249
        %v2795 = vunpack.c.h.b16 %v2249
        %v2796 = vunpack.c.l.b16 %v2250
        %v2797 = vunpack.c.h.b16 %v2250
        %v2798 = vunpack.c.l.b16 %v2251
        %v2799 = vunpack.c.h.b16 %v2251
        %v2800 = vunpack.c.l.b16 %v2252
        %v2801 = vunpack.c.h.b16 %v2252
        %v2802 = vunpack.c.l.b16 %v2253
        %v2803 = vunpack.c.h.b16 %v2253
        %v2804 = vunpack.c.l.b16 %v2254
        %v2805 = vunpack.c.h.b16 %v2254
        %v2806 = vunpack.c.l.b16 %v2255
        %v2807 = vunpack.c.h.b16 %v2255
        %v2808 = vunpack.c.l.b16 %v2256
        %v2809 = vunpack.c.h.b16 %v2256
        %v2810 = vunpack.c.l.b16 %v2257
        %v2811 = vunpack.c.h.b16 %v2257
        %v2812 = vunpack.c.l.b16 %v2258
        %v2813 = vunpack.c.h.b16 %v2258
        %v2814 = vunpack.c.l.b16 %v2259
        %v2815 = vunpack.c.h.b16 %v2259
        %v2816 = vunpack.c.l.b16 %v2260
        %v2817 = vunpack.c.h.b16 %v2260
        %v2818 = vunpack.c.l.b16 %v2261
        %v2819 = vunpack.c.h.b16 %v2261
        %v2820 = vunpack.c.l.b16 %v2262
        %v2821 = vunpack.c.h.b16 %v2262
        %v2822 = vunpack.c.l.b16 %v2263
        %v2823 = vunpack.c.h.b16 %v2263
        %v2824 = vunpack.c.l.b16 %v2264
        %v2825 = vunpack.c.h.b16 %v2264
        %v2826 = vunpack.c.l.b16 %v2265
        %v2827 = vunpack.c.h.b16 %v2265
        %v2828 = vunpack.c.l.b16 %v2266
        %v2829 = vunpack.c.h.b16 %v2266
        %v2830 = vunpack.c.l.b16 %v2267
        %v2831 = vunpack.c.h.b16 %v2267
        %v2832 = vunpack.c.l.b16 %v2268
        %v2833 = vunpack.c.h.b16 %v2268
        %v2834 = vunpack.c.l.b16 %v2269
        %v2835 = vunpack.c.h.b16 %v2269
        %v2836 = vunpack.c.l.b16 %v2270
        %v2837 = vunpack.c.h.b16 %v2270
        %v2838 = vunpack.c.l.b16 %v2271
        %v2839 = vunpack.c.h.b16 %v2271
        %v2840 = vunpack.c.l.b16 %v2272
        %v2841 = vunpack.c.h.b16 %v2272
        %v2842 = vunpack.c.l.b16 %v2273
        %v2843 = vunpack.c.h.b16 %v2273
        %v2844 = vunpack.c.l.b16 %v2274
        %v2845 = vunpack.c.h.b16 %v2274
        %v2846 = vunpack.c.l.b16 %v2275
        %v2847 = vunpack.c.h.b16 %v2275
        %v2848 = vunpack.c.l.b16 %v2276
        %v2849 = vunpack.c.h.b16 %v2276
        %v2850 = vunpack.c.l.b16 %v2277
        %v2851 = vunpack.c.h.b16 %v2277
        %v2852 = vunpack.c.l.b16 %v2278
        %v2853 = vunpack.c.h.b16 %v2278
        %v2854 = vunpack.c.l.b16 %v2279
        %v2855 = vunpack.c.h.b16 %v2279
        %v2856 = vunpack.c.l.b16 %v2280
        %v2857 = vunpack.c.h.b16 %v2280
        %v2858 = vunpack.c.l.b16 %v2281
        %v2859 = vunpack.c.h.b16 %v2281
        %v2860 = vunpack.c.l.b16 %v2282
        %v2861 = vunpack.c.h.b16 %v2282
        %v2862 = vunpack.c.l.b16 %v2283
        %v2863 = vunpack.c.h.b16 %v2283
        %v2864 = vunpack.c.l.b16 %v2284
        %v2865 = vunpack.c.h.b16 %v2284
        %v2866 = vunpack.c.l.b16 %v2285
        %v2867 = vunpack.c.h.b16 %v2285
        %v2868 = vunpack.c.l.b16 %v2286
        %v2869 = vunpack.c.h.b16 %v2286
        %v2870 = vunpack.c.l.b16 %v2287
        %v2871 = vunpack.c.h.b16 %v2287
        %v2872 = vunpack.c.l.b16 %v2288
        %v2873 = vunpack.c.h.b16 %v2288
        %v2874 = vunpack.c.l.b16 %v2289
        %v2875 = vunpack.c.h.b16 %v2289
        %v2876 = vunpack.c.l.b16 %v2290
        %v2877 = vunpack.c.h.b16 %v2290
        %v2878 = vunpack.c.l.b16 %v2291
        %v2879 = vunpack.c.h.b16 %v2291
        %v2880 = vunpack.c.l.b16 %v2292
        %v2881 = vunpack.c.h.b16 %v2292
        %v2882 = vunpack.c.l.b16 %v2293
        %v2883 = vunpack.c.h.b16 %v2293
        %v2884 = vunpack.c.l.b16 %v2294
        %v2885 = vunpack.c.h.b16 %v2294
        %v2886 = vunpack.c.l.b16 %v2295
        %v2887 = vunpack.c.h.b16 %v2295
        %v2888 = vunpack.c.l.b16 %v2296
        %v2889 = vunpack.c.h.b16 %v2296
        %v2890 = vunpack.c.l.b16 %v2297
        %v2891 = vunpack.c.h.b16 %v2297
        %v2892 = vunpack.c.l.b16 %v2298
        %v2893 = vunpack.c.h.b16 %v2298
        %v2894 = vunpack.c.l.b16 %v2299
        %v2895 = vunpack.c.h.b16 %v2299
        %v2896 = vunpack.c.l.b16 %v2300
        %v2897 = vunpack.c.h.b16 %v2300
        %v2898 = vunpack.c.l.b16 %v2301
        %v2899 = vunpack.c.h.b16 %v2301
        %v2900 = vunpack.c.l.b16 %v2302
        %v2901 = vunpack.c.h.b16 %v2302
        %v2902 = vunpack.c.l.b16 %v2303
        %v2903 = vunpack.c.h.b16 %v2303
        %v2904 = vunpack.c.l.b16 %v2304
        %v2905 = vunpack.c.h.b16 %v2304
        %v2906 = vunpack.c.l.b16 %v2305
        %v2907 = vunpack.c.h.b16 %v2305
        %v2908 = vunpack.c.l.b16 %v2306
        %v2909 = vunpack.c.h.b16 %v2306
        %v2910 = vunpack.c.l.b16 %v2307
        %v2911 = vunpack.c.h.b16 %v2307
        %v2912 = vunpack.c.l.b16 %v2308
        %v2913 = vunpack.c.h.b16 %v2308
        %v2914 = vunpack.c.l.b16 %v2309
        %v2915 = vunpack.c.h.b16 %v2309
        %v2916 = vunpack.c.l.b16 %v2310
        %v2917 = vunpack.c.h.b16 %v2310
        %v2918 = vunpack.c.l.b16 %v2311
        %v2919 = vunpack.c.h.b16 %v2311
        %v2920 = vunpack.c.l.b16 %v2312
        %v2921 = vunpack.c.h.b16 %v2312
        %v2922 = vunpack.c.l.b16 %v2313
        %v2923 = vunpack.c.h.b16 %v2313
        %v2924 = vunpack.c.l.b16 %v2314
        %v2925 = vunpack.c.h.b16 %v2314
        %v2926 = vunpack.c.l.b16 %v2315
        %v2927 = vunpack.c.h.b16 %v2315
        %v2928 = vunpack.c.l.b16 %v2316
        %v2929 = vunpack.c.h.b16 %v2316
        %v2930 = vunpack.c.l.b16 %v2317
        %v2931 = vunpack.c.h.b16 %v2317
        %v2932 = vunpack.c.l.b16 %v2318
        %v2933 = vunpack.c.h.b16 %v2318
        %v2934 = vunpack.c.l.b16 %v2319
        %v2935 = vunpack.c.h.b16 %v2319
        %v2936 = vunpack.c.l.b16 %v2320
        %v2937 = vunpack.c.h.b16 %v2320
        %v2938 = vunpack.c.l.b16 %v2321
        %v2939 = vunpack.c.h.b16 %v2321
        %v2940 = vunpack.c.l.b16 %v2322
        %v2941 = vunpack.c.h.b16 %v2322
        %v2942 = vunpack.c.l.b16 %v2323
        %v2943 = vunpack.c.h.b16 %v2323
        %v2944 = vunpack.c.l.b16 %v2324
        %v2945 = vunpack.c.h.b16 %v2324
        %v2946 = vunpack.c.l.b16 %v2325
        %v2947 = vunpack.c.h.b16 %v2325
        %v2948 = vunpack.c.l.b16 %v2326
        %v2949 = vunpack.c.h.b16 %v2326
        %v2950 = vunpack.c.l.b16 %v2327
        %v2951 = vunpack.c.h.b16 %v2327
        %v2952 = vunpack.c.l.b16 %v2328
        %v2953 = vunpack.c.h.b16 %v2328
        %v2954 = vunpack.c.l.b16 %v2329
        %v2955 = vunpack.c.h.b16 %v2329
        %v2956 = vunpack.c.l.b16 %v2330
        %v2957 = vunpack.c.h.b16 %v2330
        %v2958 = vunpack.c.l.b16 %v2331
        %v2959 = vunpack.c.h.b16 %v2331
        %v2960 = vunpack.c.l.b16 %v2332
        %v2961 = vunpack.c.h.b16 %v2332
        %v2962 = vunpack.c.l.b16 %v2333
        %v2963 = vunpack.c.h.b16 %v2333
        %v2964 = vunpack.c.l.b16 %v2334
        %v2965 = vunpack.c.h.b16 %v2334
        %v2966 = vunpack.c.l.b16 %v2335
        %v2967 = vunpack.c.h.b16 %v2335
        %v2968 = vunpack.c.l.b16 %v2336
        %v2969 = vunpack.c.h.b16 %v2336
        %v2970 = vunpack.c.l.b16 %v2337
        %v2971 = vunpack.c.h.b16 %v2337
        %v2972 = vunpack.c.l.b16 %v2338
        %v2973 = vunpack.c.h.b16 %v2338
        %v2974 = vunpack.c.l.b16 %v2339
        %v2975 = vunpack.c.h.b16 %v2339
        %v2976 = vunpack.c.l.b16 %v2340
        %v2977 = vunpack.c.h.b16 %v2340
        %v2978 = vunpack.c.l.b16 %v2341
        %v2979 = vunpack.c.h.b16 %v2341
        %v2980 = vunpack.c.l.b16 %v2342
        %v2981 = vunpack.c.h.b16 %v2342
        %v2982 = vunpack.c.l.b16 %v2343
        %v2983 = vunpack.c.h.b16 %v2343
        %v2984 = vunpack.c.l.b16 %v2344
        %v2985 = vunpack.c.h.b16 %v2344
        %v2986 = vunpack.c.l.b16 %v2345
        %v2987 = vunpack.c.h.b16 %v2345
        %v2988 = vunpack.c.l.b16 %v2346
        %v2989 = vunpack.c.h.b16 %v2346
        %v2990 = vunpack.c.l.b16 %v2347
        %v2991 = vunpack.c.h.b16 %v2347
        %v2992 = vunpack.c.l.b16 %v2348
        %v2993 = vunpack.c.h.b16 %v2348
        %v2994 = vunpack.c.l.b16 %v2349
        %v2995 = vunpack.c.h.b16 %v2349
        %v2996 = vunpack.c.l.b16 %v2350
        %v2997 = vunpack.c.h.b16 %v2350
        %v2998 = vunpack.c.l.b16 %v2351
        %v2999 = vunpack.c.h.b16 %v2351
        %v3000 = vunpack.c.l.b16 %v2352
        %v3001 = vunpack.c.h.b16 %v2352
        %v3002 = vunpack.c.l.b16 %v2353
        %v3003 = vunpack.c.h.b16 %v2353
        %v3004 = vunpack.c.l.b16 %v2354
        %v3005 = vunpack.c.h.b16 %v2354
        %v3006 = vunpack.c.l.b16 %v2355
        %v3007 = vunpack.c.h.b16 %v2355
        %v3008 = vunpack.c.l.b16 %v2356
        %v3009 = vunpack.c.h.b16 %v2356
        %v3010 = vunpack.c.l.b16 %v2357
        %v3011 = vunpack.c.h.b16 %v2357
        %v3012 = vunpack.c.l.b16 %v2358
        %v3013 = vunpack.c.h.b16 %v2358
        %v3014 = vunpack.c.l.b16 %v2359
        %v3015 = vunpack.c.h.b16 %v2359
        %v3016 = vunpack.c.l.b16 %v2360
        %v3017 = vunpack.c.h.b16 %v2360
        %v3018 = vunpack.c.l.b16 %v2361
        %v3019 = vunpack.c.h.b16 %v2361
        %v3020 = vunpack.c.l.b16 %v2362
        %v3021 = vunpack.c.h.b16 %v2362
        %v3022 = vunpack.c.l.b16 %v2363
        %v3023 = vunpack.c.h.b16 %v2363
        %v3024 = vunpack.c.l.b16 %v2364
        %v3025 = vunpack.c.h.b16 %v2364
        %v3026 = vunpack.c.l.b16 %v2365
        %v3027 = vunpack.c.h.b16 %v2365
        %v3028 = vunpack.c.l.b16 %v2366
        %v3029 = vunpack.c.h.b16 %v2366
        %v3030 = vunpack.c.l.b16 %v2367
        %v3031 = vunpack.c.h.b16 %v2367
        %v3032 = vunpack.c.l.b16 %v2368
        %v3033 = vunpack.c.h.b16 %v2368
        %v3034 = vunpack.c.l.b16 %v2369
        %v3035 = vunpack.c.h.b16 %v2369
        %v3036 = vunpack.c.l.b16 %v2370
        %v3037 = vunpack.c.h.b16 %v2370
        %v3038 = vunpack.c.l.b16 %v2371
        %v3039 = vunpack.c.h.b16 %v2371
        %v3040 = vunpack.c.l.b16 %v2372
        %v3041 = vunpack.c.h.b16 %v2372
        %v3042 = vunpack.c.l.b16 %v2373
        %v3043 = vunpack.c.h.b16 %v2373
        %v3044 = vunpack.c.l.b16 %v2374
        %v3045 = vunpack.c.h.b16 %v2374
        %v3046 = vunpack.c.l.b16 %v2375
        %v3047 = vunpack.c.h.b16 %v2375
        %v3048 = vunpack.c.l.b16 %v2376
        %v3049 = vunpack.c.h.b16 %v2376
        %v3050 = vunpack.c.l.b16 %v2377
        %v3051 = vunpack.c.h.b16 %v2377
        %v3052 = vunpack.c.l.b16 %v2378
        %v3053 = vunpack.c.h.b16 %v2378
        %v3054 = vunpack.c.l.b16 %v2379
        %v3055 = vunpack.c.h.b16 %v2379
        %v3056 = vunpack.c.l.b16 %v2380
        %v3057 = vunpack.c.h.b16 %v2380
        %v3058 = vunpack.c.l.b16 %v2381
        %v3059 = vunpack.c.h.b16 %v2381
        %v3060 = vunpack.c.l.b16 %v2382
        %v3061 = vunpack.c.h.b16 %v2382
        %v3062 = vunpack.c.l.b16 %v2383
        %v3063 = vunpack.c.h.b16 %v2383
        %v3064 = vunpack.c.l.b16 %v2384
        %v3065 = vunpack.c.h.b16 %v2384
        %v3066 = vunpack.c.l.b16 %v2385
        %v3067 = vunpack.c.h.b16 %v2385
        %v3068 = vunpack.c.l.b16 %v2386
        %v3069 = vunpack.c.h.b16 %v2386
        %v3070 = vunpack.c.l.b16 %v2387
        %v3071 = vunpack.c.h.b16 %v2387
        %v3072 = vunpack.c.l.b16 %v2388
        %v3073 = vunpack.c.h.b16 %v2388
        %v3074 = vunpack.c.l.b16 %v2389
        %v3075 = vunpack.c.h.b16 %v2389
        %v3076 = vunpack.c.l.b16 %v2390
        %v3077 = vunpack.c.h.b16 %v2390
        %v3078 = vunpack.c.l.b16 %v2391
        %v3079 = vunpack.c.h.b16 %v2391
        %v3080 = vunpack.c.l.b16 %v2392
        %v3081 = vunpack.c.h.b16 %v2392
        %v3082 = vunpack.c.l.b16 %v2393
        %v3083 = vunpack.c.h.b16 %v2393
        %v3084 = vunpack.c.l.b16 %v2394
        %v3085 = vunpack.c.h.b16 %v2394
        %v3086 = vunpack.c.l.b16 %v2395
        %v3087 = vunpack.c.h.b16 %v2395
        %v3088 = vunpack.c.l.b16 %v2396
        %v3089 = vunpack.c.h.b16 %v2396
        %v3090 = vunpack.c.l.b16 %v2397
        %v3091 = vunpack.c.h.b16 %v2397
        %v3092 = vunpack.c.l.b16 %v2398
        %v3093 = vunpack.c.h.b16 %v2398
        %v3094 = vunpack.c.l.b16 %v2399
        %v3095 = vunpack.c.h.b16 %v2399
        %v3096 = vunpack.c.l.b16 %v2400
        %v3097 = vunpack.c.h.b16 %v2400
        %v3098 = vunpack.c.l.b16 %v2401
        %v3099 = vunpack.c.h.b16 %v2401
        %v3100 = vunpack.c.l.b16 %v2402
        %v3101 = vunpack.c.h.b16 %v2402
        %v3102 = vunpack.c.l.b16 %v2403
        %v3103 = vunpack.c.h.b16 %v2403
        %v3104 = vunpack.c.l.b16 %v2404
        %v3105 = vunpack.c.h.b16 %v2404
        %v3106 = vunpack.c.l.b16 %v2405
        %v3107 = vunpack.c.h.b16 %v2405
        %v3108 = vunpack.c.l.b16 %v2406
        %v3109 = vunpack.c.h.b16 %v2406
        %v3110 = vunpack.c.l.b16 %v2407
        %v3111 = vunpack.c.h.b16 %v2407
        %v3112 = vunpack.c.l.b16 %v2408
        %v3113 = vunpack.c.h.b16 %v2408
        %v3114 = vunpack.c.l.b16 %v2409
        %v3115 = vunpack.c.h.b16 %v2409
        %v3116 = vunpack.c.l.b16 %v2410
        %v3117 = vunpack.c.h.b16 %v2410
        %v3118 = vunpack.c.l.b16 %v2411
        %v3119 = vunpack.c.h.b16 %v2411
        %v3120 = vunpack.c.l.b16 %v2412
        %v3121 = vunpack.c.h.b16 %v2412
        %v3122 = vunpack.c.l.b16 %v2413
        %v3123 = vunpack.c.h.b16 %v2413
        %v3124 = vunpack.c.l.b16 %v2414
        %v3125 = vunpack.c.h.b16 %v2414
        %v3126 = vunpack.c.l.b16 %v2415
        %v3127 = vunpack.c.h.b16 %v2415
        %v3128 = vunpack.c.l.b16 %v2416
        %v3129 = vunpack.c.h.b16 %v2416
        %v3130 = vunpack.c.l.b16 %v2417
        %v3131 = vunpack.c.h.b16 %v2417
        %v3132 = vunpack.c.l.b16 %v2418
        %v3133 = vunpack.c.h.b16 %v2418
        %v3134 = vunpack.c.l.b16 %v2419
        %v3135 = vunpack.c.h.b16 %v2419
        %v3136 = vunpack.c.l.b16 %v2420
        %v3137 = vunpack.c.h.b16 %v2420
        %v3138 = vunpack.c.l.b16 %v2421
        %v3139 = vunpack.c.h.b16 %v2421
        %v3140 = vunpack.c.l.b16 %v2422
        %v3141 = vunpack.c.h.b16 %v2422
        %v3142 = vunpack.c.l.b16 %v2423
        %v3143 = vunpack.c.h.b16 %v2423
        %v3144 = vunpack.c.l.b16 %v2424
        %v3145 = vunpack.c.h.b16 %v2424
        %v3146 = vunpack.c.l.b16 %v2425
        %v3147 = vunpack.c.h.b16 %v2425
        %v3148 = vunpack.c.l.b16 %v2426
        %v3149 = vunpack.c.h.b16 %v2426
        %v3150 = vunpack.c.l.b16 %v2427
        %v3151 = vunpack.c.h.b16 %v2427
        %v3152 = vunpack.c.l.b16 %v2428
        %v3153 = vunpack.c.h.b16 %v2428
        %v3154 = vunpack.c.l.b16 %v2429
        %v3155 = vunpack.c.h.b16 %v2429
        %v3156 = vunpack.c.l.b16 %v2430
        %v3157 = vunpack.c.h.b16 %v2430
        %v3158 = vunpack.c.l.b16 %v2431
        %v3159 = vunpack.c.h.b16 %v2431
        %v3160 = vunpack.c.l.b16 %v2432
        %v3161 = vunpack.c.h.b16 %v2432
        %v3162 = vunpack.c.l.b16 %v2433
        %v3163 = vunpack.c.h.b16 %v2433
        %v3164 = vunpack.c.l.b16 %v2434
        %v3165 = vunpack.c.h.b16 %v2434
        %v3166 = vunpack.c.l.b16 %v2435
        %v3167 = vunpack.c.h.b16 %v2435
        %v3168 = vunpack.c.l.b16 %v2436
        %v3169 = vunpack.c.h.b16 %v2436
        %v3170 = vunpack.c.l.b16 %v2437
        %v3171 = vunpack.c.h.b16 %v2437
        %v3172 = vunpack.c.l.b16 %v2438
        %v3173 = vunpack.c.h.b16 %v2438
        %v3174 = vunpack.c.l.b16 %v2439
        %v3175 = vunpack.c.h.b16 %v2439
        %v3176 = vunpack.c.l.b16 %v2440
        %v3177 = vunpack.c.h.b16 %v2440
        %v3178 = vunpack.c.l.b16 %v2441
        %v3179 = vunpack.c.h.b16 %v2441
        %v3180 = vunpack.c.l.b16 %v2442
        %v3181 = vunpack.c.h.b16 %v2442
        %v3182 = vunpack.c.l.b16 %v2443
        %v3183 = vunpack.c.h.b16 %v2443
        %v3184 = vunpack.c.l.b16 %v2444
        %v3185 = vunpack.c.h.b16 %v2444
        %v3186 = vunpack.c.l.b16 %v2445
        %v3187 = vunpack.c.h.b16 %v2445
        %v3188 = vunpack.c.l.b16 %v2446
        %v3189 = vunpack.c.h.b16 %v2446
        %v3190 = vunpack.c.l.b16 %v2447
        %v3191 = vunpack.c.h.b16 %v2447
        %v3192 = vunpack.c.l.b16 %v2448
        %v3193 = vunpack.c.h.b16 %v2448
        %v3194 = vunpack.c.l.b16 %v2449
        %v3195 = vunpack.c.h.b16 %v2449
        %v3196 = vunpack.c.l.b16 %v2450
        %v3197 = vunpack.c.h.b16 %v2450
        %v3198 = vunpack.c.l.b16 %v2451
        %v3199 = vunpack.c.h.b16 %v2451
        %v3200 = vunpack.c.l.b16 %v2452
        %v3201 = vunpack.c.h.b16 %v2452
        %v3202 = vunpack.c.l.b16 %v2453
        %v3203 = vunpack.c.h.b16 %v2453
        %v3204 = vunpack.c.l.b16 %v2454
        %v3205 = vunpack.c.h.b16 %v2454
        %v3206 = vunpack.c.l.b16 %v2455
        %v3207 = vunpack.c.h.b16 %v2455
        %v3208 = vunpack.c.l.b16 %v2456
        %v3209 = vunpack.c.h.b16 %v2456
        %v3210 = vunpack.c.l.b16 %v2457
        %v3211 = vunpack.c.h.b16 %v2457
        %v3212 = vunpack.c.l.b16 %v2458
        %v3213 = vunpack.c.h.b16 %v2458
        %v3214 = vunpack.c.l.b16 %v2459
        %v3215 = vunpack.c.h.b16 %v2459
        %v3216 = vunpack.c.l.b16 %v2460
        %v3217 = vunpack.c.h.b16 %v2460
        %v3218 = vunpack.c.l.b16 %v2461
        %v3219 = vunpack.c.h.b16 %v2461
        %v3220 = vunpack.c.l.b16 %v2462
        %v3221 = vunpack.c.h.b16 %v2462
        %v3222 = vunpack.c.l.b16 %v2463
        %v3223 = vunpack.c.h.b16 %v2463
        %v3224 = vunpack.c.l.b16 %v2464
        %v3225 = vunpack.c.h.b16 %v2464
        %v3226 = vunpack.c.l.b16 %v2465
        %v3227 = vunpack.c.h.b16 %v2465
        %v3228 = vunpack.c.l.b16 %v2466
        %v3229 = vunpack.c.h.b16 %v2466
        %v3230 = vunpack.c.l.b16 %v2467
        %v3231 = vunpack.c.h.b16 %v2467
        %v3232 = vunpack.c.l.b16 %v2468
        %v3233 = vunpack.c.h.b16 %v2468
        %v3234 = vunpack.c.l.b16 %v2469
        %v3235 = vunpack.c.h.b16 %v2469
        %v3236 = vunpack.c.l.b16 %v2470
        %v3237 = vunpack.c.h.b16 %v2470
        %v3238 = vunpack.c.l.b16 %v2471
        %v3239 = vunpack.c.h.b16 %v2471
        %v3240 = vpack.c.b16 %v2736, %v2728
        %v3241 = vpack.c.b16 %v2737, %v2729
        %v3242 = vpack.c.b16 %v2738, %v2730
        %v3243 = vpack.c.b16 %v2739, %v2731
        %v3244 = vpack.c.b16 %v2740, %v2732
        %v3245 = vpack.c.b16 %v2741, %v2733
        %v3246 = vpack.c.b16 %v2742, %v2734
        %v3247 = vpack.c.b16 %v2743, %v2735
        %v3248 = vpack.c.b16 %v2752, %v2744
        %v3249 = vpack.c.b16 %v2753, %v2745
        %v3250 = vpack.c.b16 %v2754, %v2746
        %v3251 = vpack.c.b16 %v2755, %v2747
        %v3252 = vpack.c.b16 %v2756, %v2748
        %v3253 = vpack.c.b16 %v2757, %v2749
        %v3254 = vpack.c.b16 %v2758, %v2750
        %v3255 = vpack.c.b16 %v2759, %v2751
        %v3256 = vpack.c.b16 %v2768, %v2760
        %v3257 = vpack.c.b16 %v2769, %v2761
        %v3258 = vpack.c.b16 %v2770, %v2762
        %v3259 = vpack.c.b16 %v2771, %v2763
        %v3260 = vpack.c.b16 %v2772, %v2764
        %v3261 = vpack.c.b16 %v2773, %v2765
        %v3262 = vpack.c.b16 %v2774, %v2766
        %v3263 = vpack.c.b16 %v2775, %v2767
        %v3264 = vpack.c.b16 %v2784, %v2776
        %v3265 = vpack.c.b16 %v2785, %v2777
        %v3266 = vpack.c.b16 %v2786, %v2778
        %v3267 = vpack.c.b16 %v2787, %v2779
        %v3268 = vpack.c.b16 %v2788, %v2780
        %v3269 = vpack.c.b16 %v2789, %v2781
        %v3270 = vpack.c.b16 %v2790, %v2782
        %v3271 = vpack.c.b16 %v2791, %v2783
        %v3272 = vpack.c.b16 %v2800, %v2792
        %v3273 = vpack.c.b16 %v2801, %v2793
        %v3274 = vpack.c.b16 %v2802, %v2794
        %v3275 = vpack.c.b16 %v2803, %v2795
        %v3276 = vpack.c.b16 %v2804, %v2796
        %v3277 = vpack.c.b16 %v2805, %v2797
        %v3278 = vpack.c.b16 %v2806, %v2798
        %v3279 = vpack.c.b16 %v2807, %v2799
        %v3280 = vpack.c.b16 %v2816, %v2808
        %v3281 = vpack.c.b16 %v2817, %v2809
        %v3282 = vpack.c.b16 %v2818, %v2810
        %v3283 = vpack.c.b16 %v2819, %v2811
        %v3284 = vpack.c.b16 %v2820, %v2812
        %v3285 = vpack.c.b16 %v2821, %v2813
        %v3286 = vpack.c.b16 %v2822, %v2814
        %v3287 = vpack.c.b16 %v2823, %v2815
        %v3288 = vpack.c.b16 %v2832, %v2824
        %v3289 = vpack.c.b16 %v2833, %v2825
        %v3290 = vpack.c.b16 %v2834, %v2826
        %v3291 = vpack.c.b16 %v2835, %v2827
        %v3292 = vpack.c.b16 %v2836, %v2828
        %v3293 = vpack.c.b16 %v2837, %v2829
        %v3294 = vpack.c.b16 %v2838, %v2830
        %v3295 = vpack.c.b16 %v2839, %v2831
        %v3296 = vpack.c.b16 %v2848, %v2840
        %v3297 = vpack.c.b16 %v2849, %v2841
        %v3298 = vpack.c.b16 %v2850, %v2842
        %v3299 = vpack.c.b16 %v2851, %v2843
        %v3300 = vpack.c.b16 %v2852, %v2844
        %v3301 = vpack.c.b16 %v2853, %v2845
        %v3302 = vpack.c.b16 %v2854, %v2846
        %v3303 = vpack.c.b16 %v2855, %v2847
        %v3304 = vpack.c.b16 %v2864, %v2856
        %v3305 = vpack.c.b16 %v2865, %v2857
        %v3306 = vpack.c.b16 %v2866, %v2858
        %v3307 = vpack.c.b16 %v2867, %v2859
        %v3308 = vpack.c.b16 %v2868, %v2860
        %v3309 = vpack.c.b16 %v2869, %v2861
        %v3310 = vpack.c.b16 %v2870, %v2862
        %v3311 = vpack.c.b16 %v2871, %v2863
        %v3312 = vpack.c.b16 %v2880, %v2872
        %v3313 = vpack.c.b16 %v2881, %v2873
        %v3314 = vpack.c.b16 %v2882, %v2874
        %v3315 = vpack.c.b16 %v2883, %v2875
        %v3316 = vpack.c.b16 %v2884, %v2876
        %v3317 = vpack.c.b16 %v2885, %v2877
        %v3318 = vpack.c.b16 %v2886, %v2878
        %v3319 = vpack.c.b16 %v2887, %v2879
        %v3320 = vpack.c.b16 %v2896, %v2888
        %v3321 = vpack.c.b16 %v2897, %v2889
        %v3322 = vpack.c.b16 %v2898, %v2890
        %v3323 = vpack.c.b16 %v2899, %v2891
        %v3324 = vpack.c.b16 %v2900, %v2892
        %v3325 = vpack.c.b16 %v2901, %v2893
        %v3326 = vpack.c.b16 %v2902, %v2894
        %v3327 = vpack.c.b16 %v2903, %v2895
        %v3328 = vpack.c.b16 %v2912, %v2904
        %v3329 = vpack.c.b16 %v2913, %v2905
        %v3330 = vpack.c.b16 %v2914, %v2906
        %v3331 = vpack.c.b16 %v2915, %v2907
        %v3332 = vpack.c.b16 %v2916, %v2908
        %v3333 = vpack.c.b16 %v2917, %v2909
        %v3334 = vpack.c.b16 %v2918, %v2910
        %v3335 = vpack.c.b16 %v2919, %v2911
        %v3336 = vpack.c.b16 %v2928, %v2920
        %v3337 = vpack.c.b16 %v2929, %v2921
        %v3338 = vpack.c.b16 %v2930, %v2922
        %v3339 = vpack.c.b16 %v2931, %v2923
        %v3340 = vpack.c.b16 %v2932, %v2924
        %v3341 = vpack.c.b16 %v2933, %v2925
        %v3342 = vpack.c.b16 %v2934, %v2926
        %v3343 = vpack.c.b16 %v2935, %v2927
        %v3344 = vpack.c.b16 %v2944, %v2936
        %v3345 = vpack.c.b16 %v2945, %v2937
        %v3346 = vpack.c.b16 %v2946, %v2938
        %v3347 = vpack.c.b16 %v2947, %v2939
        %v3348 = vpack.c.b16 %v2948, %v2940
        %v3349 = vpack.c.b16 %v2949, %v2941
        %v3350 = vpack.c.b16 %v2950, %v2942
        %v3351 = vpack.c.b16 %v2951, %v2943
        %v3352 = vpack.c.b16 %v2960, %v2952
        %v3353 = vpack.c.b16 %v2961, %v2953
        %v3354 = vpack.c.b16 %v2962, %v2954
        %v3355 = vpack.c.b16 %v2963, %v2955
        %v3356 = vpack.c.b16 %v2964, %v2956
        %v3357 = vpack.c.b16 %v2965, %v2957
        %v3358 = vpack.c.b16 %v2966, %v2958
        %v3359 = vpack.c.b16 %v2967, %v2959
        %v3360 = vpack.c.b16 %v2976, %v2968
        %v3361 = vpack.c.b16 %v2977, %v2969
        %v3362 = vpack.c.b16 %v2978, %v2970
        %v3363 = vpack.c.b16 %v2979, %v2971
        %v3364 = vpack.c.b16 %v2980, %v2972
        %v3365 = vpack.c.b16 %v2981, %v2973
        %v3366 = vpack.c.b16 %v2982, %v2974
        %v3367 = vpack.c.b16 %v2983, %v2975
        %v3368 = vpack.c.b16 %v2992, %v2984
        %v3369 = vpack.c.b16 %v2993, %v2985
        %v3370 = vpack.c.b16 %v2994, %v2986
        %v3371 = vpack.c.b16 %v2995, %v2987
        %v3372 = vpack.c.b16 %v2996, %v2988
        %v3373 = vpack.c.b16 %v2997, %v2989
        %v3374 = vpack.c.b16 %v2998, %v2990
        %v3375 = vpack.c.b16 %v2999, %v2991
        %v3376 = vpack.c.b16 %v3008, %v3000
        %v3377 = vpack.c.b16 %v3009, %v3001
        %v3378 = vpack.c.b16 %v3010, %v3002
        %v3379 = vpack.c.b16 %v3011, %v3003
        %v3380 = vpack.c.b16 %v3012, %v3004
        %v3381 = vpack.c.b16 %v3013, %v3005
        %v3382 = vpack.c.b16 %v3014, %v3006
        %v3383 = vpack.c.b16 %v3015, %v3007
        %v3384 = vpack.c.b16 %v3024, %v3016
        %v3385 = vpack.c.b16 %v3025, %v3017
        %v3386 = vpack.c.b16 %v3026, %v3018
        %v3387 = vpack.c.b16 %v3027, %v3019
        %v3388 = vpack.c.b16 %v3028, %v3020
        %v3389 = vpack.c.b16 %v3029, %v3021
        %v3390 = vpack.c.b16 %v3030, %v3022
        %v3391 = vpack.c.b16 %v3031, %v3023
        %v3392 = vpack.c.b16 %v3040, %v3032
        %v3393 = vpack.c.b16 %v3041, %v3033
        %v3394 = vpack.c.b16 %v3042, %v3034
        %v3395 = vpack.c.b16 %v3043, %v3035
        %v3396 = vpack.c.b16 %v3044, %v3036
        %v3397 = vpack.c.b16 %v3045, %v3037
        %v3398 = vpack.c.b16 %v3046, %v3038
        %v3399 = vpack.c.b16 %v3047, %v3039
        %v3400 = vpack.c.b16 %v3056, %v3048
        %v3401 = vpack.c.b16 %v3057, %v3049
        %v3402 = vpack.c.b16 %v3058, %v3050
        %v3403 = vpack.c.b16 %v3059, %v3051
        %v3404 = vpack.c.b16 %v3060, %v3052
        %v3405 = vpack.c.b16 %v3061, %v3053
        %v3406 = vpack.c.b16 %v3062, %v3054
        %v3407 = vpack.c.b16 %v3063, %v3055
        %v3408 = vpack.c.b16 %v3072, %v3064
        %v3409 = vpack.c.b16 %v3073, %v3065
        %v3410 = vpack.c.b16 %v3074, %v3066
        %v3411 = vpack.c.b16 %v3075, %v3067
        %v3412 = vpack.c.b16 %v3076, %v3068
        %v3413 = vpack.c.b16 %v3077, %v3069
        %v3414 = vpack.c.b16 %v3078, %v3070
        %v3415 = vpack.c.b16 %v3079, %v3071
        %v3416 = vpack.c.b16 %v3088, %v3080
        %v3417 = vpack.c.b16 %v3089, %v3081
        %v3418 = vpack.c.b16 %v3090, %v3082
        %v3419 = vpack.c.b16 %v3091, %v3083
        %v3420 = vpack.c.b16 %v3092, %v3084
        %v3421 = vpack.c.b16 %v3093, %v3085
        %v3422 = vpack.c.b16 %v3094, %v3086
        %v3423 = vpack.c.b16 %v3095, %v3087
        %v3424 = vpack.c.b16 %v3104, %v3096
        %v3425 = vpack.c.b16 %v3105, %v3097
        %v3426 = vpack.c.b16 %v3106, %v3098
        %v3427 = vpack.c.b16 %v3107, %v3099
        %v3428 = vpack.c.b16 %v3108, %v3100
        %v3429 = vpack.c.b16 %v3109, %v3101
        %v3430 = vpack.c.b16 %v3110, %v3102
        %v3431 = vpack.c.b16 %v3111, %v3103
        %v3432 = vpack.c.b16 %v3120, %v3112
        %v3433 = vpack.c.b16 %v3121, %v3113
        %v3434 = vpack.c.b16 %v3122, %v3114
        %v3435 = vpack.c.b16 %v3123, %v3115
        %v3436 = vpack.c.b16 %v3124, %v3116
        %v3437 = vpack.c.b16 %v3125, %v3117
        %v3438 = vpack.c.b16 %v3126, %v3118
        %v3439 = vpack.c.b16 %v3127, %v3119
        %v3440 = vpack.c.b16 %v3136, %v3128
        %v3441 = vpack.c.b16 %v3137, %v3129
        %v3442 = vpack.c.b16 %v3138, %v3130
        %v3443 = vpack.c.b16 %v3139, %v3131
        %v3444 = vpack.c.b16 %v3140, %v3132
        %v3445 = vpack.c.b16 %v3141, %v3133
        %v3446 = vpack.c.b16 %v3142, %v3134
        %v3447 = vpack.c.b16 %v3143, %v3135
        %v3448 = vpack.c.b16 %v3152, %v3144
        %v3449 = vpack.c.b16 %v3153, %v3145
        %v3450 = vpack.c.b16 %v3154, %v3146
        %v3451 = vpack.c.b16 %v3155, %v3147
        %v3452 = vpack.c.b16 %v3156, %v3148
        %v3453 = vpack.c.b16 %v3157, %v3149
        %v3454 = vpack.c.b16 %v3158, %v3150
        %v3455 = vpack.c.b16 %v3159, %v3151
        %v3456 = vpack.c.b16 %v3168, %v3160
        %v3457 = vpack.c.b16 %v3169, %v3161
        %v3458 = vpack.c.b16 %v3170, %v3162
        %v3459 = vpack.c.b16 %v3171, %v3163
        %v3460 = vpack.c.b16 %v3172, %v3164
        %v3461 = vpack.c.b16 %v3173, %v3165
        %v3462 = vpack.c.b16 %v3174, %v3166
        %v3463 = vpack.c.b16 %v3175, %v3167
        %v3464 = vpack.c.b16 %v3184, %v3176
        %v3465 = vpack.c.b16 %v3185, %v3177
        %v3466 = vpack.c.b16 %v3186, %v3178
        %v3467 = vpack.c.b16 %v3187, %v3179
        %v3468 = vpack.c.b16 %v3188, %v3180
        %v3469 = vpack.c.b16 %v3189, %v3181
        %v3470 = vpack.c.b16 %v3190, %v3182
        %v3471 = vpack.c.b16 %v3191, %v3183
        %v3472 = vpack.c.b16 %v3200, %v3192
        %v3473 = vpack.c.b16 %v3201, %v3193
        %v3474 = vpack.c.b16 %v3202, %v3194
        %v3475 = vpack.c.b16 %v3203, %v3195
        %v3476 = vpack.c.b16 %v3204, %v3196
        %v3477 = vpack.c.b16 %v3205, %v3197
        %v3478 = vpack.c.b16 %v3206, %v3198
        %v3479 = vpack.c.b16 %v3207, %v3199
        %v3480 = vpack.c.b16 %v3216, %v3208
        %v3481 = vpack.c.b16 %v3217, %v3209
        %v3482 = vpack.c.b16 %v3218, %v3210
        %v3483 = vpack.c.b16 %v3219, %v3211
        %v3484 = vpack.c.b16 %v3220, %v3212
        %v3485 = vpack.c.b16 %v3221, %v3213
        %v3486 = vpack.c.b16 %v3222, %v3214
        %v3487 = vpack.c.b16 %v3223, %v3215
        %v3488 = vpack.c.b16 %v3232, %v3224
        %v3489 = vpack.c.b16 %v3233, %v3225
        %v3490 = vpack.c.b16 %v3234, %v3226
        %v3491 = vpack.c.b16 %v3235, %v3227
        %v3492 = vpack.c.b16 %v3236, %v3228
        %v3493 = vpack.c.b16 %v3237, %v3229
        %v3494 = vpack.c.b16 %v3238, %v3230
        %v3495 = vpack.c.b16 %v3239, %v3231
        %3752 = vmatprep.subr.bf16.mxu0 %v3241
        %3753 = vmatpush1.bf16.msra.mxu0 %v3240
        %3754 = vmatprep.subr.bf16.mxu0 %v3249
        %3755 = vmatpush1.bf16.msra.mxu0 %v3248
        %3756 = vmatprep.subr.bf16.mxu0 %v3257
        %3757 = vmatpush1.bf16.msra.mxu0 %v3256
        %3758 = vmatprep.subr.bf16.mxu0 %v3265
        %3759 = vmatpush1.bf16.msra.mxu0 %v3264
        %3760 = vmatprep.subr.bf16.mxu0 %v3273
        %3761 = vmatpush1.bf16.msra.mxu0 %v3272
        %3762 = vmatprep.subr.bf16.mxu0 %v3281
        %3763 = vmatpush1.bf16.msra.mxu0 %v3280
        %3764 = vmatprep.subr.bf16.mxu0 %v3289
        %3765 = vmatpush1.bf16.msra.mxu0 %v3288
        %3766 = vmatprep.subr.bf16.mxu0 %v3297
        %3767 = vmatpush1.bf16.msra.mxu0 %v3296
        %3768 = vmatprep.subr.bf16.mxu0 %v3305
        %3769 = vmatpush1.bf16.msra.mxu0 %v3304
        %3770 = vmatprep.subr.bf16.mxu0 %v3313
        %3771 = vmatpush1.bf16.msra.mxu0 %v3312
        %3772 = vmatprep.subr.bf16.mxu0 %v3321
        %3773 = vmatpush1.bf16.msra.mxu0 %v3320
        %3774 = vmatprep.subr.bf16.mxu0 %v3329
        %3775 = vmatpush1.bf16.msra.mxu0 %v3328
        %3776 = vmatprep.subr.bf16.mxu0 %v3337
        %3777 = vmatpush1.bf16.msra.mxu0 %v3336
        %3778 = vmatprep.subr.bf16.mxu0 %v3345
        %3779 = vmatpush1.bf16.msra.mxu0 %v3344
        %3780 = vmatprep.subr.bf16.mxu0 %v3353
        %3781 = vmatpush1.bf16.msra.mxu0 %v3352
        %3782 = vmatprep.subr.bf16.mxu0 %v3361
        %3783 = vmatpush1.bf16.msra.mxu0 %v3360
        %3784 = vmatprep.mubr.bf16.mxu0 %v585
        %3785 = vmatmul.mubr.bf16.gmra.mrb[0].mxu0 %v584
        %v3786 = vpop.f32.mrb[0].mxu0
        %v3787 = vadd.f32 0.0, %v3786
        %v3788 = vpop.f32.mrb[0].mxu0
        %v3789 = vadd.f32 0.0, %v3788
        %v3790 = vpop.f32.mrb[0].mxu0
        %v3791 = vadd.f32 0.0, %v3790
        %v3792 = vpop.f32.mrb[0].mxu0
        %v3793 = vadd.f32 0.0, %v3792
        %3794 = vdwg.mxu0
        %3795 = vmatprep.subr.bf16.mxu0 %v3369
        %3796 = vmatpush1.bf16.msra.mxu0 %v3368
        %3797 = vmatprep.subr.bf16.mxu0 %v3377
        %3798 = vmatpush1.bf16.msra.mxu0 %v3376
        %3799 = vmatprep.subr.bf16.mxu0 %v3385
        %3800 = vmatpush1.bf16.msra.mxu0 %v3384
        %3801 = vmatprep.subr.bf16.mxu0 %v3393
        %3802 = vmatpush1.bf16.msra.mxu0 %v3392
        %3803 = vmatprep.subr.bf16.mxu0 %v3401
        %3804 = vmatpush1.bf16.msra.mxu0 %v3400
        %3805 = vmatprep.subr.bf16.mxu0 %v3409
        %3806 = vmatpush1.bf16.msra.mxu0 %v3408
        %3807 = vmatprep.subr.bf16.mxu0 %v3417
        %3808 = vmatpush1.bf16.msra.mxu0 %v3416
        %3809 = vmatprep.subr.bf16.mxu0 %v3425
        %3810 = vmatpush1.bf16.msra.mxu0 %v3424
        %3811 = vmatprep.subr.bf16.mxu0 %v3433
        %3812 = vmatpush1.bf16.msra.mxu0 %v3432
        %3813 = vmatprep.subr.bf16.mxu0 %v3441
        %3814 = vmatpush1.bf16.msra.mxu0 %v3440
        %3815 = vmatprep.subr.bf16.mxu0 %v3449
        %3816 = vmatpush1.bf16.msra.mxu0 %v3448
        %3817 = vmatprep.subr.bf16.mxu0 %v3457
        %3818 = vmatpush1.bf16.msra.mxu0 %v3456
        %3819 = vmatprep.subr.bf16.mxu0 %v3465
        %3820 = vmatpush1.bf16.msra.mxu0 %v3464
        %3821 = vmatprep.subr.bf16.mxu0 %v3473
        %3822 = vmatpush1.bf16.msra.mxu0 %v3472
        %3823 = vmatprep.subr.bf16.mxu0 %v3481
        %3824 = vmatpush1.bf16.msra.mxu0 %v3480
        %3825 = vmatprep.subr.bf16.mxu0 %v3489
        %3826 = vmatpush1.bf16.msra.mxu0 %v3488
        %3827 = vmatprep.mubr.bf16.mxu0 %v587
        %3828 = vmatmul.mubr.bf16.gmra.mrb[0].mxu0 %v586
        %v3829 = vpop.f32.mrb[0].mxu0
        %v3830 = vadd.f32 %v3787, %v3829
        %v3831 = vpop.f32.mrb[0].mxu0
        %v3832 = vadd.f32 %v3789, %v3831
        %v3833 = vpop.f32.mrb[0].mxu0
        %v3834 = vadd.f32 %v3791, %v3833
        %v3835 = vpop.f32.mrb[0].mxu0
        %v3836 = vadd.f32 %v3793, %v3835
        %3837 = vdwg.mxu0
        %3838 = vmatprep.subr.bf16.mxu0 %v3243
        %3839 = vmatpush1.bf16.msra.mxu0 %v3242
        %3840 = vmatprep.subr.bf16.mxu0 %v3251
        %3841 = vmatpush1.bf16.msra.mxu0 %v3250
        %3842 = vmatprep.subr.bf16.mxu0 %v3259
        %3843 = vmatpush1.bf16.msra.mxu0 %v3258
        %3844 = vmatprep.subr.bf16.mxu0 %v3267
        %3845 = vmatpush1.bf16.msra.mxu0 %v3266
        %3846 = vmatprep.subr.bf16.mxu0 %v3275
        %3847 = vmatpush1.bf16.msra.mxu0 %v3274
        %3848 = vmatprep.subr.bf16.mxu0 %v3283
        %3849 = vmatpush1.bf16.msra.mxu0 %v3282
        %3850 = vmatprep.subr.bf16.mxu0 %v3291
        %3851 = vmatpush1.bf16.msra.mxu0 %v3290
        %3852 = vmatprep.subr.bf16.mxu0 %v3299
        %3853 = vmatpush1.bf16.msra.mxu0 %v3298
        %3854 = vmatprep.subr.bf16.mxu0 %v3307
        %3855 = vmatpush1.bf16.msra.mxu0 %v3306
        %3856 = vmatprep.subr.bf16.mxu0 %v3315
        %3857 = vmatpush1.bf16.msra.mxu0 %v3314
        %3858 = vmatprep.subr.bf16.mxu0 %v3323
        %3859 = vmatpush1.bf16.msra.mxu0 %v3322
        %3860 = vmatprep.subr.bf16.mxu0 %v3331
        %3861 = vmatpush1.bf16.msra.mxu0 %v3330
        %3862 = vmatprep.subr.bf16.mxu0 %v3339
        %3863 = vmatpush1.bf16.msra.mxu0 %v3338
        %3864 = vmatprep.subr.bf16.mxu0 %v3347
        %3865 = vmatpush1.bf16.msra.mxu0 %v3346
        %3866 = vmatprep.subr.bf16.mxu0 %v3355
        %3867 = vmatpush1.bf16.msra.mxu0 %v3354
        %3868 = vmatprep.subr.bf16.mxu0 %v3363
        %3869 = vmatpush1.bf16.msra.mxu0 %v3362
        %3870 = vmatprep.mubr.bf16.mxu0 %v585
        %3871 = vmatmul.mubr.bf16.gmra.mrb[0].mxu0 %v584
        %v3872 = vpop.f32.mrb[0].mxu0
        %v3873 = vadd.f32 0.0, %v3872
        %v3874 = vpop.f32.mrb[0].mxu0
        %v3875 = vadd.f32 0.0, %v3874
        %v3876 = vpop.f32.mrb[0].mxu0
        %v3877 = vadd.f32 0.0, %v3876
        %v3878 = vpop.f32.mrb[0].mxu0
        %v3879 = vadd.f32 0.0, %v3878
        %3880 = vdwg.mxu0
        %3881 = vmatprep.subr.bf16.mxu0 %v3371
        %3882 = vmatpush1.bf16.msra.mxu0 %v3370
        %3883 = vmatprep.subr.bf16.mxu0 %v3379
        %3884 = vmatpush1.bf16.msra.mxu0 %v3378
        %3885 = vmatprep.subr.bf16.mxu0 %v3387
        %3886 = vmatpush1.bf16.msra.mxu0 %v3386
        %3887 = vmatprep.subr.bf16.mxu0 %v3395
        %3888 = vmatpush1.bf16.msra.mxu0 %v3394
        %3889 = vmatprep.subr.bf16.mxu0 %v3403
        %3890 = vmatpush1.bf16.msra.mxu0 %v3402
        %3891 = vmatprep.subr.bf16.mxu0 %v3411
        %3892 = vmatpush1.bf16.msra.mxu0 %v3410
        %3893 = vmatprep.subr.bf16.mxu0 %v3419
        %3894 = vmatpush1.bf16.msra.mxu0 %v3418
        %3895 = vmatprep.subr.bf16.mxu0 %v3427
        %3896 = vmatpush1.bf16.msra.mxu0 %v3426
        %3897 = vmatprep.subr.bf16.mxu0 %v3435
        %3898 = vmatpush1.bf16.msra.mxu0 %v3434
        %3899 = vmatprep.subr.bf16.mxu0 %v3443
        %3900 = vmatpush1.bf16.msra.mxu0 %v3442
        %3901 = vmatprep.subr.bf16.mxu0 %v3451
        %3902 = vmatpush1.bf16.msra.mxu0 %v3450
        %3903 = vmatprep.subr.bf16.mxu0 %v3459
        %3904 = vmatpush1.bf16.msra.mxu0 %v3458
        %3905 = vmatprep.subr.bf16.mxu0 %v3467
        %3906 = vmatpush1.bf16.msra.mxu0 %v3466
        %3907 = vmatprep.subr.bf16.mxu0 %v3475
        %3908 = vmatpush1.bf16.msra.mxu0 %v3474
        %3909 = vmatprep.subr.bf16.mxu0 %v3483
        %3910 = vmatpush1.bf16.msra.mxu0 %v3482
        %3911 = vmatprep.subr.bf16.mxu0 %v3491
        %3912 = vmatpush1.bf16.msra.mxu0 %v3490
        %3913 = vmatprep.mubr.bf16.mxu0 %v587
        %3914 = vmatmul.mubr.bf16.gmra.mrb[0].mxu0 %v586
        %v3915 = vpop.f32.mrb[0].mxu0
        %v3916 = vadd.f32 %v3873, %v3915
        %v3917 = vpop.f32.mrb[0].mxu0
        %v3918 = vadd.f32 %v3875, %v3917
        %v3919 = vpop.f32.mrb[0].mxu0
        %v3920 = vadd.f32 %v3877, %v3919
        %v3921 = vpop.f32.mrb[0].mxu0
        %v3922 = vadd.f32 %v3879, %v3921
        %3923 = vdwg.mxu0
        %3924 = vmatprep.subr.bf16.mxu0 %v3245
        %3925 = vmatpush1.bf16.msra.mxu0 %v3244
        %3926 = vmatprep.subr.bf16.mxu0 %v3253
        %3927 = vmatpush1.bf16.msra.mxu0 %v3252
        %3928 = vmatprep.subr.bf16.mxu0 %v3261
        %3929 = vmatpush1.bf16.msra.mxu0 %v3260
        %3930 = vmatprep.subr.bf16.mxu0 %v3269
        %3931 = vmatpush1.bf16.msra.mxu0 %v3268
        %3932 = vmatprep.subr.bf16.mxu0 %v3277
        %3933 = vmatpush1.bf16.msra.mxu0 %v3276
        %3934 = vmatprep.subr.bf16.mxu0 %v3285
        %3935 = vmatpush1.bf16.msra.mxu0 %v3284
        %3936 = vmatprep.subr.bf16.mxu0 %v3293
        %3937 = vmatpush1.bf16.msra.mxu0 %v3292
        %3938 = vmatprep.subr.bf16.mxu0 %v3301
        %3939 = vmatpush1.bf16.msra.mxu0 %v3300
        %3940 = vmatprep.subr.bf16.mxu0 %v3309
        %3941 = vmatpush1.bf16.msra.mxu0 %v3308
        %3942 = vmatprep.subr.bf16.mxu0 %v3317
        %3943 = vmatpush1.bf16.msra.mxu0 %v3316
        %3944 = vmatprep.subr.bf16.mxu0 %v3325
        %3945 = vmatpush1.bf16.msra.mxu0 %v3324
        %3946 = vmatprep.subr.bf16.mxu0 %v3333
        %3947 = vmatpush1.bf16.msra.mxu0 %v3332
        %3948 = vmatprep.subr.bf16.mxu0 %v3341
        %3949 = vmatpush1.bf16.msra.mxu0 %v3340
        %3950 = vmatprep.subr.bf16.mxu0 %v3349
        %3951 = vmatpush1.bf16.msra.mxu0 %v3348
        %3952 = vmatprep.subr.bf16.mxu0 %v3357
        %3953 = vmatpush1.bf16.msra.mxu0 %v3356
        %3954 = vmatprep.subr.bf16.mxu0 %v3365
        %3955 = vmatpush1.bf16.msra.mxu0 %v3364
        %3956 = vmatprep.mubr.bf16.mxu0 %v585
        %3957 = vmatmul.mubr.bf16.gmra.mrb[0].mxu0 %v584
        %v3958 = vpop.f32.mrb[0].mxu0
        %v3959 = vadd.f32 0.0, %v3958
        %v3960 = vpop.f32.mrb[0].mxu0
        %v3961 = vadd.f32 0.0, %v3960
        %v3962 = vpop.f32.mrb[0].mxu0
        %v3963 = vadd.f32 0.0, %v3962
        %v3964 = vpop.f32.mrb[0].mxu0
        %v3965 = vadd.f32 0.0, %v3964
        %3966 = vdwg.mxu0
        %3967 = vmatprep.subr.bf16.mxu0 %v3373
        %3968 = vmatpush1.bf16.msra.mxu0 %v3372
        %3969 = vmatprep.subr.bf16.mxu0 %v3381
        %3970 = vmatpush1.bf16.msra.mxu0 %v3380
        %3971 = vmatprep.subr.bf16.mxu0 %v3389
        %3972 = vmatpush1.bf16.msra.mxu0 %v3388
        %3973 = vmatprep.subr.bf16.mxu0 %v3397
        %3974 = vmatpush1.bf16.msra.mxu0 %v3396
        %3975 = vmatprep.subr.bf16.mxu0 %v3405
        %3976 = vmatpush1.bf16.msra.mxu0 %v3404
        %3977 = vmatprep.subr.bf16.mxu0 %v3413
        %3978 = vmatpush1.bf16.msra.mxu0 %v3412
        %3979 = vmatprep.subr.bf16.mxu0 %v3421
        %3980 = vmatpush1.bf16.msra.mxu0 %v3420
        %3981 = vmatprep.subr.bf16.mxu0 %v3429
        %3982 = vmatpush1.bf16.msra.mxu0 %v3428
        %3983 = vmatprep.subr.bf16.mxu0 %v3437
        %3984 = vmatpush1.bf16.msra.mxu0 %v3436
        %3985 = vmatprep.subr.bf16.mxu0 %v3445
        %3986 = vmatpush1.bf16.msra.mxu0 %v3444
        %3987 = vmatprep.subr.bf16.mxu0 %v3453
        %3988 = vmatpush1.bf16.msra.mxu0 %v3452
        %3989 = vmatprep.subr.bf16.mxu0 %v3461
        %3990 = vmatpush1.bf16.msra.mxu0 %v3460
        %3991 = vmatprep.subr.bf16.mxu0 %v3469
        %3992 = vmatpush1.bf16.msra.mxu0 %v3468
        %3993 = vmatprep.subr.bf16.mxu0 %v3477
        %3994 = vmatpush1.bf16.msra.mxu0 %v3476
        %3995 = vmatprep.subr.bf16.mxu0 %v3485
        %3996 = vmatpush1.bf16.msra.mxu0 %v3484
        %3997 = vmatprep.subr.bf16.mxu0 %v3493
        %3998 = vmatpush1.bf16.msra.mxu0 %v3492
        %3999 = vmatprep.mubr.bf16.mxu0 %v587
        %4000 = vmatmul.mubr.bf16.gmra.mrb[0].mxu0 %v586
        %v4001 = vpop.f32.mrb[0].mxu0
        %v4002 = vadd.f32 %v3959, %v4001
        %v4003 = vpop.f32.mrb[0].mxu0
        %v4004 = vadd.f32 %v3961, %v4003
        %v4005 = vpop.f32.mrb[0].mxu0
        %v4006 = vadd.f32 %v3963, %v4005
        %v4007 = vpop.f32.mrb[0].mxu0
        %v4008 = vadd.f32 %v3965, %v4007
        %4009 = vdwg.mxu0
        %4010 = vmatprep.subr.bf16.mxu0 %v3247
        %4011 = vmatpush1.bf16.msra.mxu0 %v3246
        %4012 = vmatprep.subr.bf16.mxu0 %v3255
        %4013 = vmatpush1.bf16.msra.mxu0 %v3254
        %4014 = vmatprep.subr.bf16.mxu0 %v3263
        %4015 = vmatpush1.bf16.msra.mxu0 %v3262
        %4016 = vmatprep.subr.bf16.mxu0 %v3271
        %4017 = vmatpush1.bf16.msra.mxu0 %v3270
        %4018 = vmatprep.subr.bf16.mxu0 %v3279
        %4019 = vmatpush1.bf16.msra.mxu0 %v3278
        %4020 = vmatprep.subr.bf16.mxu0 %v3287
        %4021 = vmatpush1.bf16.msra.mxu0 %v3286
        %4022 = vmatprep.subr.bf16.mxu0 %v3295
        %4023 = vmatpush1.bf16.msra.mxu0 %v3294
        %4024 = vmatprep.subr.bf16.mxu0 %v3303
        %4025 = vmatpush1.bf16.msra.mxu0 %v3302
        %4026 = vmatprep.subr.bf16.mxu0 %v3311
        %4027 = vmatpush1.bf16.msra.mxu0 %v3310
        %4028 = vmatprep.subr.bf16.mxu0 %v3319
        %4029 = vmatpush1.bf16.msra.mxu0 %v3318
        %4030 = vmatprep.subr.bf16.mxu0 %v3327
        %4031 = vmatpush1.bf16.msra.mxu0 %v3326
        %4032 = vmatprep.subr.bf16.mxu0 %v3335
        %4033 = vmatpush1.bf16.msra.mxu0 %v3334
        %4034 = vmatprep.subr.bf16.mxu0 %v3343
        %4035 = vmatpush1.bf16.msra.mxu0 %v3342
        %4036 = vmatprep.subr.bf16.mxu0 %v3351
        %4037 = vmatpush1.bf16.msra.mxu0 %v3350
        %4038 = vmatprep.subr.bf16.mxu0 %v3359
        %4039 = vmatpush1.bf16.msra.mxu0 %v3358
        %4040 = vmatprep.subr.bf16.mxu0 %v3367
        %4041 = vmatpush1.bf16.msra.mxu0 %v3366
        %4042 = vmatprep.mubr.bf16.mxu0 %v585
        %4043 = vmatmul.mubr.bf16.gmra.mrb[0].mxu0 %v584
        %v4044 = vpop.f32.mrb[0].mxu0
        %v4045 = vadd.f32 0.0, %v4044
        %v4046 = vpop.f32.mrb[0].mxu0
        %v4047 = vadd.f32 0.0, %v4046
        %v4048 = vpop.f32.mrb[0].mxu0
        %v4049 = vadd.f32 0.0, %v4048
        %v4050 = vpop.f32.mrb[0].mxu0
        %v4051 = vadd.f32 0.0, %v4050
        %4052 = vdwg.mxu0
        %4053 = vmatprep.subr.bf16.mxu0 %v3375
        %4054 = vmatpush1.bf16.msra.mxu0 %v3374
        %4055 = vmatprep.subr.bf16.mxu0 %v3383
        %4056 = vmatpush1.bf16.msra.mxu0 %v3382
        %4057 = vmatprep.subr.bf16.mxu0 %v3391
        %4058 = vmatpush1.bf16.msra.mxu0 %v3390
        %4059 = vmatprep.subr.bf16.mxu0 %v3399
        %4060 = vmatpush1.bf16.msra.mxu0 %v3398
        %4061 = vmatprep.subr.bf16.mxu0 %v3407
        %4062 = vmatpush1.bf16.msra.mxu0 %v3406
        %4063 = vmatprep.subr.bf16.mxu0 %v3415
        %4064 = vmatpush1.bf16.msra.mxu0 %v3414
        %4065 = vmatprep.subr.bf16.mxu0 %v3423
        %4066 = vmatpush1.bf16.msra.mxu0 %v3422
        %4067 = vmatprep.subr.bf16.mxu0 %v3431
        %4068 = vmatpush1.bf16.msra.mxu0 %v3430
        %4069 = vmatprep.subr.bf16.mxu0 %v3439
        %4070 = vmatpush1.bf16.msra.mxu0 %v3438
        %4071 = vmatprep.subr.bf16.mxu0 %v3447
        %4072 = vmatpush1.bf16.msra.mxu0 %v3446
        %4073 = vmatprep.subr.bf16.mxu0 %v3455
        %4074 = vmatpush1.bf16.msra.mxu0 %v3454
        %4075 = vmatprep.subr.bf16.mxu0 %v3463
        %4076 = vmatpush1.bf16.msra.mxu0 %v3462
        %4077 = vmatprep.subr.bf16.mxu0 %v3471
        %4078 = vmatpush1.bf16.msra.mxu0 %v3470
        %4079 = vmatprep.subr.bf16.mxu0 %v3479
        %4080 = vmatpush1.bf16.msra.mxu0 %v3478
        %4081 = vmatprep.subr.bf16.mxu0 %v3487
        %4082 = vmatpush1.bf16.msra.mxu0 %v3486
        %4083 = vmatprep.subr.bf16.mxu0 %v3495
        %4084 = vmatpush1.bf16.msra.mxu0 %v3494
        %4085 = vmatprep.mubr.bf16.mxu0 %v587
        %4086 = vmatmul.mubr.bf16.gmra.mrb[0].mxu0 %v586
        %v4087 = vpop.f32.mrb[0].mxu0
        %v4088 = vadd.f32 %v4045, %v4087
        %v4089 = vpop.f32.mrb[0].mxu0
        %v4090 = vadd.f32 %v4047, %v4089
        %v4091 = vpop.f32.mrb[0].mxu0
        %v4092 = vadd.f32 %v4049, %v4091
        %v4093 = vpop.f32.mrb[0].mxu0
        %v4094 = vadd.f32 %v4051, %v4093
        %4095 = vdwg.mxu0
        %v4096 = vxor.u32 %v1950, 2147483648
        %v4097 = vxor.u32 %v1952, 2147483648
        %v4098 = vxor.u32 %v2036, 2147483648
        %v4099 = vxor.u32 %v2038, 2147483648
        %v4100 = vxor.u32 %v2122, 2147483648
        %v4101 = vxor.u32 %v2124, 2147483648
        %v4102 = vxor.u32 %v2208, 2147483648
        %v4103 = vxor.u32 %v2210, 2147483648
        %v4104 = vxor.u32 %v1954, 2147483648
        %v4105 = vxor.u32 %v1956, 2147483648
        %v4106 = vxor.u32 %v2040, 2147483648
        %v4107 = vxor.u32 %v2042, 2147483648
        %v4108 = vxor.u32 %v2126, 2147483648
        %v4109 = vxor.u32 %v2128, 2147483648
        %v4110 = vxor.u32 %v2212, 2147483648
        %v4111 = vxor.u32 %v2214, 2147483648
        %v4112 = vmul.f32 %v4096, 1.442695
        %v4113 = vpow.pop %v4112
        %v4114 = vmul.f32 %v4097, 1.442695
        %v4115 = vpow.pop %v4114
        %v4116 = vmul.f32 %v4098, 1.442695
        %v4117 = vpow.pop %v4116
        %v4118 = vmul.f32 %v4099, 1.442695
        %v4119 = vpow.pop %v4118
        %v4120 = vmul.f32 %v4100, 1.442695
        %v4121 = vpow.pop %v4120
        %v4122 = vmul.f32 %v4101, 1.442695
        %v4123 = vpow.pop %v4122
        %v4124 = vmul.f32 %v4102, 1.442695
        %v4125 = vpow.pop %v4124
        %v4126 = vmul.f32 %v4103, 1.442695
        %v4127 = vpow.pop %v4126
        %v4128 = vmul.f32 %v4104, 1.442695
        %v4129 = vpow.pop %v4128
        %v4130 = vmul.f32 %v4105, 1.442695
        %v4131 = vpow.pop %v4130
        %v4132 = vmul.f32 %v4106, 1.442695
        %v4133 = vpow.pop %v4132
        %v4134 = vmul.f32 %v4107, 1.442695
        %v4135 = vpow.pop %v4134
        %v4136 = vmul.f32 %v4108, 1.442695
        %v4137 = vpow.pop %v4136
        %v4138 = vmul.f32 %v4109, 1.442695
        %v4139 = vpow.pop %v4138
        %v4140 = vmul.f32 %v4110, 1.442695
        %v4141 = vpow.pop %v4140
        %v4142 = vmul.f32 %v4111, 1.442695
        %v4143 = vpow.pop %v4142
        %v4144 = vadd.f32 %v4113, 1.0
        %v4145 = vadd.f32 %v4115, 1.0
        %v4146 = vadd.f32 %v4117, 1.0
        %v4147 = vadd.f32 %v4119, 1.0
        %v4148 = vadd.f32 %v4121, 1.0
        %v4149 = vadd.f32 %v4123, 1.0
        %v4150 = vadd.f32 %v4125, 1.0
        %v4151 = vadd.f32 %v4127, 1.0
        %v4152 = vadd.f32 %v4129, 1.0
        %v4153 = vadd.f32 %v4131, 1.0
        %v4154 = vadd.f32 %v4133, 1.0
        %v4155 = vadd.f32 %v4135, 1.0
        %v4156 = vadd.f32 %v4137, 1.0
        %v4157 = vadd.f32 %v4139, 1.0
        %v4158 = vadd.f32 %v4141, 1.0
        %v4159 = vadd.f32 %v4143, 1.0
        %v4160 = vrcp.pop %v4144
        %v4161 = vmul.f32 1.0, %v4160
        %v4162 = vrcp.pop %v4145
        %v4163 = vmul.f32 1.0, %v4162
        %v4164 = vrcp.pop %v4146
        %v4165 = vmul.f32 1.0, %v4164
        %v4166 = vrcp.pop %v4147
        %v4167 = vmul.f32 1.0, %v4166
        %v4168 = vrcp.pop %v4148
        %v4169 = vmul.f32 1.0, %v4168
        %v4170 = vrcp.pop %v4149
        %v4171 = vmul.f32 1.0, %v4170
        %v4172 = vrcp.pop %v4150
        %v4173 = vmul.f32 1.0, %v4172
        %v4174 = vrcp.pop %v4151
        %v4175 = vmul.f32 1.0, %v4174
        %v4176 = vrcp.pop %v4152
        %v4177 = vmul.f32 1.0, %v4176
        %v4178 = vrcp.pop %v4153
        %v4179 = vmul.f32 1.0, %v4178
        %v4180 = vrcp.pop %v4154
        %v4181 = vmul.f32 1.0, %v4180
        %v4182 = vrcp.pop %v4155
        %v4183 = vmul.f32 1.0, %v4182
        %v4184 = vrcp.pop %v4156
        %v4185 = vmul.f32 1.0, %v4184
        %v4186 = vrcp.pop %v4157
        %v4187 = vmul.f32 1.0, %v4186
        %v4188 = vrcp.pop %v4158
        %v4189 = vmul.f32 1.0, %v4188
        %v4190 = vrcp.pop %v4159
        %v4191 = vmul.f32 1.0, %v4190
        %v4192 = vmul.f32 %v1950, %v4161
        %v4193 = vmul.f32 %v1952, %v4163
        %v4194 = vmul.f32 %v2036, %v4165
        %v4195 = vmul.f32 %v2038, %v4167
        %v4196 = vmul.f32 %v2122, %v4169
        %v4197 = vmul.f32 %v2124, %v4171
        %v4198 = vmul.f32 %v2208, %v4173
        %v4199 = vmul.f32 %v2210, %v4175
        %v4200 = vmul.f32 %v1954, %v4177
        %v4201 = vmul.f32 %v1956, %v4179
        %v4202 = vmul.f32 %v2040, %v4181
        %v4203 = vmul.f32 %v2042, %v4183
        %v4204 = vmul.f32 %v2126, %v4185
        %v4205 = vmul.f32 %v2128, %v4187
        %v4206 = vmul.f32 %v2212, %v4189
        %v4207 = vmul.f32 %v2214, %v4191
        %v4208 = vmul.f32 %v4192, %v3830
        %v4209 = vmul.f32 %v4193, %v3832
        %v4210 = vmul.f32 %v4194, %v3916
        %v4211 = vmul.f32 %v4195, %v3918
        %v4212 = vmul.f32 %v4196, %v4002
        %v4213 = vmul.f32 %v4197, %v4004
        %v4214 = vmul.f32 %v4198, %v4088
        %v4215 = vmul.f32 %v4199, %v4090
        %v4216 = vmul.f32 %v4200, %v3834
        %v4217 = vmul.f32 %v4201, %v3836
        %v4218 = vmul.f32 %v4202, %v3920
        %v4219 = vmul.f32 %v4203, %v3922
        %v4220 = vmul.f32 %v4204, %v4006
        %v4221 = vmul.f32 %v4205, %v4008
        %v4222 = vmul.f32 %v4206, %v4092
        %v4223 = vmul.f32 %v4207, %v4094
        %v4224 = vpack.c.bf16 %v4216, %v4208
        %v4225 = vpack.c.bf16 %v4217, %v4209
        %v4226 = vpack.c.bf16 %v4218, %v4210
        %v4227 = vpack.c.bf16 %v4219, %v4211
        %v4228 = vpack.c.bf16 %v4220, %v4212
        %v4229 = vpack.c.bf16 %v4221, %v4213
        %v4230 = vpack.c.bf16 %v4222, %v4214
        %v4231 = vpack.c.bf16 %v4223, %v4215
        %v4232 = vld [vmem:[#allocation2] sm:$0xff]
        %v4233 = vld [vmem:[#allocation2 + $0x8] sm:$0xff]
        %v4234 = vld [vmem:[#allocation2 + $0x10] sm:$0xff]
        %v4235 = vld [vmem:[#allocation2 + $0x18] sm:$0xff]
        %v4236 = vld [vmem:[#allocation2 + $0x20] sm:$0xff]
        %v4237 = vld [vmem:[#allocation2 + $0x28] sm:$0xff]
        %v4238 = vld [vmem:[#allocation2 + $0x30] sm:$0xff]
        %v4239 = vld [vmem:[#allocation2 + $0x38] sm:$0xff]
        %v4240 = vld [vmem:[%s267] sm:$0xff]
        %v4241 = vld [vmem:[%s267 + $0x8] sm:$0xff]
        %v4242 = vld [vmem:[%s267 + $0x10] sm:$0xff]
        %v4243 = vld [vmem:[%s267 + $0x18] sm:$0xff]
        %v4244 = vld [vmem:[%s267 + $0x20] sm:$0xff]
        %v4245 = vld [vmem:[%s267 + $0x28] sm:$0xff]
        %v4246 = vld [vmem:[%s267 + $0x30] sm:$0xff]
        %v4247 = vld [vmem:[%s267 + $0x38] sm:$0xff]
        %v4248 = vld [vmem:[%s267 + $0x40] sm:$0xff]
        %v4249 = vld [vmem:[%s267 + $0x48] sm:$0xff]
        %v4250 = vld [vmem:[%s267 + $0x50] sm:$0xff]
        %v4251 = vld [vmem:[%s267 + $0x58] sm:$0xff]
        %v4252 = vld [vmem:[%s267 + $0x60] sm:$0xff]
        %v4253 = vld [vmem:[%s267 + $0x68] sm:$0xff]
        %v4254 = vld [vmem:[%s267 + $0x70] sm:$0xff]
        %v4255 = vld [vmem:[%s267 + $0x78] sm:$0xff]
        %v4256 = vld [vmem:[%s267 + $0x80] sm:$0xff]
        %v4257 = vld [vmem:[%s267 + $0x88] sm:$0xff]
        %v4258 = vld [vmem:[%s267 + $0x90] sm:$0xff]
        %v4259 = vld [vmem:[%s267 + $0x98] sm:$0xff]
        %v4260 = vld [vmem:[%s267 + $0xa0] sm:$0xff]
        %v4261 = vld [vmem:[%s267 + $0xa8] sm:$0xff]
        %v4262 = vld [vmem:[%s267 + $0xb0] sm:$0xff]
        %v4263 = vld [vmem:[%s267 + $0xb8] sm:$0xff]
        %v4264 = vld [vmem:[%s267 + $0xc0] sm:$0xff]
        %v4265 = vld [vmem:[%s267 + $0xc8] sm:$0xff]
        %v4266 = vld [vmem:[%s267 + $0xd0] sm:$0xff]
        %v4267 = vld [vmem:[%s267 + $0xd8] sm:$0xff]
        %v4268 = vld [vmem:[%s267 + $0xe0] sm:$0xff]
        %v4269 = vld [vmem:[%s267 + $0xe8] sm:$0xff]
        %v4270 = vld [vmem:[%s267 + $0xf0] sm:$0xff]
        %v4271 = vld [vmem:[%s267 + $0xf8] sm:$0xff]
        %v4272 = vld [vmem:[%s267 + $0x100] sm:$0xff]
        %v4273 = vld [vmem:[%s267 + $0x108] sm:$0xff]
        %v4274 = vld [vmem:[%s267 + $0x110] sm:$0xff]
        %v4275 = vld [vmem:[%s267 + $0x118] sm:$0xff]
        %v4276 = vld [vmem:[%s267 + $0x120] sm:$0xff]
        %v4277 = vld [vmem:[%s267 + $0x128] sm:$0xff]
        %v4278 = vld [vmem:[%s267 + $0x130] sm:$0xff]
        %v4279 = vld [vmem:[%s267 + $0x138] sm:$0xff]
        %v4280 = vld [vmem:[%s267 + $0x140] sm:$0xff]
        %v4281 = vld [vmem:[%s267 + $0x148] sm:$0xff]
        %v4282 = vld [vmem:[%s267 + $0x150] sm:$0xff]
        %v4283 = vld [vmem:[%s267 + $0x158] sm:$0xff]
        %v4284 = vld [vmem:[%s267 + $0x160] sm:$0xff]
        %v4285 = vld [vmem:[%s267 + $0x168] sm:$0xff]
        %v4286 = vld [vmem:[%s267 + $0x170] sm:$0xff]
        %v4287 = vld [vmem:[%s267 + $0x178] sm:$0xff]
        %v4288 = vld [vmem:[%s267 + $0x180] sm:$0xff]
        %v4289 = vld [vmem:[%s267 + $0x188] sm:$0xff]
        %v4290 = vld [vmem:[%s267 + $0x190] sm:$0xff]
        %v4291 = vld [vmem:[%s267 + $0x198] sm:$0xff]
        %v4292 = vld [vmem:[%s267 + $0x1a0] sm:$0xff]
        %v4293 = vld [vmem:[%s267 + $0x1a8] sm:$0xff]
        %v4294 = vld [vmem:[%s267 + $0x1b0] sm:$0xff]
        %v4295 = vld [vmem:[%s267 + $0x1b8] sm:$0xff]
        %v4296 = vld [vmem:[%s267 + $0x1c0] sm:$0xff]
        %v4297 = vld [vmem:[%s267 + $0x1c8] sm:$0xff]
        %v4298 = vld [vmem:[%s267 + $0x1d0] sm:$0xff]
        %v4299 = vld [vmem:[%s267 + $0x1d8] sm:$0xff]
        %v4300 = vld [vmem:[%s267 + $0x1e0] sm:$0xff]
        %v4301 = vld [vmem:[%s267 + $0x1e8] sm:$0xff]
        %v4302 = vld [vmem:[%s267 + $0x1f0] sm:$0xff]
        %v4303 = vld [vmem:[%s267 + $0x1f8] sm:$0xff]
        %v4304 = vld [vmem:[%s267 + $0x200] sm:$0xff]
        %v4305 = vld [vmem:[%s267 + $0x208] sm:$0xff]
        %v4306 = vld [vmem:[%s267 + $0x210] sm:$0xff]
        %v4307 = vld [vmem:[%s267 + $0x218] sm:$0xff]
        %v4308 = vld [vmem:[%s267 + $0x220] sm:$0xff]
        %v4309 = vld [vmem:[%s267 + $0x228] sm:$0xff]
        %v4310 = vld [vmem:[%s267 + $0x230] sm:$0xff]
        %v4311 = vld [vmem:[%s267 + $0x238] sm:$0xff]
        %v4312 = vld [vmem:[%s267 + $0x240] sm:$0xff]
        %v4313 = vld [vmem:[%s267 + $0x248] sm:$0xff]
        %v4314 = vld [vmem:[%s267 + $0x250] sm:$0xff]
        %v4315 = vld [vmem:[%s267 + $0x258] sm:$0xff]
        %v4316 = vld [vmem:[%s267 + $0x260] sm:$0xff]
        %v4317 = vld [vmem:[%s267 + $0x268] sm:$0xff]
        %v4318 = vld [vmem:[%s267 + $0x270] sm:$0xff]
        %v4319 = vld [vmem:[%s267 + $0x278] sm:$0xff]
        %v4320 = vld [vmem:[%s267 + $0x280] sm:$0xff]
        %v4321 = vld [vmem:[%s267 + $0x288] sm:$0xff]
        %v4322 = vld [vmem:[%s267 + $0x290] sm:$0xff]
        %v4323 = vld [vmem:[%s267 + $0x298] sm:$0xff]
        %v4324 = vld [vmem:[%s267 + $0x2a0] sm:$0xff]
        %v4325 = vld [vmem:[%s267 + $0x2a8] sm:$0xff]
        %v4326 = vld [vmem:[%s267 + $0x2b0] sm:$0xff]
        %v4327 = vld [vmem:[%s267 + $0x2b8] sm:$0xff]
        %v4328 = vld [vmem:[%s267 + $0x2c0] sm:$0xff]
        %v4329 = vld [vmem:[%s267 + $0x2c8] sm:$0xff]
        %v4330 = vld [vmem:[%s267 + $0x2d0] sm:$0xff]
        %v4331 = vld [vmem:[%s267 + $0x2d8] sm:$0xff]
        %v4332 = vld [vmem:[%s267 + $0x2e0] sm:$0xff]
        %v4333 = vld [vmem:[%s267 + $0x2e8] sm:$0xff]
        %v4334 = vld [vmem:[%s267 + $0x2f0] sm:$0xff]
        %v4335 = vld [vmem:[%s267 + $0x2f8] sm:$0xff]
        %v4336 = vld [vmem:[%s267 + $0x300] sm:$0xff]
        %v4337 = vld [vmem:[%s267 + $0x308] sm:$0xff]
        %v4338 = vld [vmem:[%s267 + $0x310] sm:$0xff]
        %v4339 = vld [vmem:[%s267 + $0x318] sm:$0xff]
        %v4340 = vld [vmem:[%s267 + $0x320] sm:$0xff]
        %v4341 = vld [vmem:[%s267 + $0x328] sm:$0xff]
        %v4342 = vld [vmem:[%s267 + $0x330] sm:$0xff]
        %v4343 = vld [vmem:[%s267 + $0x338] sm:$0xff]
        %v4344 = vld [vmem:[%s267 + $0x340] sm:$0xff]
        %v4345 = vld [vmem:[%s267 + $0x348] sm:$0xff]
        %v4346 = vld [vmem:[%s267 + $0x350] sm:$0xff]
        %v4347 = vld [vmem:[%s267 + $0x358] sm:$0xff]
        %v4348 = vld [vmem:[%s267 + $0x360] sm:$0xff]
        %v4349 = vld [vmem:[%s267 + $0x368] sm:$0xff]
        %v4350 = vld [vmem:[%s267 + $0x370] sm:$0xff]
        %v4351 = vld [vmem:[%s267 + $0x378] sm:$0xff]
        %v4352 = vld [vmem:[%s267 + $0x380] sm:$0xff]
        %v4353 = vld [vmem:[%s267 + $0x388] sm:$0xff]
        %v4354 = vld [vmem:[%s267 + $0x390] sm:$0xff]
        %v4355 = vld [vmem:[%s267 + $0x398] sm:$0xff]
        %v4356 = vld [vmem:[%s267 + $0x3a0] sm:$0xff]
        %v4357 = vld [vmem:[%s267 + $0x3a8] sm:$0xff]
        %v4358 = vld [vmem:[%s267 + $0x3b0] sm:$0xff]
        %v4359 = vld [vmem:[%s267 + $0x3b8] sm:$0xff]
        %v4360 = vld [vmem:[%s267 + $0x3c0] sm:$0xff]
        %v4361 = vld [vmem:[%s267 + $0x3c8] sm:$0xff]
        %v4362 = vld [vmem:[%s267 + $0x3d0] sm:$0xff]
        %v4363 = vld [vmem:[%s267 + $0x3d8] sm:$0xff]
        %v4364 = vld [vmem:[%s267 + $0x3e0] sm:$0xff]
        %v4365 = vld [vmem:[%s267 + $0x3e8] sm:$0xff]
        %v4366 = vld [vmem:[%s267 + $0x3f0] sm:$0xff]
        %v4367 = vld [vmem:[%s267 + $0x3f8] sm:$0xff]
        %v4368 = vld [vmem:[%s267 + $0x400] sm:$0xff]
        %v4369 = vld [vmem:[%s267 + $0x408] sm:$0xff]
        %v4370 = vld [vmem:[%s267 + $0x410] sm:$0xff]
        %v4371 = vld [vmem:[%s267 + $0x418] sm:$0xff]
        %v4372 = vld [vmem:[%s267 + $0x420] sm:$0xff]
        %v4373 = vld [vmem:[%s267 + $0x428] sm:$0xff]
        %v4374 = vld [vmem:[%s267 + $0x430] sm:$0xff]
        %v4375 = vld [vmem:[%s267 + $0x438] sm:$0xff]
        %v4376 = vld [vmem:[%s267 + $0x440] sm:$0xff]
        %v4377 = vld [vmem:[%s267 + $0x448] sm:$0xff]
        %v4378 = vld [vmem:[%s267 + $0x450] sm:$0xff]
        %v4379 = vld [vmem:[%s267 + $0x458] sm:$0xff]
        %v4380 = vld [vmem:[%s267 + $0x460] sm:$0xff]
        %v4381 = vld [vmem:[%s267 + $0x468] sm:$0xff]
        %v4382 = vld [vmem:[%s267 + $0x470] sm:$0xff]
        %v4383 = vld [vmem:[%s267 + $0x478] sm:$0xff]
        %v4384 = vld [vmem:[%s267 + $0x480] sm:$0xff]
        %v4385 = vld [vmem:[%s267 + $0x488] sm:$0xff]
        %v4386 = vld [vmem:[%s267 + $0x490] sm:$0xff]
        %v4387 = vld [vmem:[%s267 + $0x498] sm:$0xff]
        %v4388 = vld [vmem:[%s267 + $0x4a0] sm:$0xff]
        %v4389 = vld [vmem:[%s267 + $0x4a8] sm:$0xff]
        %v4390 = vld [vmem:[%s267 + $0x4b0] sm:$0xff]
        %v4391 = vld [vmem:[%s267 + $0x4b8] sm:$0xff]
        %v4392 = vld [vmem:[%s267 + $0x4c0] sm:$0xff]
        %v4393 = vld [vmem:[%s267 + $0x4c8] sm:$0xff]
        %v4394 = vld [vmem:[%s267 + $0x4d0] sm:$0xff]
        %v4395 = vld [vmem:[%s267 + $0x4d8] sm:$0xff]
        %v4396 = vld [vmem:[%s267 + $0x4e0] sm:$0xff]
        %v4397 = vld [vmem:[%s267 + $0x4e8] sm:$0xff]
        %v4398 = vld [vmem:[%s267 + $0x4f0] sm:$0xff]
        %v4399 = vld [vmem:[%s267 + $0x4f8] sm:$0xff]
        %v4400 = vld [vmem:[%s267 + $0x500] sm:$0xff]
        %v4401 = vld [vmem:[%s267 + $0x508] sm:$0xff]
        %v4402 = vld [vmem:[%s267 + $0x510] sm:$0xff]
        %v4403 = vld [vmem:[%s267 + $0x518] sm:$0xff]
        %v4404 = vld [vmem:[%s267 + $0x520] sm:$0xff]
        %v4405 = vld [vmem:[%s267 + $0x528] sm:$0xff]
        %v4406 = vld [vmem:[%s267 + $0x530] sm:$0xff]
        %v4407 = vld [vmem:[%s267 + $0x538] sm:$0xff]
        %v4408 = vld [vmem:[%s267 + $0x540] sm:$0xff]
        %v4409 = vld [vmem:[%s267 + $0x548] sm:$0xff]
        %v4410 = vld [vmem:[%s267 + $0x550] sm:$0xff]
        %v4411 = vld [vmem:[%s267 + $0x558] sm:$0xff]
        %v4412 = vld [vmem:[%s267 + $0x560] sm:$0xff]
        %v4413 = vld [vmem:[%s267 + $0x568] sm:$0xff]
        %v4414 = vld [vmem:[%s267 + $0x570] sm:$0xff]
        %v4415 = vld [vmem:[%s267 + $0x578] sm:$0xff]
        %v4416 = vld [vmem:[%s267 + $0x580] sm:$0xff]
        %v4417 = vld [vmem:[%s267 + $0x588] sm:$0xff]
        %v4418 = vld [vmem:[%s267 + $0x590] sm:$0xff]
        %v4419 = vld [vmem:[%s267 + $0x598] sm:$0xff]
        %v4420 = vld [vmem:[%s267 + $0x5a0] sm:$0xff]
        %v4421 = vld [vmem:[%s267 + $0x5a8] sm:$0xff]
        %v4422 = vld [vmem:[%s267 + $0x5b0] sm:$0xff]
        %v4423 = vld [vmem:[%s267 + $0x5b8] sm:$0xff]
        %v4424 = vld [vmem:[%s267 + $0x5c0] sm:$0xff]
        %v4425 = vld [vmem:[%s267 + $0x5c8] sm:$0xff]
        %v4426 = vld [vmem:[%s267 + $0x5d0] sm:$0xff]
        %v4427 = vld [vmem:[%s267 + $0x5d8] sm:$0xff]
        %v4428 = vld [vmem:[%s267 + $0x5e0] sm:$0xff]
        %v4429 = vld [vmem:[%s267 + $0x5e8] sm:$0xff]
        %v4430 = vld [vmem:[%s267 + $0x5f0] sm:$0xff]
        %v4431 = vld [vmem:[%s267 + $0x5f8] sm:$0xff]
        %v4432 = vld [vmem:[%s267 + $0x600] sm:$0xff]
        %v4433 = vld [vmem:[%s267 + $0x608] sm:$0xff]
        %v4434 = vld [vmem:[%s267 + $0x610] sm:$0xff]
        %v4435 = vld [vmem:[%s267 + $0x618] sm:$0xff]
        %v4436 = vld [vmem:[%s267 + $0x620] sm:$0xff]
        %v4437 = vld [vmem:[%s267 + $0x628] sm:$0xff]
        %v4438 = vld [vmem:[%s267 + $0x630] sm:$0xff]
        %v4439 = vld [vmem:[%s267 + $0x638] sm:$0xff]
        %v4440 = vld [vmem:[%s267 + $0x640] sm:$0xff]
        %v4441 = vld [vmem:[%s267 + $0x648] sm:$0xff]
        %v4442 = vld [vmem:[%s267 + $0x650] sm:$0xff]
        %v4443 = vld [vmem:[%s267 + $0x658] sm:$0xff]
        %v4444 = vld [vmem:[%s267 + $0x660] sm:$0xff]
        %v4445 = vld [vmem:[%s267 + $0x668] sm:$0xff]
        %v4446 = vld [vmem:[%s267 + $0x670] sm:$0xff]
        %v4447 = vld [vmem:[%s267 + $0x678] sm:$0xff]
        %v4448 = vld [vmem:[%s267 + $0x680] sm:$0xff]
        %v4449 = vld [vmem:[%s267 + $0x688] sm:$0xff]
        %v4450 = vld [vmem:[%s267 + $0x690] sm:$0xff]
        %v4451 = vld [vmem:[%s267 + $0x698] sm:$0xff]
        %v4452 = vld [vmem:[%s267 + $0x6a0] sm:$0xff]
        %v4453 = vld [vmem:[%s267 + $0x6a8] sm:$0xff]
        %v4454 = vld [vmem:[%s267 + $0x6b0] sm:$0xff]
        %v4455 = vld [vmem:[%s267 + $0x6b8] sm:$0xff]
        %v4456 = vld [vmem:[%s267 + $0x6c0] sm:$0xff]
        %v4457 = vld [vmem:[%s267 + $0x6c8] sm:$0xff]
        %v4458 = vld [vmem:[%s267 + $0x6d0] sm:$0xff]
        %v4459 = vld [vmem:[%s267 + $0x6d8] sm:$0xff]
        %v4460 = vld [vmem:[%s267 + $0x6e0] sm:$0xff]
        %v4461 = vld [vmem:[%s267 + $0x6e8] sm:$0xff]
        %v4462 = vld [vmem:[%s267 + $0x6f0] sm:$0xff]
        %v4463 = vld [vmem:[%s267 + $0x6f8] sm:$0xff]
        %v4464 = vld [vmem:[%s267 + $0x700] sm:$0xff]
        %v4465 = vld [vmem:[%s267 + $0x708] sm:$0xff]
        %v4466 = vld [vmem:[%s267 + $0x710] sm:$0xff]
        %v4467 = vld [vmem:[%s267 + $0x718] sm:$0xff]
        %v4468 = vld [vmem:[%s267 + $0x720] sm:$0xff]
        %v4469 = vld [vmem:[%s267 + $0x728] sm:$0xff]
        %v4470 = vld [vmem:[%s267 + $0x730] sm:$0xff]
        %v4471 = vld [vmem:[%s267 + $0x738] sm:$0xff]
        %v4472 = vld [vmem:[%s267 + $0x740] sm:$0xff]
        %v4473 = vld [vmem:[%s267 + $0x748] sm:$0xff]
        %v4474 = vld [vmem:[%s267 + $0x750] sm:$0xff]
        %v4475 = vld [vmem:[%s267 + $0x758] sm:$0xff]
        %v4476 = vld [vmem:[%s267 + $0x760] sm:$0xff]
        %v4477 = vld [vmem:[%s267 + $0x768] sm:$0xff]
        %v4478 = vld [vmem:[%s267 + $0x770] sm:$0xff]
        %v4479 = vld [vmem:[%s267 + $0x778] sm:$0xff]
        %v4480 = vld [vmem:[%s267 + $0x780] sm:$0xff]
        %v4481 = vld [vmem:[%s267 + $0x788] sm:$0xff]
        %v4482 = vld [vmem:[%s267 + $0x790] sm:$0xff]
        %v4483 = vld [vmem:[%s267 + $0x798] sm:$0xff]
        %v4484 = vld [vmem:[%s267 + $0x7a0] sm:$0xff]
        %v4485 = vld [vmem:[%s267 + $0x7a8] sm:$0xff]
        %v4486 = vld [vmem:[%s267 + $0x7b0] sm:$0xff]
        %v4487 = vld [vmem:[%s267 + $0x7b8] sm:$0xff]
        %v4488 = vld [vmem:[%s267 + $0x7c0] sm:$0xff]
        %v4489 = vld [vmem:[%s267 + $0x7c8] sm:$0xff]
        %v4490 = vld [vmem:[%s267 + $0x7d0] sm:$0xff]
        %v4491 = vld [vmem:[%s267 + $0x7d8] sm:$0xff]
        %v4492 = vld [vmem:[%s267 + $0x7e0] sm:$0xff]
        %v4493 = vld [vmem:[%s267 + $0x7e8] sm:$0xff]
        %v4494 = vld [vmem:[%s267 + $0x7f0] sm:$0xff]
        %v4495 = vld [vmem:[%s267 + $0x7f8] sm:$0xff]
        %v4752 = vunpack.c.l.b16 %v4240
        %v4753 = vunpack.c.h.b16 %v4240
        %v4754 = vunpack.c.l.b16 %v4241
        %v4755 = vunpack.c.h.b16 %v4241
        %v4756 = vunpack.c.l.b16 %v4242
        %v4757 = vunpack.c.h.b16 %v4242
        %v4758 = vunpack.c.l.b16 %v4243
        %v4759 = vunpack.c.h.b16 %v4243
        %v4760 = vunpack.c.l.b16 %v4244
        %v4761 = vunpack.c.h.b16 %v4244
        %v4762 = vunpack.c.l.b16 %v4245
        %v4763 = vunpack.c.h.b16 %v4245
        %v4764 = vunpack.c.l.b16 %v4246
        %v4765 = vunpack.c.h.b16 %v4246
        %v4766 = vunpack.c.l.b16 %v4247
        %v4767 = vunpack.c.h.b16 %v4247
        %v4768 = vunpack.c.l.b16 %v4248
        %v4769 = vunpack.c.h.b16 %v4248
        %v4770 = vunpack.c.l.b16 %v4249
        %v4771 = vunpack.c.h.b16 %v4249
        %v4772 = vunpack.c.l.b16 %v4250
        %v4773 = vunpack.c.h.b16 %v4250
        %v4774 = vunpack.c.l.b16 %v4251
        %v4775 = vunpack.c.h.b16 %v4251
        %v4776 = vunpack.c.l.b16 %v4252
        %v4777 = vunpack.c.h.b16 %v4252
        %v4778 = vunpack.c.l.b16 %v4253
        %v4779 = vunpack.c.h.b16 %v4253
        %v4780 = vunpack.c.l.b16 %v4254
        %v4781 = vunpack.c.h.b16 %v4254
        %v4782 = vunpack.c.l.b16 %v4255
        %v4783 = vunpack.c.h.b16 %v4255
        %v4784 = vunpack.c.l.b16 %v4256
        %v4785 = vunpack.c.h.b16 %v4256
        %v4786 = vunpack.c.l.b16 %v4257
        %v4787 = vunpack.c.h.b16 %v4257
        %v4788 = vunpack.c.l.b16 %v4258
        %v4789 = vunpack.c.h.b16 %v4258
        %v4790 = vunpack.c.l.b16 %v4259
        %v4791 = vunpack.c.h.b16 %v4259
        %v4792 = vunpack.c.l.b16 %v4260
        %v4793 = vunpack.c.h.b16 %v4260
        %v4794 = vunpack.c.l.b16 %v4261
        %v4795 = vunpack.c.h.b16 %v4261
        %v4796 = vunpack.c.l.b16 %v4262
        %v4797 = vunpack.c.h.b16 %v4262
        %v4798 = vunpack.c.l.b16 %v4263
        %v4799 = vunpack.c.h.b16 %v4263
        %v4800 = vunpack.c.l.b16 %v4264
        %v4801 = vunpack.c.h.b16 %v4264
        %v4802 = vunpack.c.l.b16 %v4265
        %v4803 = vunpack.c.h.b16 %v4265
        %v4804 = vunpack.c.l.b16 %v4266
        %v4805 = vunpack.c.h.b16 %v4266
        %v4806 = vunpack.c.l.b16 %v4267
        %v4807 = vunpack.c.h.b16 %v4267
        %v4808 = vunpack.c.l.b16 %v4268
        %v4809 = vunpack.c.h.b16 %v4268
        %v4810 = vunpack.c.l.b16 %v4269
        %v4811 = vunpack.c.h.b16 %v4269
        %v4812 = vunpack.c.l.b16 %v4270
        %v4813 = vunpack.c.h.b16 %v4270
        %v4814 = vunpack.c.l.b16 %v4271
        %v4815 = vunpack.c.h.b16 %v4271
        %v4816 = vunpack.c.l.b16 %v4272
        %v4817 = vunpack.c.h.b16 %v4272
        %v4818 = vunpack.c.l.b16 %v4273
        %v4819 = vunpack.c.h.b16 %v4273
        %v4820 = vunpack.c.l.b16 %v4274
        %v4821 = vunpack.c.h.b16 %v4274
        %v4822 = vunpack.c.l.b16 %v4275
        %v4823 = vunpack.c.h.b16 %v4275
        %v4824 = vunpack.c.l.b16 %v4276
        %v4825 = vunpack.c.h.b16 %v4276
        %v4826 = vunpack.c.l.b16 %v4277
        %v4827 = vunpack.c.h.b16 %v4277
        %v4828 = vunpack.c.l.b16 %v4278
        %v4829 = vunpack.c.h.b16 %v4278
        %v4830 = vunpack.c.l.b16 %v4279
        %v4831 = vunpack.c.h.b16 %v4279
        %v4832 = vunpack.c.l.b16 %v4280
        %v4833 = vunpack.c.h.b16 %v4280
        %v4834 = vunpack.c.l.b16 %v4281
        %v4835 = vunpack.c.h.b16 %v4281
        %v4836 = vunpack.c.l.b16 %v4282
        %v4837 = vunpack.c.h.b16 %v4282
        %v4838 = vunpack.c.l.b16 %v4283
        %v4839 = vunpack.c.h.b16 %v4283
        %v4840 = vunpack.c.l.b16 %v4284
        %v4841 = vunpack.c.h.b16 %v4284
        %v4842 = vunpack.c.l.b16 %v4285
        %v4843 = vunpack.c.h.b16 %v4285
        %v4844 = vunpack.c.l.b16 %v4286
        %v4845 = vunpack.c.h.b16 %v4286
        %v4846 = vunpack.c.l.b16 %v4287
        %v4847 = vunpack.c.h.b16 %v4287
        %v4848 = vunpack.c.l.b16 %v4288
        %v4849 = vunpack.c.h.b16 %v4288
        %v4850 = vunpack.c.l.b16 %v4289
        %v4851 = vunpack.c.h.b16 %v4289
        %v4852 = vunpack.c.l.b16 %v4290
        %v4853 = vunpack.c.h.b16 %v4290
        %v4854 = vunpack.c.l.b16 %v4291
        %v4855 = vunpack.c.h.b16 %v4291
        %v4856 = vunpack.c.l.b16 %v4292
        %v4857 = vunpack.c.h.b16 %v4292
        %v4858 = vunpack.c.l.b16 %v4293
        %v4859 = vunpack.c.h.b16 %v4293
        %v4860 = vunpack.c.l.b16 %v4294
        %v4861 = vunpack.c.h.b16 %v4294
        %v4862 = vunpack.c.l.b16 %v4295
        %v4863 = vunpack.c.h.b16 %v4295
        %v4864 = vunpack.c.l.b16 %v4296
        %v4865 = vunpack.c.h.b16 %v4296
        %v4866 = vunpack.c.l.b16 %v4297
        %v4867 = vunpack.c.h.b16 %v4297
        %v4868 = vunpack.c.l.b16 %v4298
        %v4869 = vunpack.c.h.b16 %v4298
        %v4870 = vunpack.c.l.b16 %v4299
        %v4871 = vunpack.c.h.b16 %v4299
        %v4872 = vunpack.c.l.b16 %v4300
        %v4873 = vunpack.c.h.b16 %v4300
        %v4874 = vunpack.c.l.b16 %v4301
        %v4875 = vunpack.c.h.b16 %v4301
        %v4876 = vunpack.c.l.b16 %v4302
        %v4877 = vunpack.c.h.b16 %v4302
        %v4878 = vunpack.c.l.b16 %v4303
        %v4879 = vunpack.c.h.b16 %v4303
        %v4880 = vunpack.c.l.b16 %v4304
        %v4881 = vunpack.c.h.b16 %v4304
        %v4882 = vunpack.c.l.b16 %v4305
        %v4883 = vunpack.c.h.b16 %v4305
        %v4884 = vunpack.c.l.b16 %v4306
        %v4885 = vunpack.c.h.b16 %v4306
        %v4886 = vunpack.c.l.b16 %v4307
        %v4887 = vunpack.c.h.b16 %v4307
        %v4888 = vunpack.c.l.b16 %v4308
        %v4889 = vunpack.c.h.b16 %v4308
        %v4890 = vunpack.c.l.b16 %v4309
        %v4891 = vunpack.c.h.b16 %v4309
        %v4892 = vunpack.c.l.b16 %v4310
        %v4893 = vunpack.c.h.b16 %v4310
        %v4894 = vunpack.c.l.b16 %v4311
        %v4895 = vunpack.c.h.b16 %v4311
        %v4896 = vunpack.c.l.b16 %v4312
        %v4897 = vunpack.c.h.b16 %v4312
        %v4898 = vunpack.c.l.b16 %v4313
        %v4899 = vunpack.c.h.b16 %v4313
        %v4900 = vunpack.c.l.b16 %v4314
        %v4901 = vunpack.c.h.b16 %v4314
        %v4902 = vunpack.c.l.b16 %v4315
        %v4903 = vunpack.c.h.b16 %v4315
        %v4904 = vunpack.c.l.b16 %v4316
        %v4905 = vunpack.c.h.b16 %v4316
        %v4906 = vunpack.c.l.b16 %v4317
        %v4907 = vunpack.c.h.b16 %v4317
        %v4908 = vunpack.c.l.b16 %v4318
        %v4909 = vunpack.c.h.b16 %v4318
        %v4910 = vunpack.c.l.b16 %v4319
        %v4911 = vunpack.c.h.b16 %v4319
        %v4912 = vunpack.c.l.b16 %v4320
        %v4913 = vunpack.c.h.b16 %v4320
        %v4914 = vunpack.c.l.b16 %v4321
        %v4915 = vunpack.c.h.b16 %v4321
        %v4916 = vunpack.c.l.b16 %v4322
        %v4917 = vunpack.c.h.b16 %v4322
        %v4918 = vunpack.c.l.b16 %v4323
        %v4919 = vunpack.c.h.b16 %v4323
        %v4920 = vunpack.c.l.b16 %v4324
        %v4921 = vunpack.c.h.b16 %v4324
        %v4922 = vunpack.c.l.b16 %v4325
        %v4923 = vunpack.c.h.b16 %v4325
        %v4924 = vunpack.c.l.b16 %v4326
        %v4925 = vunpack.c.h.b16 %v4326
        %v4926 = vunpack.c.l.b16 %v4327
        %v4927 = vunpack.c.h.b16 %v4327
        %v4928 = vunpack.c.l.b16 %v4328
        %v4929 = vunpack.c.h.b16 %v4328
        %v4930 = vunpack.c.l.b16 %v4329
        %v4931 = vunpack.c.h.b16 %v4329
        %v4932 = vunpack.c.l.b16 %v4330
        %v4933 = vunpack.c.h.b16 %v4330
        %v4934 = vunpack.c.l.b16 %v4331
        %v4935 = vunpack.c.h.b16 %v4331
        %v4936 = vunpack.c.l.b16 %v4332
        %v4937 = vunpack.c.h.b16 %v4332
        %v4938 = vunpack.c.l.b16 %v4333
        %v4939 = vunpack.c.h.b16 %v4333
        %v4940 = vunpack.c.l.b16 %v4334
        %v4941 = vunpack.c.h.b16 %v4334
        %v4942 = vunpack.c.l.b16 %v4335
        %v4943 = vunpack.c.h.b16 %v4335
        %v4944 = vunpack.c.l.b16 %v4336
        %v4945 = vunpack.c.h.b16 %v4336
        %v4946 = vunpack.c.l.b16 %v4337
        %v4947 = vunpack.c.h.b16 %v4337
        %v4948 = vunpack.c.l.b16 %v4338
        %v4949 = vunpack.c.h.b16 %v4338
        %v4950 = vunpack.c.l.b16 %v4339
        %v4951 = vunpack.c.h.b16 %v4339
        %v4952 = vunpack.c.l.b16 %v4340
        %v4953 = vunpack.c.h.b16 %v4340
        %v4954 = vunpack.c.l.b16 %v4341
        %v4955 = vunpack.c.h.b16 %v4341
        %v4956 = vunpack.c.l.b16 %v4342
        %v4957 = vunpack.c.h.b16 %v4342
        %v4958 = vunpack.c.l.b16 %v4343
        %v4959 = vunpack.c.h.b16 %v4343
        %v4960 = vunpack.c.l.b16 %v4344
        %v4961 = vunpack.c.h.b16 %v4344
        %v4962 = vunpack.c.l.b16 %v4345
        %v4963 = vunpack.c.h.b16 %v4345
        %v4964 = vunpack.c.l.b16 %v4346
        %v4965 = vunpack.c.h.b16 %v4346
        %v4966 = vunpack.c.l.b16 %v4347
        %v4967 = vunpack.c.h.b16 %v4347
        %v4968 = vunpack.c.l.b16 %v4348
        %v4969 = vunpack.c.h.b16 %v4348
        %v4970 = vunpack.c.l.b16 %v4349
        %v4971 = vunpack.c.h.b16 %v4349
        %v4972 = vunpack.c.l.b16 %v4350
        %v4973 = vunpack.c.h.b16 %v4350
        %v4974 = vunpack.c.l.b16 %v4351
        %v4975 = vunpack.c.h.b16 %v4351
        %v4976 = vunpack.c.l.b16 %v4352
        %v4977 = vunpack.c.h.b16 %v4352
        %v4978 = vunpack.c.l.b16 %v4353
        %v4979 = vunpack.c.h.b16 %v4353
        %v4980 = vunpack.c.l.b16 %v4354
        %v4981 = vunpack.c.h.b16 %v4354
        %v4982 = vunpack.c.l.b16 %v4355
        %v4983 = vunpack.c.h.b16 %v4355
        %v4984 = vunpack.c.l.b16 %v4356
        %v4985 = vunpack.c.h.b16 %v4356
        %v4986 = vunpack.c.l.b16 %v4357
        %v4987 = vunpack.c.h.b16 %v4357
        %v4988 = vunpack.c.l.b16 %v4358
        %v4989 = vunpack.c.h.b16 %v4358
        %v4990 = vunpack.c.l.b16 %v4359
        %v4991 = vunpack.c.h.b16 %v4359
        %v4992 = vunpack.c.l.b16 %v4360
        %v4993 = vunpack.c.h.b16 %v4360
        %v4994 = vunpack.c.l.b16 %v4361
        %v4995 = vunpack.c.h.b16 %v4361
        %v4996 = vunpack.c.l.b16 %v4362
        %v4997 = vunpack.c.h.b16 %v4362
        %v4998 = vunpack.c.l.b16 %v4363
        %v4999 = vunpack.c.h.b16 %v4363
        %v5000 = vunpack.c.l.b16 %v4364
        %v5001 = vunpack.c.h.b16 %v4364
        %v5002 = vunpack.c.l.b16 %v4365
        %v5003 = vunpack.c.h.b16 %v4365
        %v5004 = vunpack.c.l.b16 %v4366
        %v5005 = vunpack.c.h.b16 %v4366
        %v5006 = vunpack.c.l.b16 %v4367
        %v5007 = vunpack.c.h.b16 %v4367
        %v5008 = vunpack.c.l.b16 %v4368
        %v5009 = vunpack.c.h.b16 %v4368
        %v5010 = vunpack.c.l.b16 %v4369
        %v5011 = vunpack.c.h.b16 %v4369
        %v5012 = vunpack.c.l.b16 %v4370
        %v5013 = vunpack.c.h.b16 %v4370
        %v5014 = vunpack.c.l.b16 %v4371
        %v5015 = vunpack.c.h.b16 %v4371
        %v5016 = vunpack.c.l.b16 %v4372
        %v5017 = vunpack.c.h.b16 %v4372
        %v5018 = vunpack.c.l.b16 %v4373
        %v5019 = vunpack.c.h.b16 %v4373
        %v5020 = vunpack.c.l.b16 %v4374
        %v5021 = vunpack.c.h.b16 %v4374
        %v5022 = vunpack.c.l.b16 %v4375
        %v5023 = vunpack.c.h.b16 %v4375
        %v5024 = vunpack.c.l.b16 %v4376
        %v5025 = vunpack.c.h.b16 %v4376
        %v5026 = vunpack.c.l.b16 %v4377
        %v5027 = vunpack.c.h.b16 %v4377
        %v5028 = vunpack.c.l.b16 %v4378
        %v5029 = vunpack.c.h.b16 %v4378
        %v5030 = vunpack.c.l.b16 %v4379
        %v5031 = vunpack.c.h.b16 %v4379
        %v5032 = vunpack.c.l.b16 %v4380
        %v5033 = vunpack.c.h.b16 %v4380
        %v5034 = vunpack.c.l.b16 %v4381
        %v5035 = vunpack.c.h.b16 %v4381
        %v5036 = vunpack.c.l.b16 %v4382
        %v5037 = vunpack.c.h.b16 %v4382
        %v5038 = vunpack.c.l.b16 %v4383
        %v5039 = vunpack.c.h.b16 %v4383
        %v5040 = vunpack.c.l.b16 %v4384
        %v5041 = vunpack.c.h.b16 %v4384
        %v5042 = vunpack.c.l.b16 %v4385
        %v5043 = vunpack.c.h.b16 %v4385
        %v5044 = vunpack.c.l.b16 %v4386
        %v5045 = vunpack.c.h.b16 %v4386
        %v5046 = vunpack.c.l.b16 %v4387
        %v5047 = vunpack.c.h.b16 %v4387
        %v5048 = vunpack.c.l.b16 %v4388
        %v5049 = vunpack.c.h.b16 %v4388
        %v5050 = vunpack.c.l.b16 %v4389
        %v5051 = vunpack.c.h.b16 %v4389
        %v5052 = vunpack.c.l.b16 %v4390
        %v5053 = vunpack.c.h.b16 %v4390
        %v5054 = vunpack.c.l.b16 %v4391
        %v5055 = vunpack.c.h.b16 %v4391
        %v5056 = vunpack.c.l.b16 %v4392
        %v5057 = vunpack.c.h.b16 %v4392
        %v5058 = vunpack.c.l.b16 %v4393
        %v5059 = vunpack.c.h.b16 %v4393
        %v5060 = vunpack.c.l.b16 %v4394
        %v5061 = vunpack.c.h.b16 %v4394
        %v5062 = vunpack.c.l.b16 %v4395
        %v5063 = vunpack.c.h.b16 %v4395
        %v5064 = vunpack.c.l.b16 %v4396
        %v5065 = vunpack.c.h.b16 %v4396
        %v5066 = vunpack.c.l.b16 %v4397
        %v5067 = vunpack.c.h.b16 %v4397
        %v5068 = vunpack.c.l.b16 %v4398
        %v5069 = vunpack.c.h.b16 %v4398
        %v5070 = vunpack.c.l.b16 %v4399
        %v5071 = vunpack.c.h.b16 %v4399
        %v5072 = vunpack.c.l.b16 %v4400
        %v5073 = vunpack.c.h.b16 %v4400
        %v5074 = vunpack.c.l.b16 %v4401
        %v5075 = vunpack.c.h.b16 %v4401
        %v5076 = vunpack.c.l.b16 %v4402
        %v5077 = vunpack.c.h.b16 %v4402
        %v5078 = vunpack.c.l.b16 %v4403
        %v5079 = vunpack.c.h.b16 %v4403
        %v5080 = vunpack.c.l.b16 %v4404
        %v5081 = vunpack.c.h.b16 %v4404
        %v5082 = vunpack.c.l.b16 %v4405
        %v5083 = vunpack.c.h.b16 %v4405
        %v5084 = vunpack.c.l.b16 %v4406
        %v5085 = vunpack.c.h.b16 %v4406
        %v5086 = vunpack.c.l.b16 %v4407
        %v5087 = vunpack.c.h.b16 %v4407
        %v5088 = vunpack.c.l.b16 %v4408
        %v5089 = vunpack.c.h.b16 %v4408
        %v5090 = vunpack.c.l.b16 %v4409
        %v5091 = vunpack.c.h.b16 %v4409
        %v5092 = vunpack.c.l.b16 %v4410
        %v5093 = vunpack.c.h.b16 %v4410
        %v5094 = vunpack.c.l.b16 %v4411
        %v5095 = vunpack.c.h.b16 %v4411
        %v5096 = vunpack.c.l.b16 %v4412
        %v5097 = vunpack.c.h.b16 %v4412
        %v5098 = vunpack.c.l.b16 %v4413
        %v5099 = vunpack.c.h.b16 %v4413
        %v5100 = vunpack.c.l.b16 %v4414
        %v5101 = vunpack.c.h.b16 %v4414
        %v5102 = vunpack.c.l.b16 %v4415
        %v5103 = vunpack.c.h.b16 %v4415
        %v5104 = vunpack.c.l.b16 %v4416
        %v5105 = vunpack.c.h.b16 %v4416
        %v5106 = vunpack.c.l.b16 %v4417
        %v5107 = vunpack.c.h.b16 %v4417
        %v5108 = vunpack.c.l.b16 %v4418
        %v5109 = vunpack.c.h.b16 %v4418
        %v5110 = vunpack.c.l.b16 %v4419
        %v5111 = vunpack.c.h.b16 %v4419
        %v5112 = vunpack.c.l.b16 %v4420
        %v5113 = vunpack.c.h.b16 %v4420
        %v5114 = vunpack.c.l.b16 %v4421
        %v5115 = vunpack.c.h.b16 %v4421
        %v5116 = vunpack.c.l.b16 %v4422
        %v5117 = vunpack.c.h.b16 %v4422
        %v5118 = vunpack.c.l.b16 %v4423
        %v5119 = vunpack.c.h.b16 %v4423
        %v5120 = vunpack.c.l.b16 %v4424
        %v5121 = vunpack.c.h.b16 %v4424
        %v5122 = vunpack.c.l.b16 %v4425
        %v5123 = vunpack.c.h.b16 %v4425
        %v5124 = vunpack.c.l.b16 %v4426
        %v5125 = vunpack.c.h.b16 %v4426
        %v5126 = vunpack.c.l.b16 %v4427
        %v5127 = vunpack.c.h.b16 %v4427
        %v5128 = vunpack.c.l.b16 %v4428
        %v5129 = vunpack.c.h.b16 %v4428
        %v5130 = vunpack.c.l.b16 %v4429
        %v5131 = vunpack.c.h.b16 %v4429
        %v5132 = vunpack.c.l.b16 %v4430
        %v5133 = vunpack.c.h.b16 %v4430
        %v5134 = vunpack.c.l.b16 %v4431
        %v5135 = vunpack.c.h.b16 %v4431
        %v5136 = vunpack.c.l.b16 %v4432
        %v5137 = vunpack.c.h.b16 %v4432
        %v5138 = vunpack.c.l.b16 %v4433
        %v5139 = vunpack.c.h.b16 %v4433
        %v5140 = vunpack.c.l.b16 %v4434
        %v5141 = vunpack.c.h.b16 %v4434
        %v5142 = vunpack.c.l.b16 %v4435
        %v5143 = vunpack.c.h.b16 %v4435
        %v5144 = vunpack.c.l.b16 %v4436
        %v5145 = vunpack.c.h.b16 %v4436
        %v5146 = vunpack.c.l.b16 %v4437
        %v5147 = vunpack.c.h.b16 %v4437
        %v5148 = vunpack.c.l.b16 %v4438
        %v5149 = vunpack.c.h.b16 %v4438
        %v5150 = vunpack.c.l.b16 %v4439
        %v5151 = vunpack.c.h.b16 %v4439
        %v5152 = vunpack.c.l.b16 %v4440
        %v5153 = vunpack.c.h.b16 %v4440
        %v5154 = vunpack.c.l.b16 %v4441
        %v5155 = vunpack.c.h.b16 %v4441
        %v5156 = vunpack.c.l.b16 %v4442
        %v5157 = vunpack.c.h.b16 %v4442
        %v5158 = vunpack.c.l.b16 %v4443
        %v5159 = vunpack.c.h.b16 %v4443
        %v5160 = vunpack.c.l.b16 %v4444
        %v5161 = vunpack.c.h.b16 %v4444
        %v5162 = vunpack.c.l.b16 %v4445
        %v5163 = vunpack.c.h.b16 %v4445
        %v5164 = vunpack.c.l.b16 %v4446
        %v5165 = vunpack.c.h.b16 %v4446
        %v5166 = vunpack.c.l.b16 %v4447
        %v5167 = vunpack.c.h.b16 %v4447
        %v5168 = vunpack.c.l.b16 %v4448
        %v5169 = vunpack.c.h.b16 %v4448
        %v5170 = vunpack.c.l.b16 %v4449
        %v5171 = vunpack.c.h.b16 %v4449
        %v5172 = vunpack.c.l.b16 %v4450
        %v5173 = vunpack.c.h.b16 %v4450
        %v5174 = vunpack.c.l.b16 %v4451
        %v5175 = vunpack.c.h.b16 %v4451
        %v5176 = vunpack.c.l.b16 %v4452
        %v5177 = vunpack.c.h.b16 %v4452
        %v5178 = vunpack.c.l.b16 %v4453
        %v5179 = vunpack.c.h.b16 %v4453
        %v5180 = vunpack.c.l.b16 %v4454
        %v5181 = vunpack.c.h.b16 %v4454
        %v5182 = vunpack.c.l.b16 %v4455
        %v5183 = vunpack.c.h.b16 %v4455
        %v5184 = vunpack.c.l.b16 %v4456
        %v5185 = vunpack.c.h.b16 %v4456
        %v5186 = vunpack.c.l.b16 %v4457
        %v5187 = vunpack.c.h.b16 %v4457
        %v5188 = vunpack.c.l.b16 %v4458
        %v5189 = vunpack.c.h.b16 %v4458
        %v5190 = vunpack.c.l.b16 %v4459
        %v5191 = vunpack.c.h.b16 %v4459
        %v5192 = vunpack.c.l.b16 %v4460
        %v5193 = vunpack.c.h.b16 %v4460
        %v5194 = vunpack.c.l.b16 %v4461
        %v5195 = vunpack.c.h.b16 %v4461
        %v5196 = vunpack.c.l.b16 %v4462
        %v5197 = vunpack.c.h.b16 %v4462
        %v5198 = vunpack.c.l.b16 %v4463
        %v5199 = vunpack.c.h.b16 %v4463
        %v5200 = vunpack.c.l.b16 %v4464
        %v5201 = vunpack.c.h.b16 %v4464
        %v5202 = vunpack.c.l.b16 %v4465
        %v5203 = vunpack.c.h.b16 %v4465
        %v5204 = vunpack.c.l.b16 %v4466
        %v5205 = vunpack.c.h.b16 %v4466
        %v5206 = vunpack.c.l.b16 %v4467
        %v5207 = vunpack.c.h.b16 %v4467
        %v5208 = vunpack.c.l.b16 %v4468
        %v5209 = vunpack.c.h.b16 %v4468
        %v5210 = vunpack.c.l.b16 %v4469
        %v5211 = vunpack.c.h.b16 %v4469
        %v5212 = vunpack.c.l.b16 %v4470
        %v5213 = vunpack.c.h.b16 %v4470
        %v5214 = vunpack.c.l.b16 %v4471
        %v5215 = vunpack.c.h.b16 %v4471
        %v5216 = vunpack.c.l.b16 %v4472
        %v5217 = vunpack.c.h.b16 %v4472
        %v5218 = vunpack.c.l.b16 %v4473
        %v5219 = vunpack.c.h.b16 %v4473
        %v5220 = vunpack.c.l.b16 %v4474
        %v5221 = vunpack.c.h.b16 %v4474
        %v5222 = vunpack.c.l.b16 %v4475
        %v5223 = vunpack.c.h.b16 %v4475
        %v5224 = vunpack.c.l.b16 %v4476
        %v5225 = vunpack.c.h.b16 %v4476
        %v5226 = vunpack.c.l.b16 %v4477
        %v5227 = vunpack.c.h.b16 %v4477
        %v5228 = vunpack.c.l.b16 %v4478
        %v5229 = vunpack.c.h.b16 %v4478
        %v5230 = vunpack.c.l.b16 %v4479
        %v5231 = vunpack.c.h.b16 %v4479
        %v5232 = vunpack.c.l.b16 %v4480
        %v5233 = vunpack.c.h.b16 %v4480
        %v5234 = vunpack.c.l.b16 %v4481
        %v5235 = vunpack.c.h.b16 %v4481
        %v5236 = vunpack.c.l.b16 %v4482
        %v5237 = vunpack.c.h.b16 %v4482
        %v5238 = vunpack.c.l.b16 %v4483
        %v5239 = vunpack.c.h.b16 %v4483
        %v5240 = vunpack.c.l.b16 %v4484
        %v5241 = vunpack.c.h.b16 %v4484
        %v5242 = vunpack.c.l.b16 %v4485
        %v5243 = vunpack.c.h.b16 %v4485
        %v5244 = vunpack.c.l.b16 %v4486
        %v5245 = vunpack.c.h.b16 %v4486
        %v5246 = vunpack.c.l.b16 %v4487
        %v5247 = vunpack.c.h.b16 %v4487
        %v5248 = vunpack.c.l.b16 %v4488
        %v5249 = vunpack.c.h.b16 %v4488
        %v5250 = vunpack.c.l.b16 %v4489
        %v5251 = vunpack.c.h.b16 %v4489
        %v5252 = vunpack.c.l.b16 %v4490
        %v5253 = vunpack.c.h.b16 %v4490
        %v5254 = vunpack.c.l.b16 %v4491
        %v5255 = vunpack.c.h.b16 %v4491
        %v5256 = vunpack.c.l.b16 %v4492
        %v5257 = vunpack.c.h.b16 %v4492
        %v5258 = vunpack.c.l.b16 %v4493
        %v5259 = vunpack.c.h.b16 %v4493
        %v5260 = vunpack.c.l.b16 %v4494
        %v5261 = vunpack.c.h.b16 %v4494
        %v5262 = vunpack.c.l.b16 %v4495
        %v5263 = vunpack.c.h.b16 %v4495
        %v5264 = vpack.c.b16 %v4756, %v4752
        %v5265 = vpack.c.b16 %v4757, %v4753
        %v5266 = vpack.c.b16 %v4758, %v4754
        %v5267 = vpack.c.b16 %v4759, %v4755
        %v5268 = vpack.c.b16 %v4764, %v4760
        %v5269 = vpack.c.b16 %v4765, %v4761
        %v5270 = vpack.c.b16 %v4766, %v4762
        %v5271 = vpack.c.b16 %v4767, %v4763
        %v5272 = vpack.c.b16 %v4772, %v4768
        %v5273 = vpack.c.b16 %v4773, %v4769
        %v5274 = vpack.c.b16 %v4774, %v4770
        %v5275 = vpack.c.b16 %v4775, %v4771
        %v5276 = vpack.c.b16 %v4780, %v4776
        %v5277 = vpack.c.b16 %v4781, %v4777
        %v5278 = vpack.c.b16 %v4782, %v4778
        %v5279 = vpack.c.b16 %v4783, %v4779
        %v5280 = vpack.c.b16 %v4788, %v4784
        %v5281 = vpack.c.b16 %v4789, %v4785
        %v5282 = vpack.c.b16 %v4790, %v4786
        %v5283 = vpack.c.b16 %v4791, %v4787
        %v5284 = vpack.c.b16 %v4796, %v4792
        %v5285 = vpack.c.b16 %v4797, %v4793
        %v5286 = vpack.c.b16 %v4798, %v4794
        %v5287 = vpack.c.b16 %v4799, %v4795
        %v5288 = vpack.c.b16 %v4804, %v4800
        %v5289 = vpack.c.b16 %v4805, %v4801
        %v5290 = vpack.c.b16 %v4806, %v4802
        %v5291 = vpack.c.b16 %v4807, %v4803
        %v5292 = vpack.c.b16 %v4812, %v4808
        %v5293 = vpack.c.b16 %v4813, %v4809
        %v5294 = vpack.c.b16 %v4814, %v4810
        %v5295 = vpack.c.b16 %v4815, %v4811
        %v5296 = vpack.c.b16 %v4820, %v4816
        %v5297 = vpack.c.b16 %v4821, %v4817
        %v5298 = vpack.c.b16 %v4822, %v4818
        %v5299 = vpack.c.b16 %v4823, %v4819
        %v5300 = vpack.c.b16 %v4828, %v4824
        %v5301 = vpack.c.b16 %v4829, %v4825
        %v5302 = vpack.c.b16 %v4830, %v4826
        %v5303 = vpack.c.b16 %v4831, %v4827
        %v5304 = vpack.c.b16 %v4836, %v4832
        %v5305 = vpack.c.b16 %v4837, %v4833
        %v5306 = vpack.c.b16 %v4838, %v4834
        %v5307 = vpack.c.b16 %v4839, %v4835
        %v5308 = vpack.c.b16 %v4844, %v4840
        %v5309 = vpack.c.b16 %v4845, %v4841
        %v5310 = vpack.c.b16 %v4846, %v4842
        %v5311 = vpack.c.b16 %v4847, %v4843
        %v5312 = vpack.c.b16 %v4852, %v4848
        %v5313 = vpack.c.b16 %v4853, %v4849
        %v5314 = vpack.c.b16 %v4854, %v4850
        %v5315 = vpack.c.b16 %v4855, %v4851
        %v5316 = vpack.c.b16 %v4860, %v4856
        %v5317 = vpack.c.b16 %v4861, %v4857
        %v5318 = vpack.c.b16 %v4862, %v4858
        %v5319 = vpack.c.b16 %v4863, %v4859
        %v5320 = vpack.c.b16 %v4868, %v4864
        %v5321 = vpack.c.b16 %v4869, %v4865
        %v5322 = vpack.c.b16 %v4870, %v4866
        %v5323 = vpack.c.b16 %v4871, %v4867
        %v5324 = vpack.c.b16 %v4876, %v4872
        %v5325 = vpack.c.b16 %v4877, %v4873
        %v5326 = vpack.c.b16 %v4878, %v4874
        %v5327 = vpack.c.b16 %v4879, %v4875
        %v5328 = vpack.c.b16 %v4884, %v4880
        %v5329 = vpack.c.b16 %v4885, %v4881
        %v5330 = vpack.c.b16 %v4886, %v4882
        %v5331 = vpack.c.b16 %v4887, %v4883
        %v5332 = vpack.c.b16 %v4892, %v4888
        %v5333 = vpack.c.b16 %v4893, %v4889
        %v5334 = vpack.c.b16 %v4894, %v4890
        %v5335 = vpack.c.b16 %v4895, %v4891
        %v5336 = vpack.c.b16 %v4900, %v4896
        %v5337 = vpack.c.b16 %v4901, %v4897
        %v5338 = vpack.c.b16 %v4902, %v4898
        %v5339 = vpack.c.b16 %v4903, %v4899
        %v5340 = vpack.c.b16 %v4908, %v4904
        %v5341 = vpack.c.b16 %v4909, %v4905
        %v5342 = vpack.c.b16 %v4910, %v4906
        %v5343 = vpack.c.b16 %v4911, %v4907
        %v5344 = vpack.c.b16 %v4916, %v4912
        %v5345 = vpack.c.b16 %v4917, %v4913
        %v5346 = vpack.c.b16 %v4918, %v4914
        %v5347 = vpack.c.b16 %v4919, %v4915
        %v5348 = vpack.c.b16 %v4924, %v4920
        %v5349 = vpack.c.b16 %v4925, %v4921
        %v5350 = vpack.c.b16 %v4926, %v4922
        %v5351 = vpack.c.b16 %v4927, %v4923
        %v5352 = vpack.c.b16 %v4932, %v4928
        %v5353 = vpack.c.b16 %v4933, %v4929
        %v5354 = vpack.c.b16 %v4934, %v4930
        %v5355 = vpack.c.b16 %v4935, %v4931
        %v5356 = vpack.c.b16 %v4940, %v4936
        %v5357 = vpack.c.b16 %v4941, %v4937
        %v5358 = vpack.c.b16 %v4942, %v4938
        %v5359 = vpack.c.b16 %v4943, %v4939
        %v5360 = vpack.c.b16 %v4948, %v4944
        %v5361 = vpack.c.b16 %v4949, %v4945
        %v5362 = vpack.c.b16 %v4950, %v4946
        %v5363 = vpack.c.b16 %v4951, %v4947
        %v5364 = vpack.c.b16 %v4956, %v4952
        %v5365 = vpack.c.b16 %v4957, %v4953
        %v5366 = vpack.c.b16 %v4958, %v4954
        %v5367 = vpack.c.b16 %v4959, %v4955
        %v5368 = vpack.c.b16 %v4964, %v4960
        %v5369 = vpack.c.b16 %v4965, %v4961
        %v5370 = vpack.c.b16 %v4966, %v4962
        %v5371 = vpack.c.b16 %v4967, %v4963
        %v5372 = vpack.c.b16 %v4972, %v4968
        %v5373 = vpack.c.b16 %v4973, %v4969
        %v5374 = vpack.c.b16 %v4974, %v4970
        %v5375 = vpack.c.b16 %v4975, %v4971
        %v5376 = vpack.c.b16 %v4980, %v4976
        %v5377 = vpack.c.b16 %v4981, %v4977
        %v5378 = vpack.c.b16 %v4982, %v4978
        %v5379 = vpack.c.b16 %v4983, %v4979
        %v5380 = vpack.c.b16 %v4988, %v4984
        %v5381 = vpack.c.b16 %v4989, %v4985
        %v5382 = vpack.c.b16 %v4990, %v4986
        %v5383 = vpack.c.b16 %v4991, %v4987
        %v5384 = vpack.c.b16 %v4996, %v4992
        %v5385 = vpack.c.b16 %v4997, %v4993
        %v5386 = vpack.c.b16 %v4998, %v4994
        %v5387 = vpack.c.b16 %v4999, %v4995
        %v5388 = vpack.c.b16 %v5004, %v5000
        %v5389 = vpack.c.b16 %v5005, %v5001
        %v5390 = vpack.c.b16 %v5006, %v5002
        %v5391 = vpack.c.b16 %v5007, %v5003
        %v5392 = vpack.c.b16 %v5012, %v5008
        %v5393 = vpack.c.b16 %v5013, %v5009
        %v5394 = vpack.c.b16 %v5014, %v5010
        %v5395 = vpack.c.b16 %v5015, %v5011
        %v5396 = vpack.c.b16 %v5020, %v5016
        %v5397 = vpack.c.b16 %v5021, %v5017
        %v5398 = vpack.c.b16 %v5022, %v5018
        %v5399 = vpack.c.b16 %v5023, %v5019
        %v5400 = vpack.c.b16 %v5028, %v5024
        %v5401 = vpack.c.b16 %v5029, %v5025
        %v5402 = vpack.c.b16 %v5030, %v5026
        %v5403 = vpack.c.b16 %v5031, %v5027
        %v5404 = vpack.c.b16 %v5036, %v5032
        %v5405 = vpack.c.b16 %v5037, %v5033
        %v5406 = vpack.c.b16 %v5038, %v5034
        %v5407 = vpack.c.b16 %v5039, %v5035
        %v5408 = vpack.c.b16 %v5044, %v5040
        %v5409 = vpack.c.b16 %v5045, %v5041
        %v5410 = vpack.c.b16 %v5046, %v5042
        %v5411 = vpack.c.b16 %v5047, %v5043
        %v5412 = vpack.c.b16 %v5052, %v5048
        %v5413 = vpack.c.b16 %v5053, %v5049
        %v5414 = vpack.c.b16 %v5054, %v5050
        %v5415 = vpack.c.b16 %v5055, %v5051
        %v5416 = vpack.c.b16 %v5060, %v5056
        %v5417 = vpack.c.b16 %v5061, %v5057
        %v5418 = vpack.c.b16 %v5062, %v5058
        %v5419 = vpack.c.b16 %v5063, %v5059
        %v5420 = vpack.c.b16 %v5068, %v5064
        %v5421 = vpack.c.b16 %v5069, %v5065
        %v5422 = vpack.c.b16 %v5070, %v5066
        %v5423 = vpack.c.b16 %v5071, %v5067
        %v5424 = vpack.c.b16 %v5076, %v5072
        %v5425 = vpack.c.b16 %v5077, %v5073
        %v5426 = vpack.c.b16 %v5078, %v5074
        %v5427 = vpack.c.b16 %v5079, %v5075
        %v5428 = vpack.c.b16 %v5084, %v5080
        %v5429 = vpack.c.b16 %v5085, %v5081
        %v5430 = vpack.c.b16 %v5086, %v5082
        %v5431 = vpack.c.b16 %v5087, %v5083
        %v5432 = vpack.c.b16 %v5092, %v5088
        %v5433 = vpack.c.b16 %v5093, %v5089
        %v5434 = vpack.c.b16 %v5094, %v5090
        %v5435 = vpack.c.b16 %v5095, %v5091
        %v5436 = vpack.c.b16 %v5100, %v5096
        %v5437 = vpack.c.b16 %v5101, %v5097
        %v5438 = vpack.c.b16 %v5102, %v5098
        %v5439 = vpack.c.b16 %v5103, %v5099
        %v5440 = vpack.c.b16 %v5108, %v5104
        %v5441 = vpack.c.b16 %v5109, %v5105
        %v5442 = vpack.c.b16 %v5110, %v5106
        %v5443 = vpack.c.b16 %v5111, %v5107
        %v5444 = vpack.c.b16 %v5116, %v5112
        %v5445 = vpack.c.b16 %v5117, %v5113
        %v5446 = vpack.c.b16 %v5118, %v5114
        %v5447 = vpack.c.b16 %v5119, %v5115
        %v5448 = vpack.c.b16 %v5124, %v5120
        %v5449 = vpack.c.b16 %v5125, %v5121
        %v5450 = vpack.c.b16 %v5126, %v5122
        %v5451 = vpack.c.b16 %v5127, %v5123
        %v5452 = vpack.c.b16 %v5132, %v5128
        %v5453 = vpack.c.b16 %v5133, %v5129
        %v5454 = vpack.c.b16 %v5134, %v5130
        %v5455 = vpack.c.b16 %v5135, %v5131
        %v5456 = vpack.c.b16 %v5140, %v5136
        %v5457 = vpack.c.b16 %v5141, %v5137
        %v5458 = vpack.c.b16 %v5142, %v5138
        %v5459 = vpack.c.b16 %v5143, %v5139
        %v5460 = vpack.c.b16 %v5148, %v5144
        %v5461 = vpack.c.b16 %v5149, %v5145
        %v5462 = vpack.c.b16 %v5150, %v5146
        %v5463 = vpack.c.b16 %v5151, %v5147
        %v5464 = vpack.c.b16 %v5156, %v5152
        %v5465 = vpack.c.b16 %v5157, %v5153
        %v5466 = vpack.c.b16 %v5158, %v5154
        %v5467 = vpack.c.b16 %v5159, %v5155
        %v5468 = vpack.c.b16 %v5164, %v5160
        %v5469 = vpack.c.b16 %v5165, %v5161
        %v5470 = vpack.c.b16 %v5166, %v5162
        %v5471 = vpack.c.b16 %v5167, %v5163
        %v5472 = vpack.c.b16 %v5172, %v5168
        %v5473 = vpack.c.b16 %v5173, %v5169
        %v5474 = vpack.c.b16 %v5174, %v5170
        %v5475 = vpack.c.b16 %v5175, %v5171
        %v5476 = vpack.c.b16 %v5180, %v5176
        %v5477 = vpack.c.b16 %v5181, %v5177
        %v5478 = vpack.c.b16 %v5182, %v5178
        %v5479 = vpack.c.b16 %v5183, %v5179
        %v5480 = vpack.c.b16 %v5188, %v5184
        %v5481 = vpack.c.b16 %v5189, %v5185
        %v5482 = vpack.c.b16 %v5190, %v5186
        %v5483 = vpack.c.b16 %v5191, %v5187
        %v5484 = vpack.c.b16 %v5196, %v5192
        %v5485 = vpack.c.b16 %v5197, %v5193
        %v5486 = vpack.c.b16 %v5198, %v5194
        %v5487 = vpack.c.b16 %v5199, %v5195
        %v5488 = vpack.c.b16 %v5204, %v5200
        %v5489 = vpack.c.b16 %v5205, %v5201
        %v5490 = vpack.c.b16 %v5206, %v5202
        %v5491 = vpack.c.b16 %v5207, %v5203
        %v5492 = vpack.c.b16 %v5212, %v5208
        %v5493 = vpack.c.b16 %v5213, %v5209
        %v5494 = vpack.c.b16 %v5214, %v5210
        %v5495 = vpack.c.b16 %v5215, %v5211
        %v5496 = vpack.c.b16 %v5220, %v5216
        %v5497 = vpack.c.b16 %v5221, %v5217
        %v5498 = vpack.c.b16 %v5222, %v5218
        %v5499 = vpack.c.b16 %v5223, %v5219
        %v5500 = vpack.c.b16 %v5228, %v5224
        %v5501 = vpack.c.b16 %v5229, %v5225
        %v5502 = vpack.c.b16 %v5230, %v5226
        %v5503 = vpack.c.b16 %v5231, %v5227
        %v5504 = vpack.c.b16 %v5236, %v5232
        %v5505 = vpack.c.b16 %v5237, %v5233
        %v5506 = vpack.c.b16 %v5238, %v5234
        %v5507 = vpack.c.b16 %v5239, %v5235
        %v5508 = vpack.c.b16 %v5244, %v5240
        %v5509 = vpack.c.b16 %v5245, %v5241
        %v5510 = vpack.c.b16 %v5246, %v5242
        %v5511 = vpack.c.b16 %v5247, %v5243
        %v5512 = vpack.c.b16 %v5252, %v5248
        %v5513 = vpack.c.b16 %v5253, %v5249
        %v5514 = vpack.c.b16 %v5254, %v5250
        %v5515 = vpack.c.b16 %v5255, %v5251
        %v5516 = vpack.c.b16 %v5260, %v5256
        %v5517 = vpack.c.b16 %v5261, %v5257
        %v5518 = vpack.c.b16 %v5262, %v5258
        %v5519 = vpack.c.b16 %v5263, %v5259
        %5776 = vmatprep.subr.bf16.mxu0 %v5265
        %5777 = vmatpush1.bf16.msra.mxu0 %v5264
        %5778 = vmatprep.subr.bf16.mxu0 %v5269
        %5779 = vmatpush1.bf16.msra.mxu0 %v5268
        %5780 = vmatprep.subr.bf16.mxu0 %v5273
        %5781 = vmatpush1.bf16.msra.mxu0 %v5272
        %5782 = vmatprep.subr.bf16.mxu0 %v5277
        %5783 = vmatpush1.bf16.msra.mxu0 %v5276
        %5784 = vmatprep.subr.bf16.mxu0 %v5281
        %5785 = vmatpush1.bf16.msra.mxu0 %v5280
        %5786 = vmatprep.subr.bf16.mxu0 %v5285
        %5787 = vmatpush1.bf16.msra.mxu0 %v5284
        %5788 = vmatprep.subr.bf16.mxu0 %v5289
        %5789 = vmatpush1.bf16.msra.mxu0 %v5288
        %5790 = vmatprep.subr.bf16.mxu0 %v5293
        %5791 = vmatpush1.bf16.msra.mxu0 %v5292
        %5792 = vmatprep.subr.bf16.mxu0 %v5297
        %5793 = vmatpush1.bf16.msra.mxu0 %v5296
        %5794 = vmatprep.subr.bf16.mxu0 %v5301
        %5795 = vmatpush1.bf16.msra.mxu0 %v5300
        %5796 = vmatprep.subr.bf16.mxu0 %v5305
        %5797 = vmatpush1.bf16.msra.mxu0 %v5304
        %5798 = vmatprep.subr.bf16.mxu0 %v5309
        %5799 = vmatpush1.bf16.msra.mxu0 %v5308
        %5800 = vmatprep.subr.bf16.mxu0 %v5313
        %5801 = vmatpush1.bf16.msra.mxu0 %v5312
        %5802 = vmatprep.subr.bf16.mxu0 %v5317
        %5803 = vmatpush1.bf16.msra.mxu0 %v5316
        %5804 = vmatprep.subr.bf16.mxu0 %v5321
        %5805 = vmatpush1.bf16.msra.mxu0 %v5320
        %5806 = vmatprep.subr.bf16.mxu0 %v5325
        %5807 = vmatpush1.bf16.msra.mxu0 %v5324
        %5808 = vmatprep.mubr.bf16.mxu0 %v4225
        %5809 = vmatmul.mubr.bf16.gmra.mrb[0].mxu0 %v4224
        %v5810 = vpop.f32.mrb[0].mxu0
        %v5811 = vadd.f32 0.0, %v5810
        %v5812 = vpop.f32.mrb[0].mxu0
        %v5813 = vadd.f32 0.0, %v5812
        %v5814 = vpop.f32.mrb[0].mxu0
        %v5815 = vadd.f32 0.0, %v5814
        %v5816 = vpop.f32.mrb[0].mxu0
        %v5817 = vadd.f32 0.0, %v5816
        %5818 = vdwg.mxu0
        %5819 = vmatprep.subr.bf16.mxu0 %v5329
        %5820 = vmatpush1.bf16.msra.mxu0 %v5328
        %5821 = vmatprep.subr.bf16.mxu0 %v5333
        %5822 = vmatpush1.bf16.msra.mxu0 %v5332
        %5823 = vmatprep.subr.bf16.mxu0 %v5337
        %5824 = vmatpush1.bf16.msra.mxu0 %v5336
        %5825 = vmatprep.subr.bf16.mxu0 %v5341
        %5826 = vmatpush1.bf16.msra.mxu0 %v5340
        %5827 = vmatprep.subr.bf16.mxu0 %v5345
        %5828 = vmatpush1.bf16.msra.mxu0 %v5344
        %5829 = vmatprep.subr.bf16.mxu0 %v5349
        %5830 = vmatpush1.bf16.msra.mxu0 %v5348
        %5831 = vmatprep.subr.bf16.mxu0 %v5353
        %5832 = vmatpush1.bf16.msra.mxu0 %v5352
        %5833 = vmatprep.subr.bf16.mxu0 %v5357
        %5834 = vmatpush1.bf16.msra.mxu0 %v5356
        %5835 = vmatprep.subr.bf16.mxu0 %v5361
        %5836 = vmatpush1.bf16.msra.mxu0 %v5360
        %5837 = vmatprep.subr.bf16.mxu0 %v5365
        %5838 = vmatpush1.bf16.msra.mxu0 %v5364
        %5839 = vmatprep.subr.bf16.mxu0 %v5369
        %5840 = vmatpush1.bf16.msra.mxu0 %v5368
        %5841 = vmatprep.subr.bf16.mxu0 %v5373
        %5842 = vmatpush1.bf16.msra.mxu0 %v5372
        %5843 = vmatprep.subr.bf16.mxu0 %v5377
        %5844 = vmatpush1.bf16.msra.mxu0 %v5376
        %5845 = vmatprep.subr.bf16.mxu0 %v5381
        %5846 = vmatpush1.bf16.msra.mxu0 %v5380
        %5847 = vmatprep.subr.bf16.mxu0 %v5385
        %5848 = vmatpush1.bf16.msra.mxu0 %v5384
        %5849 = vmatprep.subr.bf16.mxu0 %v5389
        %5850 = vmatpush1.bf16.msra.mxu0 %v5388
        %5851 = vmatprep.mubr.bf16.mxu0 %v4227
        %5852 = vmatmul.mubr.bf16.gmra.mrb[0].mxu0 %v4226
        %v5853 = vpop.f32.mrb[0].mxu0
        %v5854 = vadd.f32 %v5811, %v5853
        %v5855 = vpop.f32.mrb[0].mxu0
        %v5856 = vadd.f32 %v5813, %v5855
        %v5857 = vpop.f32.mrb[0].mxu0
        %v5858 = vadd.f32 %v5815, %v5857
        %v5859 = vpop.f32.mrb[0].mxu0
        %v5860 = vadd.f32 %v5817, %v5859
        %5861 = vdwg.mxu0
        %5862 = vmatprep.subr.bf16.mxu0 %v5393
        %5863 = vmatpush1.bf16.msra.mxu0 %v5392
        %5864 = vmatprep.subr.bf16.mxu0 %v5397
        %5865 = vmatpush1.bf16.msra.mxu0 %v5396
        %5866 = vmatprep.subr.bf16.mxu0 %v5401
        %5867 = vmatpush1.bf16.msra.mxu0 %v5400
        %5868 = vmatprep.subr.bf16.mxu0 %v5405
        %5869 = vmatpush1.bf16.msra.mxu0 %v5404
        %5870 = vmatprep.subr.bf16.mxu0 %v5409
        %5871 = vmatpush1.bf16.msra.mxu0 %v5408
        %5872 = vmatprep.subr.bf16.mxu0 %v5413
        %5873 = vmatpush1.bf16.msra.mxu0 %v5412
        %5874 = vmatprep.subr.bf16.mxu0 %v5417
        %5875 = vmatpush1.bf16.msra.mxu0 %v5416
        %5876 = vmatprep.subr.bf16.mxu0 %v5421
        %5877 = vmatpush1.bf16.msra.mxu0 %v5420
        %5878 = vmatprep.subr.bf16.mxu0 %v5425
        %5879 = vmatpush1.bf16.msra.mxu0 %v5424
        %5880 = vmatprep.subr.bf16.mxu0 %v5429
        %5881 = vmatpush1.bf16.msra.mxu0 %v5428
        %5882 = vmatprep.subr.bf16.mxu0 %v5433
        %5883 = vmatpush1.bf16.msra.mxu0 %v5432
        %5884 = vmatprep.subr.bf16.mxu0 %v5437
        %5885 = vmatpush1.bf16.msra.mxu0 %v5436
        %5886 = vmatprep.subr.bf16.mxu0 %v5441
        %5887 = vmatpush1.bf16.msra.mxu0 %v5440
        %5888 = vmatprep.subr.bf16.mxu0 %v5445
        %5889 = vmatpush1.bf16.msra.mxu0 %v5444
        %5890 = vmatprep.subr.bf16.mxu0 %v5449
        %5891 = vmatpush1.bf16.msra.mxu0 %v5448
        %5892 = vmatprep.subr.bf16.mxu0 %v5453
        %5893 = vmatpush1.bf16.msra.mxu0 %v5452
        %5894 = vmatprep.mubr.bf16.mxu0 %v4229
        %5895 = vmatmul.mubr.bf16.gmra.mrb[0].mxu0 %v4228
        %v5896 = vpop.f32.mrb[0].mxu0
        %v5897 = vadd.f32 %v5854, %v5896
        %v5898 = vpop.f32.mrb[0].mxu0
        %v5899 = vadd.f32 %v5856, %v5898
        %v5900 = vpop.f32.mrb[0].mxu0
        %v5901 = vadd.f32 %v5858, %v5900
        %v5902 = vpop.f32.mrb[0].mxu0
        %v5903 = vadd.f32 %v5860, %v5902
        %5904 = vdwg.mxu0
        %5905 = vmatprep.subr.bf16.mxu0 %v5457
        %5906 = vmatpush1.bf16.msra.mxu0 %v5456
        %5907 = vmatprep.subr.bf16.mxu0 %v5461
        %5908 = vmatpush1.bf16.msra.mxu0 %v5460
        %5909 = vmatprep.subr.bf16.mxu0 %v5465
        %5910 = vmatpush1.bf16.msra.mxu0 %v5464
        %5911 = vmatprep.subr.bf16.mxu0 %v5469
        %5912 = vmatpush1.bf16.msra.mxu0 %v5468
        %5913 = vmatprep.subr.bf16.mxu0 %v5473
        %5914 = vmatpush1.bf16.msra.mxu0 %v5472
        %5915 = vmatprep.subr.bf16.mxu0 %v5477
        %5916 = vmatpush1.bf16.msra.mxu0 %v5476
        %5917 = vmatprep.subr.bf16.mxu0 %v5481
        %5918 = vmatpush1.bf16.msra.mxu0 %v5480
        %5919 = vmatprep.subr.bf16.mxu0 %v5485
        %5920 = vmatpush1.bf16.msra.mxu0 %v5484
        %5921 = vmatprep.subr.bf16.mxu0 %v5489
        %5922 = vmatpush1.bf16.msra.mxu0 %v5488
        %5923 = vmatprep.subr.bf16.mxu0 %v5493
        %5924 = vmatpush1.bf16.msra.mxu0 %v5492
        %5925 = vmatprep.subr.bf16.mxu0 %v5497
        %5926 = vmatpush1.bf16.msra.mxu0 %v5496
        %5927 = vmatprep.subr.bf16.mxu0 %v5501
        %5928 = vmatpush1.bf16.msra.mxu0 %v5500
        %5929 = vmatprep.subr.bf16.mxu0 %v5505
        %5930 = vmatpush1.bf16.msra.mxu0 %v5504
        %5931 = vmatprep.subr.bf16.mxu0 %v5509
        %5932 = vmatpush1.bf16.msra.mxu0 %v5508
        %5933 = vmatprep.subr.bf16.mxu0 %v5513
        %5934 = vmatpush1.bf16.msra.mxu0 %v5512
        %5935 = vmatprep.subr.bf16.mxu0 %v5517
        %5936 = vmatpush1.bf16.msra.mxu0 %v5516
        %5937 = vmatprep.mubr.bf16.mxu0 %v4231
        %5938 = vmatmul.mubr.bf16.gmra.mrb[0].mxu0 %v4230
        %v5939 = vpop.f32.mrb[0].mxu0
        %v5940 = vadd.f32 %v5897, %v5939
        %v5941 = vpop.f32.mrb[0].mxu0
        %v5942 = vadd.f32 %v5899, %v5941
        %v5943 = vpop.f32.mrb[0].mxu0
        %v5944 = vadd.f32 %v5901, %v5943
        %v5945 = vpop.f32.mrb[0].mxu0
        %v5946 = vadd.f32 %v5903, %v5945
        %5947 = vdwg.mxu0
        %5948 = vmatprep.subr.bf16.mxu0 %v5267
        %5949 = vmatpush1.bf16.msra.mxu0 %v5266
        %5950 = vmatprep.subr.bf16.mxu0 %v5271
        %5951 = vmatpush1.bf16.msra.mxu0 %v5270
        %5952 = vmatprep.subr.bf16.mxu0 %v5275
        %5953 = vmatpush1.bf16.msra.mxu0 %v5274
        %5954 = vmatprep.subr.bf16.mxu0 %v5279
        %5955 = vmatpush1.bf16.msra.mxu0 %v5278
        %5956 = vmatprep.subr.bf16.mxu0 %v5283
        %5957 = vmatpush1.bf16.msra.mxu0 %v5282
        %5958 = vmatprep.subr.bf16.mxu0 %v5287
        %5959 = vmatpush1.bf16.msra.mxu0 %v5286
        %5960 = vmatprep.subr.bf16.mxu0 %v5291
        %5961 = vmatpush1.bf16.msra.mxu0 %v5290
        %5962 = vmatprep.subr.bf16.mxu0 %v5295
        %5963 = vmatpush1.bf16.msra.mxu0 %v5294
        %5964 = vmatprep.subr.bf16.mxu0 %v5299
        %5965 = vmatpush1.bf16.msra.mxu0 %v5298
        %5966 = vmatprep.subr.bf16.mxu0 %v5303
        %5967 = vmatpush1.bf16.msra.mxu0 %v5302
        %5968 = vmatprep.subr.bf16.mxu0 %v5307
        %5969 = vmatpush1.bf16.msra.mxu0 %v5306
        %5970 = vmatprep.subr.bf16.mxu0 %v5311
        %5971 = vmatpush1.bf16.msra.mxu0 %v5310
        %5972 = vmatprep.subr.bf16.mxu0 %v5315
        %5973 = vmatpush1.bf16.msra.mxu0 %v5314
        %5974 = vmatprep.subr.bf16.mxu0 %v5319
        %5975 = vmatpush1.bf16.msra.mxu0 %v5318
        %5976 = vmatprep.subr.bf16.mxu0 %v5323
        %5977 = vmatpush1.bf16.msra.mxu0 %v5322
        %5978 = vmatprep.subr.bf16.mxu0 %v5327
        %5979 = vmatpush1.bf16.msra.mxu0 %v5326
        %5980 = vmatprep.mubr.bf16.mxu0 %v4225
        %5981 = vmatmul.mubr.bf16.gmra.mrb[0].mxu0 %v4224
        %v5982 = vpop.f32.mrb[0].mxu0
        %v5983 = vadd.f32 0.0, %v5982
        %v5984 = vpop.f32.mrb[0].mxu0
        %v5985 = vadd.f32 0.0, %v5984
        %v5986 = vpop.f32.mrb[0].mxu0
        %v5987 = vadd.f32 0.0, %v5986
        %v5988 = vpop.f32.mrb[0].mxu0
        %v5989 = vadd.f32 0.0, %v5988
        %5990 = vdwg.mxu0
        %5991 = vmatprep.subr.bf16.mxu0 %v5331
        %5992 = vmatpush1.bf16.msra.mxu0 %v5330
        %5993 = vmatprep.subr.bf16.mxu0 %v5335
        %5994 = vmatpush1.bf16.msra.mxu0 %v5334
        %5995 = vmatprep.subr.bf16.mxu0 %v5339
        %5996 = vmatpush1.bf16.msra.mxu0 %v5338
        %5997 = vmatprep.subr.bf16.mxu0 %v5343
        %5998 = vmatpush1.bf16.msra.mxu0 %v5342
        %5999 = vmatprep.subr.bf16.mxu0 %v5347
        %6000 = vmatpush1.bf16.msra.mxu0 %v5346
        %6001 = vmatprep.subr.bf16.mxu0 %v5351
        %6002 = vmatpush1.bf16.msra.mxu0 %v5350
        %6003 = vmatprep.subr.bf16.mxu0 %v5355
        %6004 = vmatpush1.bf16.msra.mxu0 %v5354
        %6005 = vmatprep.subr.bf16.mxu0 %v5359
        %6006 = vmatpush1.bf16.msra.mxu0 %v5358
        %6007 = vmatprep.subr.bf16.mxu0 %v5363
        %6008 = vmatpush1.bf16.msra.mxu0 %v5362
        %6009 = vmatprep.subr.bf16.mxu0 %v5367
        %6010 = vmatpush1.bf16.msra.mxu0 %v5366
        %6011 = vmatprep.subr.bf16.mxu0 %v5371
        %6012 = vmatpush1.bf16.msra.mxu0 %v5370
        %6013 = vmatprep.subr.bf16.mxu0 %v5375
        %6014 = vmatpush1.bf16.msra.mxu0 %v5374
        %6015 = vmatprep.subr.bf16.mxu0 %v5379
        %6016 = vmatpush1.bf16.msra.mxu0 %v5378
        %6017 = vmatprep.subr.bf16.mxu0 %v5383
        %6018 = vmatpush1.bf16.msra.mxu0 %v5382
        %6019 = vmatprep.subr.bf16.mxu0 %v5387
        %6020 = vmatpush1.bf16.msra.mxu0 %v5386
        %6021 = vmatprep.subr.bf16.mxu0 %v5391
        %6022 = vmatpush1.bf16.msra.mxu0 %v5390
        %6023 = vmatprep.mubr.bf16.mxu0 %v4227
        %6024 = vmatmul.mubr.bf16.gmra.mrb[0].mxu0 %v4226
        %v6025 = vpop.f32.mrb[0].mxu0
        %v6026 = vadd.f32 %v5983, %v6025
        %v6027 = vpop.f32.mrb[0].mxu0
        %v6028 = vadd.f32 %v5985, %v6027
        %v6029 = vpop.f32.mrb[0].mxu0
        %v6030 = vadd.f32 %v5987, %v6029
        %v6031 = vpop.f32.mrb[0].mxu0
        %v6032 = vadd.f32 %v5989, %v6031
        %6033 = vdwg.mxu0
        %6034 = vmatprep.subr.bf16.mxu0 %v5395
        %6035 = vmatpush1.bf16.msra.mxu0 %v5394
        %6036 = vmatprep.subr.bf16.mxu0 %v5399
        %6037 = vmatpush1.bf16.msra.mxu0 %v5398
        %6038 = vmatprep.subr.bf16.mxu0 %v5403
        %6039 = vmatpush1.bf16.msra.mxu0 %v5402
        %6040 = vmatprep.subr.bf16.mxu0 %v5407
        %6041 = vmatpush1.bf16.msra.mxu0 %v5406
        %6042 = vmatprep.subr.bf16.mxu0 %v5411
        %6043 = vmatpush1.bf16.msra.mxu0 %v5410
        %6044 = vmatprep.subr.bf16.mxu0 %v5415
        %6045 = vmatpush1.bf16.msra.mxu0 %v5414
        %6046 = vmatprep.subr.bf16.mxu0 %v5419
        %6047 = vmatpush1.bf16.msra.mxu0 %v5418
        %6048 = vmatprep.subr.bf16.mxu0 %v5423
        %6049 = vmatpush1.bf16.msra.mxu0 %v5422
        %6050 = vmatprep.subr.bf16.mxu0 %v5427
        %6051 = vmatpush1.bf16.msra.mxu0 %v5426
        %6052 = vmatprep.subr.bf16.mxu0 %v5431
        %6053 = vmatpush1.bf16.msra.mxu0 %v5430
        %6054 = vmatprep.subr.bf16.mxu0 %v5435
        %6055 = vmatpush1.bf16.msra.mxu0 %v5434
        %6056 = vmatprep.subr.bf16.mxu0 %v5439
        %6057 = vmatpush1.bf16.msra.mxu0 %v5438
        %6058 = vmatprep.subr.bf16.mxu0 %v5443
        %6059 = vmatpush1.bf16.msra.mxu0 %v5442
        %6060 = vmatprep.subr.bf16.mxu0 %v5447
        %6061 = vmatpush1.bf16.msra.mxu0 %v5446
        %6062 = vmatprep.subr.bf16.mxu0 %v5451
        %6063 = vmatpush1.bf16.msra.mxu0 %v5450
        %6064 = vmatprep.subr.bf16.mxu0 %v5455
        %6065 = vmatpush1.bf16.msra.mxu0 %v5454
        %6066 = vmatprep.mubr.bf16.mxu0 %v4229
        %6067 = vmatmul.mubr.bf16.gmra.mrb[0].mxu0 %v4228
        %v6068 = vpop.f32.mrb[0].mxu0
        %v6069 = vadd.f32 %v6026, %v6068
        %v6070 = vpop.f32.mrb[0].mxu0
        %v6071 = vadd.f32 %v6028, %v6070
        %v6072 = vpop.f32.mrb[0].mxu0
        %v6073 = vadd.f32 %v6030, %v6072
        %v6074 = vpop.f32.mrb[0].mxu0
        %v6075 = vadd.f32 %v6032, %v6074
        %6076 = vdwg.mxu0
        %6077 = vmatprep.subr.bf16.mxu0 %v5459
        %6078 = vmatpush1.bf16.msra.mxu0 %v5458
        %6079 = vmatprep.subr.bf16.mxu0 %v5463
        %6080 = vmatpush1.bf16.msra.mxu0 %v5462
        %6081 = vmatprep.subr.bf16.mxu0 %v5467
        %6082 = vmatpush1.bf16.msra.mxu0 %v5466
        %6083 = vmatprep.subr.bf16.mxu0 %v5471
        %6084 = vmatpush1.bf16.msra.mxu0 %v5470
        %6085 = vmatprep.subr.bf16.mxu0 %v5475
        %6086 = vmatpush1.bf16.msra.mxu0 %v5474
        %6087 = vmatprep.subr.bf16.mxu0 %v5479
        %6088 = vmatpush1.bf16.msra.mxu0 %v5478
        %6089 = vmatprep.subr.bf16.mxu0 %v5483
        %6090 = vmatpush1.bf16.msra.mxu0 %v5482
        %6091 = vmatprep.subr.bf16.mxu0 %v5487
        %6092 = vmatpush1.bf16.msra.mxu0 %v5486
        %6093 = vmatprep.subr.bf16.mxu0 %v5491
        %6094 = vmatpush1.bf16.msra.mxu0 %v5490
        %6095 = vmatprep.subr.bf16.mxu0 %v5495
        %6096 = vmatpush1.bf16.msra.mxu0 %v5494
        %6097 = vmatprep.subr.bf16.mxu0 %v5499
        %6098 = vmatpush1.bf16.msra.mxu0 %v5498
        %6099 = vmatprep.subr.bf16.mxu0 %v5503
        %6100 = vmatpush1.bf16.msra.mxu0 %v5502
        %6101 = vmatprep.subr.bf16.mxu0 %v5507
        %6102 = vmatpush1.bf16.msra.mxu0 %v5506
        %6103 = vmatprep.subr.bf16.mxu0 %v5511
        %6104 = vmatpush1.bf16.msra.mxu0 %v5510
        %6105 = vmatprep.subr.bf16.mxu0 %v5515
        %6106 = vmatpush1.bf16.msra.mxu0 %v5514
        %6107 = vmatprep.subr.bf16.mxu0 %v5519
        %6108 = vmatpush1.bf16.msra.mxu0 %v5518
        %6109 = vmatprep.mubr.bf16.mxu0 %v4231
        %6110 = vmatmul.mubr.bf16.gmra.mrb[0].mxu0 %v4230
        %v6111 = vpop.f32.mrb[0].mxu0
        %v6112 = vadd.f32 %v6069, %v6111
        %v6113 = vpop.f32.mrb[0].mxu0
        %v6114 = vadd.f32 %v6071, %v6113
        %v6115 = vpop.f32.mrb[0].mxu0
        %v6116 = vadd.f32 %v6073, %v6115
        %v6117 = vpop.f32.mrb[0].mxu0
        %v6118 = vadd.f32 %v6075, %v6117
        %6119 = vdwg.mxu0
        %v6120 = vadd.f32 %v4232, %v5940
        %v6121 = vadd.f32 %v4233, %v5942
        %v6122 = vadd.f32 %v4234, %v6112
        %v6123 = vadd.f32 %v4235, %v6114
        %v6124 = vadd.f32 %v4236, %v5944
        %v6125 = vadd.f32 %v4237, %v5946
        %v6126 = vadd.f32 %v4238, %v6116
        %v6127 = vadd.f32 %v4239, %v6118
        %6128 = vst [vmem:[#allocation2] sm:$0xff] %v6120
        %6129 = vst [vmem:[#allocation2 + $0x8] sm:$0xff] %v6121
        %6130 = vst [vmem:[#allocation2 + $0x10] sm:$0xff] %v6122
        %6131 = vst [vmem:[#allocation2 + $0x18] sm:$0xff] %v6123
        %6132 = vst [vmem:[#allocation2 + $0x20] sm:$0xff] %v6124
        %6133 = vst [vmem:[#allocation2 + $0x28] sm:$0xff] %v6125
        %6134 = vst [vmem:[#allocation2 + $0x30] sm:$0xff] %v6126
        %6135 = vst [vmem:[#allocation2 + $0x38] sm:$0xff] %v6127
        %p6136 = scmp.eq.s32.totalorder %s23, 1
        // Predicated region
        $region57: #{tpu_custom_call.1} parent=35 // pred_check
          %p6137 = pneg %p6136
        $region58: #{tpu_custom_call.1} parent=35 // pred_check_branch
          %6139 = sbr.rel (%p6137) target = $region60
        $region59: #{tpu_custom_call.1} parent=35 // pred_region
          %v6140 = vld [vmem:[#allocation2] sm:$0xff]
          %v6141 = vld [vmem:[#allocation2 + $0x8] sm:$0xff]
          %v6142 = vld [vmem:[#allocation2 + $0x10] sm:$0xff]
          %v6143 = vld [vmem:[#allocation2 + $0x18] sm:$0xff]
          %v6144 = vld [vmem:[#allocation2 + $0x20] sm:$0xff]
          %v6145 = vld [vmem:[#allocation2 + $0x28] sm:$0xff]
          %v6146 = vld [vmem:[#allocation2 + $0x30] sm:$0xff]
          %v6147 = vld [vmem:[#allocation2 + $0x38] sm:$0xff]
          %v6148 = vpack.c.bf16 %v6144, %v6140
          %v6149 = vpack.c.bf16 %v6145, %v6141
          %v6150 = vpack.c.bf16 %v6146, %v6142
          %v6151 = vpack.c.bf16 %v6147, %v6143
          %v6156 = vunpack.c.l.b16 %v6148
          %v6157 = vunpack.c.l.b16 %v6149
          %v6158 = vunpack.c.l.b16 %v6150
          %v6159 = vunpack.c.l.b16 %v6151
          %v6160 = vunpack.c.h.b16 %v6148
          %v6161 = vunpack.c.h.b16 %v6149
          %v6162 = vunpack.c.h.b16 %v6150
          %v6163 = vunpack.c.h.b16 %v6151
          %v6164 = vpack.c.b16 %v6157, %v6156
          %v6165 = vpack.c.b16 %v6159, %v6158
          %v6166 = vpack.c.b16 %v6161, %v6160
          %v6167 = vpack.c.b16 %v6163, %v6162
          %6172 = vst [vmem:[#allocation11] sm:$0xff] %v6164
          %6173 = vst [vmem:[#allocation11 + $0x8] sm:$0xff] %v6165
          %6174 = vst [vmem:[#allocation11 + $0x10] sm:$0xff] %v6166
          %6175 = vst [vmem:[#allocation11 + $0x18] sm:$0xff] %v6167
        $region60: #{tpu_custom_call.1} parent=35 // pred_fallthru
          _
        // Predicated region
        $region61: #{tpu_custom_call.1} parent=35 // pred_check
          %p6176 = pneg %p135
        $region62: #{tpu_custom_call.1} parent=35 // pred_check_branch
          %6178 = sbr.rel (%p6176) target = $region64
        $region63: #{tpu_custom_call.1} parent=35 // pred_region
          %s6180 = ssub.s32 512, 512
          %6181 = vsyncadd [#allocation5], %s6180
          %s6182 = sshll.u32 [#allocation11], 4
          %s6183 = int_to_ptr.vmem [resolvable:$true] %s6182
          %6188 = dma.vmem_to_hbm [thread:$0]  %s6183, 512, %s4, [#allocation5], 256, 256, 16
        $region64: #{tpu_custom_call.1} parent=35 // pred_fallthru
          _
        // Predicated region
        $region65: #{tpu_custom_call.1} parent=35 // pred_check
          %p6189 = pneg %p135
        $region66: #{tpu_custom_call.1} parent=35 // pred_check_branch
          %6191 = sbr.rel (%p6189) target = $region68
        $region67: #{tpu_custom_call.1} parent=35 // pred_region
          %6192 = dma.done [#allocation5], 512
        $region68: #{tpu_custom_call.1} parent=35 // pred_fallthru
          _
      $region36: #{tpu_custom_call.1} parent=5 // pred_fallthru
        _
      %p6193 = scmp.le.s32.totalorder 2, %s18
      // Predicated region
      $region69: #{tpu_custom_call.1} parent=5 // pred_check
        %p6194 = pneg %p6193
      $region70: #{tpu_custom_call.1} parent=5 // pred_check_branch
        %6196 = sbr.rel (%p6194) target = $region72
      $region71: #{tpu_custom_call.1} parent=5 // pred_region
        %s6197 = ssub.s32 %s18, 2
      $region72: #{tpu_custom_call.1} parent=5 // pred_fallthru
        _
    $region6: #{tpu_custom_call.1} parent=1 // loop_footer
      %s22 = sadd.s32 1, %s18
    $region7: #{tpu_custom_call.1} parent=1 // loop_footer_branch
      %17 = sbr.rel target = $region3
    $region8: #{tpu_custom_call.1} parent=1 // loop_exit
      _
    %6198 = vsyncpa [#allocation4], 1
    %s6199 = scalar_lea.sflag [#allocation4], 1
    %6200 = vsyncpa %s6199, 1
    %6201 = vsyncpa [#allocation7], 1
    %s6202 = scalar_lea.sflag [#allocation7], 1
    %6203 = vsyncpa %s6202, 1
    %6204 = vsyncpa [#allocation10], 1
    %s6205 = scalar_lea.sflag [#allocation10], 1
    %6206 = vsyncpa %s6205, 1
    %6207 = vsyncpa [#allocation5], 1
    %s6208 = scalar_lea.sflag [#allocation5], 1
    %6209 = vsyncpa %s6208, 1

</llo_original>
